<compile_context>
chip_gen: v6e
topology: v6e:2x2x1
jax: 0.10.0
libtpu: 0.0.40
codegen_flags: <defaults>
</compile_context>

<pallas_src>
import math

import jax
import jax.numpy as jnp
from jax.experimental import pallas as pl
from jax.experimental.pallas import tpu as pltpu


_LANE = 1024                   # lane-dense width: large multiple of 128
_MAX_TILE_ROWS = 1024          # 1024 x 1024 f32 = 4 MiB per array tile
_SMALL_ELEMS = 512 * 1024      # below this, plain XLA fusion wins


def _round_up(x: int, m: int) -> int:
    return ((x + m - 1) // m) * m


def _h_iou_kernel(seen_ref, unseen_ref, out_ref):
    # Cast narrow dtypes up to f32 inside the kernel (inputs stay narrow in HBM).
    a = seen_ref[...].astype(jnp.float32)
    b = unseen_ref[...].astype(jnp.float32)
    out_ref[...] = (2.0 * a * b / (a + b + 1e-9)).astype(out_ref.dtype)


def h_iou_loss(miou_seen: jax.Array, miou_unseen: jax.Array) -> jax.Array:
    """Harmonic IoU loss: 2*a*b / (a + b + 1e-9), elementwise."""
    assert miou_seen.shape == miou_unseen.shape, "inputs must have equal shapes"
    orig_shape = miou_seen.shape
    a = jnp.asarray(miou_seen)
    b = jnp.asarray(miou_unseen)
    out_dtype = jnp.result_type(a.dtype, b.dtype)

    total = int(math.prod(orig_shape)) if len(orig_shape) > 0 else 1

    # ---- Fast path: small inputs, or element counts that would need a pad /
    # slice copy to become lane-dense.  Plain XLA fusion is already at roofline.
    if total <= _SMALL_ELEMS or (total % _LANE) != 0:
        a32 = a.astype(jnp.float32)
        b32 = b.astype(jnp.float32)
        out = 2.0 * a32 * b32 / (a32 + b32 + 1e-9)
        return out.astype(out_dtype).reshape(orig_shape)

    # ---- Pallas path: lane-dense (n_rows, 1024) layout, native dtypes on the
    # wire, no padding, no post-slice.
    n_rows = total // _LANE
    a2 = a.reshape(n_rows, _LANE)
    b2 = b.reshape(n_rows, _LANE)

    if n_rows <= _MAX_TILE_ROWS:
        # Guarantee >= 2 grid steps: enables v7x 2-TC sharding of the
        # "parallel" axis and DMA/compute pipelining on every generation.
        tile_rows = _round_up(pl.cdiv(n_rows, 2), 8)
    else:
        tile_rows = _MAX_TILE_ROWS
    grid = (pl.cdiv(n_rows, tile_rows),)   # partial last block handled by Pallas

    block = pl.BlockSpec((tile_rows, _LANE), lambda i: (i, 0))

    bytes_accessed = total * (
        a.dtype.itemsize + b.dtype.itemsize + jnp.dtype(out_dtype).itemsize
    )

    out2 = pl.pallas_call(
        _h_iou_kernel,
        out_shape=jax.ShapeDtypeStruct((n_rows, _LANE), out_dtype),
        grid=grid,
        in_specs=[block, block],
        out_specs=block,
        compiler_params=pltpu.CompilerParams(
            dimension_semantics=("parallel",),     # lets v7x shard over 2 TCs
            vmem_limit_bytes=32 * 1024 * 1024,     # ~24 MiB used; v7x headroom
        ),
        cost_estimate=pl.CostEstimate(
            flops=5 * total,
            transcendentals=total,
            bytes_accessed=bytes_accessed,
        ),
    )(a2, b2)

    return out2.reshape(orig_shape)


if __name__ == "__main__":
    key = jax.random.PRNGKey(0)
    ks = jax.random.split(key, 12)

    def ref_fn(x, y, out_dtype):
        x32 = x.astype(jnp.float32)
        y32 = y.astype(jnp.float32)
        return (2.0 * x32 * y32 / (x32 + y32 + 1e-9)).astype(out_dtype)

    # 1) Small input (realistic per-class mIoU use) -> fast path.
    shape_small = (2, 4, 16, 16)
    a = jax.random.uniform(ks[0], shape_small, jnp.float32)
    b = jax.random.uniform(ks[1], shape_small, jnp.float32)
    out = jax.block_until_ready(h_iou_loss(a, b))
    assert out.shape == shape_small and out.dtype == jnp.float32
    assert jnp.allclose(out, ref_fn(a, b, jnp.float32), atol=1e-6, rtol=1e-6)

    # 2) Large lane-aligned input -> Pallas path, 1024 rows, 2 exact tiles.
    shape_big = (8, 16, 64, 128)   # 1,048,576 elements
    a = jax.random.uniform(ks[2], shape_big, jnp.float32)
    b = jax.random.uniform(ks[3], shape_big, jnp.float32)
    out = jax.block_until_ready(h_iou_loss(a, b))
    assert out.shape == shape_big and out.dtype == jnp.float32
    assert jnp.allclose(out, ref_fn(a, b, jnp.float32), atol=1e-6, rtol=1e-6)

    # 3) Lane-aligned but non-tile-multiple row count -> partial last block.
    shape_part = (600, 1024)       # 614,400 elements, 600 rows, tile 304 -> grid 2
    a = jax.random.uniform(ks[4], shape_part, jnp.float32)
    b = jax.random.uniform(ks[5], shape_part, jnp.float32)
    out = jax.block_until_ready(h_iou_loss(a, b))
    assert out.shape == shape_part and out.dtype == jnp.float32
    assert jnp.allclose(out, ref_fn(a, b, jnp.float32), atol=1e-6, rtol=1e-6)

    # 4) Ragged element count -> plain-jnp fallback (no pad/slice HBM passes).
    shape_ragged = (7, 13, 33, 9)
    a = jax.random.uniform(ks[6], shape_ragged, jnp.float32)
    b = jax.random.uniform(ks[7], shape_ragged, jnp.float32)
    out = jax.block_until_ready(h_iou_loss(a, b))
    assert out.shape == shape_ragged
    assert jnp.allclose(out, ref_fn(a, b, jnp.float32), atol=1e-6, rtol=1e-6)

    # 5) bf16 stays bf16 across the pallas_call boundary (f32 math in-kernel).
    shape_bf16 = (1024, 1024)
    a = jax.random.uniform(ks[8], shape_bf16, jnp.float32).astype(jnp.bfloat16)
    b = jax.random.uniform(ks[9], shape_bf16, jnp.float32).astype(jnp.bfloat16)
    out = jax.block_until_ready(h_iou_loss(a, b))
    assert out.dtype == jnp.bfloat16 and out.shape == shape_bf16
    assert jnp.allclose(out.astype(jnp.float32),
                        ref_fn(a, b, jnp.bfloat16).astype(jnp.float32),
                        atol=2e-2, rtol=2e-2)

    # 6) Mixed dtype (bf16 + f32): native dtypes on the wire, f32 result.
    a = jax.random.uniform(ks[10], shape_bf16, jnp.float32).astype(jnp.bfloat16)
    b = jax.random.uniform(ks[11], shape_bf16, jnp.float32)
    out = jax.block_until_ready(h_iou_loss(a, b))
    assert out.dtype == jnp.float32 and out.shape == shape_bf16
    assert jnp.allclose(out, ref_fn(a, b, jnp.float32), atol=5e-3, rtol=5e-3)

    print("KERNEL_OK")
</pallas_src>

<mosaic_0001>
module attributes {stable_mosaic.version = 11 : i64} {
  func.func @_h_iou_kernel(%arg0: i32, %arg1: memref<512x1024xf32, #tpu.memory_space<vmem>>, %arg2: memref<512x1024xf32, #tpu.memory_space<vmem>>, %arg3: memref<512x1024xf32, #tpu.memory_space<vmem>>) attributes {dimension_semantics = [#tpu.dimension_semantics<parallel>], iteration_bounds = array<i64: 2>, scalar_prefetch = 0 : i64, scratch_operands = 0 : i64, tpu.core_type = #tpu.core_type<tc>, window_params = [{transform_indices = @transform_0, window_bounds = array<i64: 512, 1024>}, {transform_indices = @transform_1, window_bounds = array<i64: 512, 1024>}, {transform_indices = @transform_2, window_bounds = array<i64: 512, 1024>}]} {
    %c0 = arith.constant 0 : index
    %c0_0 = arith.constant 0 : index
    %0 = vector.load %arg1[%c0, %c0_0] : memref<512x1024xf32, #tpu.memory_space<vmem>>, vector<512x1024xf32>
    %c0_1 = arith.constant 0 : index
    %c0_2 = arith.constant 0 : index
    %1 = vector.load %arg2[%c0_1, %c0_2] : memref<512x1024xf32, #tpu.memory_space<vmem>>, vector<512x1024xf32>
    %cst = arith.constant 2.000000e+00 : f32
    %2 = vector.broadcast %cst : f32 to vector<512x1024xf32>
    %3 = arith.mulf %2, %0 : vector<512x1024xf32>
    %4 = arith.mulf %3, %1 : vector<512x1024xf32>
    %5 = arith.addf %0, %1 : vector<512x1024xf32>
    %cst_3 = arith.constant 9.99999971E-10 : f32
    %6 = vector.broadcast %cst_3 : f32 to vector<512x1024xf32>
    %7 = arith.addf %5, %6 : vector<512x1024xf32>
    %8 = arith.divf %4, %7 : vector<512x1024xf32>
    %c0_4 = arith.constant 0 : index
    %c0_5 = arith.constant 0 : index
    %9 = vector.load %arg3[%c0_4, %c0_5] : memref<512x1024xf32, #tpu.memory_space<vmem>>, vector<512x1024xf32>
    tpu.vector_store %arg3[%c0_4, %c0_5], %8 {strides = array<i32>} : memref<512x1024xf32, #tpu.memory_space<vmem>>, vector<512x1024xf32>,
    return
  }
  func.func @transform_0(%arg0: i32) -> (i32, i32) {
    %c0_i32 = arith.constant 0 : i32
    %c0_i32_0 = arith.constant 0 : i32
    return %arg0, %c0_i32 : i32, i32
  }
  func.func @transform_1(%arg0: i32) -> (i32, i32) {
    %c0_i32 = arith.constant 0 : i32
    %c0_i32_0 = arith.constant 0 : i32
    return %arg0, %c0_i32 : i32, i32
  }
  func.func @transform_2(%arg0: i32) -> (i32, i32) {
    %c0_i32 = arith.constant 0 : i32
    %c0_i32_0 = arith.constant 0 : i32
    return %arg0, %c0_i32 : i32, i32
  }
}

</mosaic_0001>

<llo_original>
// kernel: tpu_custom_call.1
$region0: #{tpu_custom_call.1}
  #allocation0 [shape = 'u32[]', space=smem, size = 0x4, offset = 0x4, fixed_abs, tag = 'smem constant byte address 0x4 - core index']
  #allocation1 [shape = 'u32[144,128]{1,0:T(1,128)}', space=vmem, size = 0x12000, scoped, tag = 'internal scratch']
  %s0 = inlined_call_operand.hbm [shape: f32[1024,1024], index: 0, kind: input, shape index: {}]
  %s1 = inlined_call_operand.hbm [shape: f32[1024,1024], index: 1, kind: input, shape index: {}]
  %s2 = inlined_call_operand.hbm [shape: f32[1024,1024], index: 2, kind: output, shape index: {}]
  %s3 = sld [smem:[#allocation0]]
  $region49: #{tpu_custom_call.1} parent=0
    _
  %s5 = ssub.s32 1, %s3
  %s6 = scalar_select 0, %s5, %s3
  $region1: #{tpu_custom_call.1} parent=0
    #allocation2 [shape = 'u8[4194304]{0}', space=vmem, size = 0x400000, scoped, tag = 'input window, operand 0']
    #allocation3 [shape = 's32[2]{0}', space=sflag, size = 0x8, scoped, tag = 'scoped memory for tpu_custom_call.1']
    #allocation4 [shape = 's32[2]{0}', space=sflag, size = 0x8, scoped, tag = 'scoped memory for tpu_custom_call.1']
    #allocation5 [shape = 'u8[4194304]{0}', space=vmem, size = 0x400000, scoped, tag = 'input window, operand 1']
    #allocation6 [shape = 's32[2]{0}', space=sflag, size = 0x8, scoped, tag = 'scoped memory for tpu_custom_call.1']
    #allocation7 [shape = 'u8[4194304]{0}', space=vmem, size = 0x400000, scoped, tag = 'output window, operand 0']
    %7 = vsyncpa [#allocation3], 0
    %s8 = scalar_lea.sflag [#allocation3], 1
    %9 = vsyncpa %s8, 0
    %10 = vsyncpa [#allocation6], 0
    %s11 = scalar_lea.sflag [#allocation6], 1
    %12 = vsyncpa %s11, 0
    %13 = vsyncpa [#allocation4], 0
    %s14 = scalar_lea.sflag [#allocation4], 1
    %15 = vsyncpa %s14, 0
    loop: start=0, step=1, limit=4
    $region2: #{tpu_custom_call.1} parent=1 // loop_pre_header
      _
    $region3: #{tpu_custom_call.1} parent=1 // loop_header
      %s17 = sphi 0, %s21
      %p18 = scmp.ge.s32.totalorder %s17, 4
      %s27 = sphi 0, %s29
      %s30 = sphi 0, %s27
      %s31 = sphi 0, %s30
      %s47 = sphi 0, %s31
      %s53 = sphi 0, %s55
      %s56 = sphi 0, %s53
      %s57 = sphi 0, %s56
      %s73 = sphi 0, %s57
      %s79 = sphi 0, %s81
      %s82 = sphi 0, %s79
      %s83 = sphi 0, %s82
      %s99 = sphi 0, %s83
    $region4: #{tpu_custom_call.1} parent=1 // loop_header_branch
      %20 = sbr.rel (%p18) target = $region8
    $region5: #{tpu_custom_call.1} parent=1 // loop_body
      %s22 = ssub.s32 %s17, 1
      %s23 = ssub.s32 %s17, 2
      %s24 = sadd.s32 %s17, 1
      %s25 = ssub.s32 %s17, %s24
      %p26 = scmp.eq.s32.totalorder %s25, 0
      %s28 = sadd.s32 %s27, 1
      %s29 = scalar_select %p26, %s27, %s28
      %p32 = pneg %p26
      %p33 = scmp.eq.s32.totalorder %s17, 1
      %p34 = por %p32, %p33
      %p35 = scmp.ne.s32.totalorder %s27, %s30
      %p36 = scmp.eq.s32.totalorder %s17, 0
      %p37 = por %p35, %p36
      %p38 = scmp.ne.s32.totalorder %s27, %s30
      %p39 = scmp.eq.s32.totalorder %s22, 1
      %p40 = por %p38, %p39
      %p41 = scmp.ne.s32.totalorder %s30, %s31
      %p42 = scmp.eq.s32.totalorder %s22, 0
      %p43 = por %p41, %p42
      %p44 = scmp.ne.s32.totalorder %s30, %s31
      %p45 = scmp.eq.s32.totalorder %s23, 1
      %p46 = por %p44, %p45
      %p48 = scmp.ne.s32.totalorder %s31, %s47
      %p49 = scmp.eq.s32.totalorder %s23, 0
      %p50 = por %p48, %p49
      %s51 = ssub.s32 %s17, %s24
      %p52 = scmp.eq.s32.totalorder %s51, 0
      %s54 = sadd.s32 %s53, 1
      %s55 = scalar_select %p52, %s53, %s54
      %p58 = pneg %p52
      %p59 = scmp.eq.s32.totalorder %s17, 1
      %p60 = por %p58, %p59
      %p61 = scmp.ne.s32.totalorder %s53, %s56
      %p62 = scmp.eq.s32.totalorder %s17, 0
      %p63 = por %p61, %p62
      %p64 = scmp.ne.s32.totalorder %s53, %s56
      %p65 = scmp.eq.s32.totalorder %s22, 1
      %p66 = por %p64, %p65
      %p67 = scmp.ne.s32.totalorder %s56, %s57
      %p68 = scmp.eq.s32.totalorder %s22, 0
      %p69 = por %p67, %p68
      %p70 = scmp.ne.s32.totalorder %s56, %s57
      %p71 = scmp.eq.s32.totalorder %s23, 1
      %p72 = por %p70, %p71
      %p74 = scmp.ne.s32.totalorder %s57, %s73
      %p75 = scmp.eq.s32.totalorder %s23, 0
      %p76 = por %p74, %p75
      %s77 = ssub.s32 %s17, %s24
      %p78 = scmp.eq.s32.totalorder %s77, 0
      %s80 = sadd.s32 %s79, 1
      %s81 = scalar_select %p78, %s79, %s80
      %p84 = pneg %p78
      %p85 = scmp.eq.s32.totalorder %s17, 1
      %p86 = por %p84, %p85
      %p87 = scmp.ne.s32.totalorder %s79, %s82
      %p88 = scmp.eq.s32.totalorder %s17, 0
      %p89 = por %p87, %p88
      %p90 = scmp.ne.s32.totalorder %s79, %s82
      %p91 = scmp.eq.s32.totalorder %s22, 1
      %p92 = por %p90, %p91
      %p93 = scmp.ne.s32.totalorder %s82, %s83
      %p94 = scmp.eq.s32.totalorder %s22, 0
      %p95 = por %p93, %p94
      %p96 = scmp.ne.s32.totalorder %s82, %s83
      %p97 = scmp.eq.s32.totalorder %s23, 1
      %p98 = por %p96, %p97
      %p100 = scmp.ne.s32.totalorder %s83, %s99
      %p101 = scmp.eq.s32.totalorder %s23, 0
      %p102 = por %p100, %p101
      %p103 = scmp.le.s32.totalorder 1, %s17
      %p104 = scmp.lt.s32.totalorder %s17, 3
      %p105 = pnand %p103, %p104
      %p106 = pneg %p105
      // Predicated region
      $region9: #{tpu_custom_call.1} parent=5 // pred_check
        _
      $region10: #{tpu_custom_call.1} parent=5 // pred_check_branch
        %108 = sbr.rel (%p105) target = $region12
      $region11: #{tpu_custom_call.1} parent=5 // pred_region
        %s109 = ssub.s32 %s17, 1
      $region12: #{tpu_custom_call.1} parent=5 // pred_fallthru
        _
      %p110 = scmp.lt.s32.totalorder %s17, 2
      // Predicated region
      $region13: #{tpu_custom_call.1} parent=5 // pred_check
        %p111 = pneg %p110
      $region14: #{tpu_custom_call.1} parent=5 // pred_check_branch
        %113 = sbr.rel (%p111) target = $region16
      $region15: #{tpu_custom_call.1} parent=5 // pred_region
        // Predicated region
        $region17: #{tpu_custom_call.1} parent=15 // pred_check
          %p114 = pneg %p37
        $region18: #{tpu_custom_call.1} parent=15 // pred_check_branch
          %116 = sbr.rel (%p114) target = $region20
        $region19: #{tpu_custom_call.1} parent=15 // pred_region
          %s117 = sand.u32 %s27, 1
          %s118 = scalar_lea.sflag [#allocation3], %s117
          %s119 = sand.u32 %s27, 1
          %s120 = smul.addr %s119, 4096
          %s121 = scalar_lea.vmem [#allocation2], %s120
          %s122 = smul.u32 64, %s17
          %s124 = ssub.s32 65536, 65536
          %125 = vsyncadd %s118, %s124
          %s126 = smul.addr %s122, 8
          %s127 = smul.addr %s126, 128
          %s128 = scalar_lea.hbm %s0, %s127
          %s129 = sshll.u32 %s121, 4
          %s130 = int_to_ptr.vmem [resolvable:$true] %s129
          %135 = dma.hbm_to_vmem [thread:$0]  %s128, 65536, %s130, %s118, 1024, 1024, 64
        $region20: #{tpu_custom_call.1} parent=15 // pred_fallthru
          _
        // Predicated region
        $region21: #{tpu_custom_call.1} parent=15 // pred_check
          %p136 = pneg %p63
        $region22: #{tpu_custom_call.1} parent=15 // pred_check_branch
          %138 = sbr.rel (%p136) target = $region24
        $region23: #{tpu_custom_call.1} parent=15 // pred_region
          %s139 = sand.u32 %s53, 1
          %s140 = scalar_lea.sflag [#allocation6], %s139
          %s141 = sand.u32 %s53, 1
          %s142 = smul.addr %s141, 4096
          %s143 = scalar_lea.vmem [#allocation5], %s142
          %s144 = smul.u32 64, %s17
          %s146 = ssub.s32 65536, 65536
          %147 = vsyncadd %s140, %s146
          %s148 = smul.addr %s144, 8
          %s149 = smul.addr %s148, 128
          %s150 = scalar_lea.hbm %s1, %s149
          %s151 = sshll.u32 %s143, 4
          %s152 = int_to_ptr.vmem [resolvable:$true] %s151
          %157 = dma.hbm_to_vmem [thread:$0]  %s150, 65536, %s152, %s140, 1024, 1024, 64
        $region24: #{tpu_custom_call.1} parent=15 // pred_fallthru
          _
      $region16: #{tpu_custom_call.1} parent=5 // pred_fallthru
        _
      %p158 = scmp.le.s32.totalorder 1, %s17
      %p159 = scmp.lt.s32.totalorder %s17, 3
      %p160 = pnand %p158, %p159
      %p161 = pneg %p160
      // Predicated region
      $region25: #{tpu_custom_call.1} parent=5 // pred_check
        _
      $region26: #{tpu_custom_call.1} parent=5 // pred_check_branch
        %163 = sbr.rel (%p160) target = $region28
      $region27: #{tpu_custom_call.1} parent=5 // pred_region
        %s164 = ssub.s32 %s17, 1
        %s165 = sand.u32 %s30, 1
        %s166 = scalar_lea.sflag [#allocation3], %s165
        %s167 = sand.u32 %s30, 1
        %s168 = smul.addr %s167, 4096
        %s169 = scalar_lea.vmem [#allocation2], %s168
        // Predicated region
        $region29: #{tpu_custom_call.1} parent=27 // pred_check
          %p170 = pneg %p43
        $region30: #{tpu_custom_call.1} parent=27 // pred_check_branch
          %172 = sbr.rel (%p170) target = $region32
        $region31: #{tpu_custom_call.1} parent=27 // pred_region
          %173 = dma.done %s166, 65536
        $region32: #{tpu_custom_call.1} parent=27 // pred_fallthru
          _
        %s174 = sand.u32 %s56, 1
        %s175 = scalar_lea.sflag [#allocation6], %s174
        %s176 = sand.u32 %s56, 1
        %s177 = smul.addr %s176, 4096
        %s178 = scalar_lea.vmem [#allocation5], %s177
        // Predicated region
        $region33: #{tpu_custom_call.1} parent=27 // pred_check
          %p179 = pneg %p69
        $region34: #{tpu_custom_call.1} parent=27 // pred_check_branch
          %181 = sbr.rel (%p179) target = $region36
        $region35: #{tpu_custom_call.1} parent=27 // pred_region
          %182 = dma.done %s175, 65536
        $region36: #{tpu_custom_call.1} parent=27 // pred_fallthru
          _
        %s183 = sand.u32 %s30, 1
        %s184 = scalar_lea.sflag [#allocation3], %s183
        %s185 = sand.u32 %s30, 1
        %s186 = smul.addr %s185, 4096
        %s187 = scalar_lea.vmem [#allocation2], %s186
        %p188 = pneg %p43
        %p189 = pneg %p40
        %s190 = sand.u32 %s56, 1
        %s191 = scalar_lea.sflag [#allocation6], %s190
        %s192 = sand.u32 %s56, 1
        %s193 = smul.addr %s192, 4096
        %s194 = scalar_lea.vmem [#allocation5], %s193
        %p195 = pneg %p69
        %p196 = pneg %p66
        %p197 = pneg %p95
        %p198 = pneg %p92
        %s199 = sand.u32 %s82, 1
        %s200 = scalar_lea.sflag [#allocation4], %s199
        %s201 = sand.u32 %s82, 1
        %s202 = smul.addr %s201, 4096
        %s203 = scalar_lea.vmem [#allocation7], %s202
        %s204 = smul.u32 64, %s22
        %s205 = smul.u32 64, %s22
        %s206 = smul.u32 64, %s22
        %v207 = vld [vmem:[%s169] sm:$0xff]
        %v208 = vld [vmem:[%s169 + $0x8] sm:$0xff]
        %v209 = vld [vmem:[%s169 + $0x10] sm:$0xff]
        %v210 = vld [vmem:[%s169 + $0x18] sm:$0xff]
        %v211 = vld [vmem:[%s169 + $0x20] sm:$0xff]
        %v212 = vld [vmem:[%s169 + $0x28] sm:$0xff]
        %v213 = vld [vmem:[%s169 + $0x30] sm:$0xff]
        %v214 = vld [vmem:[%s169 + $0x38] sm:$0xff]
        %v215 = vld [vmem:[%s169 + $0x40] sm:$0xff]
        %v216 = vld [vmem:[%s169 + $0x48] sm:$0xff]
        %v217 = vld [vmem:[%s169 + $0x50] sm:$0xff]
        %v218 = vld [vmem:[%s169 + $0x58] sm:$0xff]
        %v219 = vld [vmem:[%s169 + $0x60] sm:$0xff]
        %v220 = vld [vmem:[%s169 + $0x68] sm:$0xff]
        %v221 = vld [vmem:[%s169 + $0x70] sm:$0xff]
        %v222 = vld [vmem:[%s169 + $0x78] sm:$0xff]
        %v223 = vld [vmem:[%s169 + $0x80] sm:$0xff]
        %v224 = vld [vmem:[%s169 + $0x88] sm:$0xff]
        %v225 = vld [vmem:[%s169 + $0x90] sm:$0xff]
        %v226 = vld [vmem:[%s169 + $0x98] sm:$0xff]
        %v227 = vld [vmem:[%s169 + $0xa0] sm:$0xff]
        %v228 = vld [vmem:[%s169 + $0xa8] sm:$0xff]
        %v229 = vld [vmem:[%s169 + $0xb0] sm:$0xff]
        %v230 = vld [vmem:[%s169 + $0xb8] sm:$0xff]
        %v231 = vld [vmem:[%s169 + $0xc0] sm:$0xff]
        %v232 = vld [vmem:[%s169 + $0xc8] sm:$0xff]
        %v233 = vld [vmem:[%s169 + $0xd0] sm:$0xff]
        %v234 = vld [vmem:[%s169 + $0xd8] sm:$0xff]
        %v235 = vld [vmem:[%s169 + $0xe0] sm:$0xff]
        %v236 = vld [vmem:[%s169 + $0xe8] sm:$0xff]
        %v237 = vld [vmem:[%s169 + $0xf0] sm:$0xff]
        %v238 = vld [vmem:[%s169 + $0xf8] sm:$0xff]
        %v239 = vld [vmem:[%s169 + $0x100] sm:$0xff]
        %v240 = vld [vmem:[%s169 + $0x108] sm:$0xff]
        %v241 = vld [vmem:[%s169 + $0x110] sm:$0xff]
        %v242 = vld [vmem:[%s169 + $0x118] sm:$0xff]
        %v243 = vld [vmem:[%s169 + $0x120] sm:$0xff]
        %v244 = vld [vmem:[%s169 + $0x128] sm:$0xff]
        %v245 = vld [vmem:[%s169 + $0x130] sm:$0xff]
        %v246 = vld [vmem:[%s169 + $0x138] sm:$0xff]
        %v247 = vld [vmem:[%s169 + $0x140] sm:$0xff]
        %v248 = vld [vmem:[%s169 + $0x148] sm:$0xff]
        %v249 = vld [vmem:[%s169 + $0x150] sm:$0xff]
        %v250 = vld [vmem:[%s169 + $0x158] sm:$0xff]
        %v251 = vld [vmem:[%s169 + $0x160] sm:$0xff]
        %v252 = vld [vmem:[%s169 + $0x168] sm:$0xff]
        %v253 = vld [vmem:[%s169 + $0x170] sm:$0xff]
        %v254 = vld [vmem:[%s169 + $0x178] sm:$0xff]
        %v255 = vld [vmem:[%s169 + $0x180] sm:$0xff]
        %v256 = vld [vmem:[%s169 + $0x188] sm:$0xff]
        %v257 = vld [vmem:[%s169 + $0x190] sm:$0xff]
        %v258 = vld [vmem:[%s169 + $0x198] sm:$0xff]
        %v259 = vld [vmem:[%s169 + $0x1a0] sm:$0xff]
        %v260 = vld [vmem:[%s169 + $0x1a8] sm:$0xff]
        %v261 = vld [vmem:[%s169 + $0x1b0] sm:$0xff]
        %v262 = vld [vmem:[%s169 + $0x1b8] sm:$0xff]
        %v263 = vld [vmem:[%s169 + $0x1c0] sm:$0xff]
        %v264 = vld [vmem:[%s169 + $0x1c8] sm:$0xff]
        %v265 = vld [vmem:[%s169 + $0x1d0] sm:$0xff]
        %v266 = vld [vmem:[%s169 + $0x1d8] sm:$0xff]
        %v267 = vld [vmem:[%s169 + $0x1e0] sm:$0xff]
        %v268 = vld [vmem:[%s169 + $0x1e8] sm:$0xff]
        %v269 = vld [vmem:[%s169 + $0x1f0] sm:$0xff]
        %v270 = vld [vmem:[%s169 + $0x1f8] sm:$0xff]
        %v271 = vld [vmem:[%s169 + $0x200] sm:$0xff]
        %v272 = vld [vmem:[%s169 + $0x208] sm:$0xff]
        %v273 = vld [vmem:[%s169 + $0x210] sm:$0xff]
        %v274 = vld [vmem:[%s169 + $0x218] sm:$0xff]
        %v275 = vld [vmem:[%s169 + $0x220] sm:$0xff]
        %v276 = vld [vmem:[%s169 + $0x228] sm:$0xff]
        %v277 = vld [vmem:[%s169 + $0x230] sm:$0xff]
        %v278 = vld [vmem:[%s169 + $0x238] sm:$0xff]
        %v279 = vld [vmem:[%s169 + $0x240] sm:$0xff]
        %v280 = vld [vmem:[%s169 + $0x248] sm:$0xff]
        %v281 = vld [vmem:[%s169 + $0x250] sm:$0xff]
        %v282 = vld [vmem:[%s169 + $0x258] sm:$0xff]
        %v283 = vld [vmem:[%s169 + $0x260] sm:$0xff]
        %v284 = vld [vmem:[%s169 + $0x268] sm:$0xff]
        %v285 = vld [vmem:[%s169 + $0x270] sm:$0xff]
        %v286 = vld [vmem:[%s169 + $0x278] sm:$0xff]
        %v287 = vld [vmem:[%s169 + $0x280] sm:$0xff]
        %v288 = vld [vmem:[%s169 + $0x288] sm:$0xff]
        %v289 = vld [vmem:[%s169 + $0x290] sm:$0xff]
        %v290 = vld [vmem:[%s169 + $0x298] sm:$0xff]
        %v291 = vld [vmem:[%s169 + $0x2a0] sm:$0xff]
        %v292 = vld [vmem:[%s169 + $0x2a8] sm:$0xff]
        %v293 = vld [vmem:[%s169 + $0x2b0] sm:$0xff]
        %v294 = vld [vmem:[%s169 + $0x2b8] sm:$0xff]
        %v295 = vld [vmem:[%s169 + $0x2c0] sm:$0xff]
        %v296 = vld [vmem:[%s169 + $0x2c8] sm:$0xff]
        %v297 = vld [vmem:[%s169 + $0x2d0] sm:$0xff]
        %v298 = vld [vmem:[%s169 + $0x2d8] sm:$0xff]
        %v299 = vld [vmem:[%s169 + $0x2e0] sm:$0xff]
        %v300 = vld [vmem:[%s169 + $0x2e8] sm:$0xff]
        %v301 = vld [vmem:[%s169 + $0x2f0] sm:$0xff]
        %v302 = vld [vmem:[%s169 + $0x2f8] sm:$0xff]
        %v303 = vld [vmem:[%s169 + $0x300] sm:$0xff]
        %v304 = vld [vmem:[%s169 + $0x308] sm:$0xff]
        %v305 = vld [vmem:[%s169 + $0x310] sm:$0xff]
        %v306 = vld [vmem:[%s169 + $0x318] sm:$0xff]
        %v307 = vld [vmem:[%s169 + $0x320] sm:$0xff]
        %v308 = vld [vmem:[%s169 + $0x328] sm:$0xff]
        %v309 = vld [vmem:[%s169 + $0x330] sm:$0xff]
        %v310 = vld [vmem:[%s169 + $0x338] sm:$0xff]
        %v311 = vld [vmem:[%s169 + $0x340] sm:$0xff]
        %v312 = vld [vmem:[%s169 + $0x348] sm:$0xff]
        %v313 = vld [vmem:[%s169 + $0x350] sm:$0xff]
        %v314 = vld [vmem:[%s169 + $0x358] sm:$0xff]
        %v315 = vld [vmem:[%s169 + $0x360] sm:$0xff]
        %v316 = vld [vmem:[%s169 + $0x368] sm:$0xff]
        %v317 = vld [vmem:[%s169 + $0x370] sm:$0xff]
        %v318 = vld [vmem:[%s169 + $0x378] sm:$0xff]
        %v319 = vld [vmem:[%s169 + $0x380] sm:$0xff]
        %v320 = vld [vmem:[%s169 + $0x388] sm:$0xff]
        %v321 = vld [vmem:[%s169 + $0x390] sm:$0xff]
        %v322 = vld [vmem:[%s169 + $0x398] sm:$0xff]
        %v323 = vld [vmem:[%s169 + $0x3a0] sm:$0xff]
        %v324 = vld [vmem:[%s169 + $0x3a8] sm:$0xff]
        %v325 = vld [vmem:[%s169 + $0x3b0] sm:$0xff]
        %v326 = vld [vmem:[%s169 + $0x3b8] sm:$0xff]
        %v327 = vld [vmem:[%s169 + $0x3c0] sm:$0xff]
        %v328 = vld [vmem:[%s169 + $0x3c8] sm:$0xff]
        %v329 = vld [vmem:[%s169 + $0x3d0] sm:$0xff]
        %v330 = vld [vmem:[%s169 + $0x3d8] sm:$0xff]
        %v331 = vld [vmem:[%s169 + $0x3e0] sm:$0xff]
        %v332 = vld [vmem:[%s169 + $0x3e8] sm:$0xff]
        %v333 = vld [vmem:[%s169 + $0x3f0] sm:$0xff]
        %v334 = vld [vmem:[%s169 + $0x3f8] sm:$0xff]
        %v335 = vld [vmem:[%s169 + $0x400] sm:$0xff]
        %v336 = vld [vmem:[%s169 + $0x408] sm:$0xff]
        %v337 = vld [vmem:[%s169 + $0x410] sm:$0xff]
        %v338 = vld [vmem:[%s169 + $0x418] sm:$0xff]
        %v339 = vld [vmem:[%s169 + $0x420] sm:$0xff]
        %v340 = vld [vmem:[%s169 + $0x428] sm:$0xff]
        %v341 = vld [vmem:[%s169 + $0x430] sm:$0xff]
        %v342 = vld [vmem:[%s169 + $0x438] sm:$0xff]
        %v343 = vld [vmem:[%s169 + $0x440] sm:$0xff]
        %v344 = vld [vmem:[%s169 + $0x448] sm:$0xff]
        %v345 = vld [vmem:[%s169 + $0x450] sm:$0xff]
        %v346 = vld [vmem:[%s169 + $0x458] sm:$0xff]
        %v347 = vld [vmem:[%s169 + $0x460] sm:$0xff]
        %v348 = vld [vmem:[%s169 + $0x468] sm:$0xff]
        %v349 = vld [vmem:[%s169 + $0x470] sm:$0xff]
        %v350 = vld [vmem:[%s169 + $0x478] sm:$0xff]
        %v351 = vld [vmem:[%s169 + $0x480] sm:$0xff]
        %v352 = vld [vmem:[%s169 + $0x488] sm:$0xff]
        %v353 = vld [vmem:[%s169 + $0x490] sm:$0xff]
        %v354 = vld [vmem:[%s169 + $0x498] sm:$0xff]
        %v355 = vld [vmem:[%s169 + $0x4a0] sm:$0xff]
        %v356 = vld [vmem:[%s169 + $0x4a8] sm:$0xff]
        %v357 = vld [vmem:[%s169 + $0x4b0] sm:$0xff]
        %v358 = vld [vmem:[%s169 + $0x4b8] sm:$0xff]
        %v359 = vld [vmem:[%s169 + $0x4c0] sm:$0xff]
        %v360 = vld [vmem:[%s169 + $0x4c8] sm:$0xff]
        %v361 = vld [vmem:[%s169 + $0x4d0] sm:$0xff]
        %v362 = vld [vmem:[%s169 + $0x4d8] sm:$0xff]
        %v363 = vld [vmem:[%s169 + $0x4e0] sm:$0xff]
        %v364 = vld [vmem:[%s169 + $0x4e8] sm:$0xff]
        %v365 = vld [vmem:[%s169 + $0x4f0] sm:$0xff]
        %v366 = vld [vmem:[%s169 + $0x4f8] sm:$0xff]
        %v367 = vld [vmem:[%s169 + $0x500] sm:$0xff]
        %v368 = vld [vmem:[%s169 + $0x508] sm:$0xff]
        %v369 = vld [vmem:[%s169 + $0x510] sm:$0xff]
        %v370 = vld [vmem:[%s169 + $0x518] sm:$0xff]
        %v371 = vld [vmem:[%s169 + $0x520] sm:$0xff]
        %v372 = vld [vmem:[%s169 + $0x528] sm:$0xff]
        %v373 = vld [vmem:[%s169 + $0x530] sm:$0xff]
        %v374 = vld [vmem:[%s169 + $0x538] sm:$0xff]
        %v375 = vld [vmem:[%s169 + $0x540] sm:$0xff]
        %v376 = vld [vmem:[%s169 + $0x548] sm:$0xff]
        %v377 = vld [vmem:[%s169 + $0x550] sm:$0xff]
        %v378 = vld [vmem:[%s169 + $0x558] sm:$0xff]
        %v379 = vld [vmem:[%s169 + $0x560] sm:$0xff]
        %v380 = vld [vmem:[%s169 + $0x568] sm:$0xff]
        %v381 = vld [vmem:[%s169 + $0x570] sm:$0xff]
        %v382 = vld [vmem:[%s169 + $0x578] sm:$0xff]
        %v383 = vld [vmem:[%s169 + $0x580] sm:$0xff]
        %v384 = vld [vmem:[%s169 + $0x588] sm:$0xff]
        %v385 = vld [vmem:[%s169 + $0x590] sm:$0xff]
        %v386 = vld [vmem:[%s169 + $0x598] sm:$0xff]
        %v387 = vld [vmem:[%s169 + $0x5a0] sm:$0xff]
        %v388 = vld [vmem:[%s169 + $0x5a8] sm:$0xff]
        %v389 = vld [vmem:[%s169 + $0x5b0] sm:$0xff]
        %v390 = vld [vmem:[%s169 + $0x5b8] sm:$0xff]
        %v391 = vld [vmem:[%s169 + $0x5c0] sm:$0xff]
        %v392 = vld [vmem:[%s169 + $0x5c8] sm:$0xff]
        %v393 = vld [vmem:[%s169 + $0x5d0] sm:$0xff]
        %v394 = vld [vmem:[%s169 + $0x5d8] sm:$0xff]
        %v395 = vld [vmem:[%s169 + $0x5e0] sm:$0xff]
        %v396 = vld [vmem:[%s169 + $0x5e8] sm:$0xff]
        %v397 = vld [vmem:[%s169 + $0x5f0] sm:$0xff]
        %v398 = vld [vmem:[%s169 + $0x5f8] sm:$0xff]
        %v399 = vld [vmem:[%s169 + $0x600] sm:$0xff]
        %v400 = vld [vmem:[%s169 + $0x608] sm:$0xff]
        %v401 = vld [vmem:[%s169 + $0x610] sm:$0xff]
        %v402 = vld [vmem:[%s169 + $0x618] sm:$0xff]
        %v403 = vld [vmem:[%s169 + $0x620] sm:$0xff]
        %v404 = vld [vmem:[%s169 + $0x628] sm:$0xff]
        %v405 = vld [vmem:[%s169 + $0x630] sm:$0xff]
        %v406 = vld [vmem:[%s169 + $0x638] sm:$0xff]
        %v407 = vld [vmem:[%s169 + $0x640] sm:$0xff]
        %v408 = vld [vmem:[%s169 + $0x648] sm:$0xff]
        %v409 = vld [vmem:[%s169 + $0x650] sm:$0xff]
        %v410 = vld [vmem:[%s169 + $0x658] sm:$0xff]
        %v411 = vld [vmem:[%s169 + $0x660] sm:$0xff]
        %v412 = vld [vmem:[%s169 + $0x668] sm:$0xff]
        %v413 = vld [vmem:[%s169 + $0x670] sm:$0xff]
        %v414 = vld [vmem:[%s169 + $0x678] sm:$0xff]
        %v415 = vld [vmem:[%s169 + $0x680] sm:$0xff]
        %v416 = vld [vmem:[%s169 + $0x688] sm:$0xff]
        %v417 = vld [vmem:[%s169 + $0x690] sm:$0xff]
        %v418 = vld [vmem:[%s169 + $0x698] sm:$0xff]
        %v419 = vld [vmem:[%s169 + $0x6a0] sm:$0xff]
        %v420 = vld [vmem:[%s169 + $0x6a8] sm:$0xff]
        %v421 = vld [vmem:[%s169 + $0x6b0] sm:$0xff]
        %v422 = vld [vmem:[%s169 + $0x6b8] sm:$0xff]
        %v423 = vld [vmem:[%s169 + $0x6c0] sm:$0xff]
        %v424 = vld [vmem:[%s169 + $0x6c8] sm:$0xff]
        %v425 = vld [vmem:[%s169 + $0x6d0] sm:$0xff]
        %v426 = vld [vmem:[%s169 + $0x6d8] sm:$0xff]
        %v427 = vld [vmem:[%s169 + $0x6e0] sm:$0xff]
        %v428 = vld [vmem:[%s169 + $0x6e8] sm:$0xff]
        %v429 = vld [vmem:[%s169 + $0x6f0] sm:$0xff]
        %v430 = vld [vmem:[%s169 + $0x6f8] sm:$0xff]
        %v431 = vld [vmem:[%s169 + $0x700] sm:$0xff]
        %v432 = vld [vmem:[%s169 + $0x708] sm:$0xff]
        %v433 = vld [vmem:[%s169 + $0x710] sm:$0xff]
        %v434 = vld [vmem:[%s169 + $0x718] sm:$0xff]
        %v435 = vld [vmem:[%s169 + $0x720] sm:$0xff]
        %v436 = vld [vmem:[%s169 + $0x728] sm:$0xff]
        %v437 = vld [vmem:[%s169 + $0x730] sm:$0xff]
        %v438 = vld [vmem:[%s169 + $0x738] sm:$0xff]
        %v439 = vld [vmem:[%s169 + $0x740] sm:$0xff]
        %v440 = vld [vmem:[%s169 + $0x748] sm:$0xff]
        %v441 = vld [vmem:[%s169 + $0x750] sm:$0xff]
        %v442 = vld [vmem:[%s169 + $0x758] sm:$0xff]
        %v443 = vld [vmem:[%s169 + $0x760] sm:$0xff]
        %v444 = vld [vmem:[%s169 + $0x768] sm:$0xff]
        %v445 = vld [vmem:[%s169 + $0x770] sm:$0xff]
        %v446 = vld [vmem:[%s169 + $0x778] sm:$0xff]
        %v447 = vld [vmem:[%s169 + $0x780] sm:$0xff]
        %v448 = vld [vmem:[%s169 + $0x788] sm:$0xff]
        %v449 = vld [vmem:[%s169 + $0x790] sm:$0xff]
        %v450 = vld [vmem:[%s169 + $0x798] sm:$0xff]
        %v451 = vld [vmem:[%s169 + $0x7a0] sm:$0xff]
        %v452 = vld [vmem:[%s169 + $0x7a8] sm:$0xff]
        %v453 = vld [vmem:[%s169 + $0x7b0] sm:$0xff]
        %v454 = vld [vmem:[%s169 + $0x7b8] sm:$0xff]
        %v455 = vld [vmem:[%s169 + $0x7c0] sm:$0xff]
        %v456 = vld [vmem:[%s169 + $0x7c8] sm:$0xff]
        %v457 = vld [vmem:[%s169 + $0x7d0] sm:$0xff]
        %v458 = vld [vmem:[%s169 + $0x7d8] sm:$0xff]
        %v459 = vld [vmem:[%s169 + $0x7e0] sm:$0xff]
        %v460 = vld [vmem:[%s169 + $0x7e8] sm:$0xff]
        %v461 = vld [vmem:[%s169 + $0x7f0] sm:$0xff]
        %v462 = vld [vmem:[%s169 + $0x7f8] sm:$0xff]
        %v463 = vld [vmem:[%s169 + $0x800] sm:$0xff]
        %v464 = vld [vmem:[%s169 + $0x808] sm:$0xff]
        %v465 = vld [vmem:[%s169 + $0x810] sm:$0xff]
        %v466 = vld [vmem:[%s169 + $0x818] sm:$0xff]
        %v467 = vld [vmem:[%s169 + $0x820] sm:$0xff]
        %v468 = vld [vmem:[%s169 + $0x828] sm:$0xff]
        %v469 = vld [vmem:[%s169 + $0x830] sm:$0xff]
        %v470 = vld [vmem:[%s169 + $0x838] sm:$0xff]
        %v471 = vld [vmem:[%s169 + $0x840] sm:$0xff]
        %v472 = vld [vmem:[%s169 + $0x848] sm:$0xff]
        %v473 = vld [vmem:[%s169 + $0x850] sm:$0xff]
        %v474 = vld [vmem:[%s169 + $0x858] sm:$0xff]
        %v475 = vld [vmem:[%s169 + $0x860] sm:$0xff]
        %v476 = vld [vmem:[%s169 + $0x868] sm:$0xff]
        %v477 = vld [vmem:[%s169 + $0x870] sm:$0xff]
        %v478 = vld [vmem:[%s169 + $0x878] sm:$0xff]
        %v479 = vld [vmem:[%s169 + $0x880] sm:$0xff]
        %v480 = vld [vmem:[%s169 + $0x888] sm:$0xff]
        %v481 = vld [vmem:[%s169 + $0x890] sm:$0xff]
        %v482 = vld [vmem:[%s169 + $0x898] sm:$0xff]
        %v483 = vld [vmem:[%s169 + $0x8a0] sm:$0xff]
        %v484 = vld [vmem:[%s169 + $0x8a8] sm:$0xff]
        %v485 = vld [vmem:[%s169 + $0x8b0] sm:$0xff]
        %v486 = vld [vmem:[%s169 + $0x8b8] sm:$0xff]
        %v487 = vld [vmem:[%s169 + $0x8c0] sm:$0xff]
        %v488 = vld [vmem:[%s169 + $0x8c8] sm:$0xff]
        %v489 = vld [vmem:[%s169 + $0x8d0] sm:$0xff]
        %v490 = vld [vmem:[%s169 + $0x8d8] sm:$0xff]
        %v491 = vld [vmem:[%s169 + $0x8e0] sm:$0xff]
        %v492 = vld [vmem:[%s169 + $0x8e8] sm:$0xff]
        %v493 = vld [vmem:[%s169 + $0x8f0] sm:$0xff]
        %v494 = vld [vmem:[%s169 + $0x8f8] sm:$0xff]
        %v495 = vld [vmem:[%s169 + $0x900] sm:$0xff]
        %v496 = vld [vmem:[%s169 + $0x908] sm:$0xff]
        %v497 = vld [vmem:[%s169 + $0x910] sm:$0xff]
        %v498 = vld [vmem:[%s169 + $0x918] sm:$0xff]
        %v499 = vld [vmem:[%s169 + $0x920] sm:$0xff]
        %v500 = vld [vmem:[%s169 + $0x928] sm:$0xff]
        %v501 = vld [vmem:[%s169 + $0x930] sm:$0xff]
        %v502 = vld [vmem:[%s169 + $0x938] sm:$0xff]
        %v503 = vld [vmem:[%s169 + $0x940] sm:$0xff]
        %v504 = vld [vmem:[%s169 + $0x948] sm:$0xff]
        %v505 = vld [vmem:[%s169 + $0x950] sm:$0xff]
        %v506 = vld [vmem:[%s169 + $0x958] sm:$0xff]
        %v507 = vld [vmem:[%s169 + $0x960] sm:$0xff]
        %v508 = vld [vmem:[%s169 + $0x968] sm:$0xff]
        %v509 = vld [vmem:[%s169 + $0x970] sm:$0xff]
        %v510 = vld [vmem:[%s169 + $0x978] sm:$0xff]
        %v511 = vld [vmem:[%s169 + $0x980] sm:$0xff]
        %v512 = vld [vmem:[%s169 + $0x988] sm:$0xff]
        %v513 = vld [vmem:[%s169 + $0x990] sm:$0xff]
        %v514 = vld [vmem:[%s169 + $0x998] sm:$0xff]
        %v515 = vld [vmem:[%s169 + $0x9a0] sm:$0xff]
        %v516 = vld [vmem:[%s169 + $0x9a8] sm:$0xff]
        %v517 = vld [vmem:[%s169 + $0x9b0] sm:$0xff]
        %v518 = vld [vmem:[%s169 + $0x9b8] sm:$0xff]
        %v519 = vld [vmem:[%s169 + $0x9c0] sm:$0xff]
        %v520 = vld [vmem:[%s169 + $0x9c8] sm:$0xff]
        %v521 = vld [vmem:[%s169 + $0x9d0] sm:$0xff]
        %v522 = vld [vmem:[%s169 + $0x9d8] sm:$0xff]
        %v523 = vld [vmem:[%s169 + $0x9e0] sm:$0xff]
        %v524 = vld [vmem:[%s169 + $0x9e8] sm:$0xff]
        %v525 = vld [vmem:[%s169 + $0x9f0] sm:$0xff]
        %v526 = vld [vmem:[%s169 + $0x9f8] sm:$0xff]
        %v527 = vld [vmem:[%s169 + $0xa00] sm:$0xff]
        %v528 = vld [vmem:[%s169 + $0xa08] sm:$0xff]
        %v529 = vld [vmem:[%s169 + $0xa10] sm:$0xff]
        %v530 = vld [vmem:[%s169 + $0xa18] sm:$0xff]
        %v531 = vld [vmem:[%s169 + $0xa20] sm:$0xff]
        %v532 = vld [vmem:[%s169 + $0xa28] sm:$0xff]
        %v533 = vld [vmem:[%s169 + $0xa30] sm:$0xff]
        %v534 = vld [vmem:[%s169 + $0xa38] sm:$0xff]
        %v535 = vld [vmem:[%s169 + $0xa40] sm:$0xff]
        %v536 = vld [vmem:[%s169 + $0xa48] sm:$0xff]
        %v537 = vld [vmem:[%s169 + $0xa50] sm:$0xff]
        %v538 = vld [vmem:[%s169 + $0xa58] sm:$0xff]
        %v539 = vld [vmem:[%s169 + $0xa60] sm:$0xff]
        %v540 = vld [vmem:[%s169 + $0xa68] sm:$0xff]
        %v541 = vld [vmem:[%s169 + $0xa70] sm:$0xff]
        %v542 = vld [vmem:[%s169 + $0xa78] sm:$0xff]
        %v543 = vld [vmem:[%s169 + $0xa80] sm:$0xff]
        %v544 = vld [vmem:[%s169 + $0xa88] sm:$0xff]
        %v545 = vld [vmem:[%s169 + $0xa90] sm:$0xff]
        %v546 = vld [vmem:[%s169 + $0xa98] sm:$0xff]
        %v547 = vld [vmem:[%s169 + $0xaa0] sm:$0xff]
        %v548 = vld [vmem:[%s169 + $0xaa8] sm:$0xff]
        %v549 = vld [vmem:[%s169 + $0xab0] sm:$0xff]
        %v550 = vld [vmem:[%s169 + $0xab8] sm:$0xff]
        %v551 = vld [vmem:[%s169 + $0xac0] sm:$0xff]
        %v552 = vld [vmem:[%s169 + $0xac8] sm:$0xff]
        %v553 = vld [vmem:[%s169 + $0xad0] sm:$0xff]
        %v554 = vld [vmem:[%s169 + $0xad8] sm:$0xff]
        %v555 = vld [vmem:[%s169 + $0xae0] sm:$0xff]
        %v556 = vld [vmem:[%s169 + $0xae8] sm:$0xff]
        %v557 = vld [vmem:[%s169 + $0xaf0] sm:$0xff]
        %v558 = vld [vmem:[%s169 + $0xaf8] sm:$0xff]
        %v559 = vld [vmem:[%s169 + $0xb00] sm:$0xff]
        %v560 = vld [vmem:[%s169 + $0xb08] sm:$0xff]
        %v561 = vld [vmem:[%s169 + $0xb10] sm:$0xff]
        %v562 = vld [vmem:[%s169 + $0xb18] sm:$0xff]
        %v563 = vld [vmem:[%s169 + $0xb20] sm:$0xff]
        %v564 = vld [vmem:[%s169 + $0xb28] sm:$0xff]
        %v565 = vld [vmem:[%s169 + $0xb30] sm:$0xff]
        %v566 = vld [vmem:[%s169 + $0xb38] sm:$0xff]
        %v567 = vld [vmem:[%s169 + $0xb40] sm:$0xff]
        %v568 = vld [vmem:[%s169 + $0xb48] sm:$0xff]
        %v569 = vld [vmem:[%s169 + $0xb50] sm:$0xff]
        %v570 = vld [vmem:[%s169 + $0xb58] sm:$0xff]
        %v571 = vld [vmem:[%s169 + $0xb60] sm:$0xff]
        %v572 = vld [vmem:[%s169 + $0xb68] sm:$0xff]
        %v573 = vld [vmem:[%s169 + $0xb70] sm:$0xff]
        %v574 = vld [vmem:[%s169 + $0xb78] sm:$0xff]
        %v575 = vld [vmem:[%s169 + $0xb80] sm:$0xff]
        %v576 = vld [vmem:[%s169 + $0xb88] sm:$0xff]
        %v577 = vld [vmem:[%s169 + $0xb90] sm:$0xff]
        %v578 = vld [vmem:[%s169 + $0xb98] sm:$0xff]
        %v579 = vld [vmem:[%s169 + $0xba0] sm:$0xff]
        %v580 = vld [vmem:[%s169 + $0xba8] sm:$0xff]
        %v581 = vld [vmem:[%s169 + $0xbb0] sm:$0xff]
        %v582 = vld [vmem:[%s169 + $0xbb8] sm:$0xff]
        %v583 = vld [vmem:[%s169 + $0xbc0] sm:$0xff]
        %v584 = vld [vmem:[%s169 + $0xbc8] sm:$0xff]
        %v585 = vld [vmem:[%s169 + $0xbd0] sm:$0xff]
        %v586 = vld [vmem:[%s169 + $0xbd8] sm:$0xff]
        %v587 = vld [vmem:[%s169 + $0xbe0] sm:$0xff]
        %v588 = vld [vmem:[%s169 + $0xbe8] sm:$0xff]
        %v589 = vld [vmem:[%s169 + $0xbf0] sm:$0xff]
        %v590 = vld [vmem:[%s169 + $0xbf8] sm:$0xff]
        %v591 = vld [vmem:[%s169 + $0xc00] sm:$0xff]
        %v592 = vld [vmem:[%s169 + $0xc08] sm:$0xff]
        %v593 = vld [vmem:[%s169 + $0xc10] sm:$0xff]
        %v594 = vld [vmem:[%s169 + $0xc18] sm:$0xff]
        %v595 = vld [vmem:[%s169 + $0xc20] sm:$0xff]
        %v596 = vld [vmem:[%s169 + $0xc28] sm:$0xff]
        %v597 = vld [vmem:[%s169 + $0xc30] sm:$0xff]
        %v598 = vld [vmem:[%s169 + $0xc38] sm:$0xff]
        %v599 = vld [vmem:[%s169 + $0xc40] sm:$0xff]
        %v600 = vld [vmem:[%s169 + $0xc48] sm:$0xff]
        %v601 = vld [vmem:[%s169 + $0xc50] sm:$0xff]
        %v602 = vld [vmem:[%s169 + $0xc58] sm:$0xff]
        %v603 = vld [vmem:[%s169 + $0xc60] sm:$0xff]
        %v604 = vld [vmem:[%s169 + $0xc68] sm:$0xff]
        %v605 = vld [vmem:[%s169 + $0xc70] sm:$0xff]
        %v606 = vld [vmem:[%s169 + $0xc78] sm:$0xff]
        %v607 = vld [vmem:[%s169 + $0xc80] sm:$0xff]
        %v608 = vld [vmem:[%s169 + $0xc88] sm:$0xff]
        %v609 = vld [vmem:[%s169 + $0xc90] sm:$0xff]
        %v610 = vld [vmem:[%s169 + $0xc98] sm:$0xff]
        %v611 = vld [vmem:[%s169 + $0xca0] sm:$0xff]
        %v612 = vld [vmem:[%s169 + $0xca8] sm:$0xff]
        %v613 = vld [vmem:[%s169 + $0xcb0] sm:$0xff]
        %v614 = vld [vmem:[%s169 + $0xcb8] sm:$0xff]
        %v615 = vld [vmem:[%s169 + $0xcc0] sm:$0xff]
        %v616 = vld [vmem:[%s169 + $0xcc8] sm:$0xff]
        %v617 = vld [vmem:[%s169 + $0xcd0] sm:$0xff]
        %v618 = vld [vmem:[%s169 + $0xcd8] sm:$0xff]
        %v619 = vld [vmem:[%s169 + $0xce0] sm:$0xff]
        %v620 = vld [vmem:[%s169 + $0xce8] sm:$0xff]
        %v621 = vld [vmem:[%s169 + $0xcf0] sm:$0xff]
        %v622 = vld [vmem:[%s169 + $0xcf8] sm:$0xff]
        %v623 = vld [vmem:[%s169 + $0xd00] sm:$0xff]
        %v624 = vld [vmem:[%s169 + $0xd08] sm:$0xff]
        %v625 = vld [vmem:[%s169 + $0xd10] sm:$0xff]
        %v626 = vld [vmem:[%s169 + $0xd18] sm:$0xff]
        %v627 = vld [vmem:[%s169 + $0xd20] sm:$0xff]
        %v628 = vld [vmem:[%s169 + $0xd28] sm:$0xff]
        %v629 = vld [vmem:[%s169 + $0xd30] sm:$0xff]
        %v630 = vld [vmem:[%s169 + $0xd38] sm:$0xff]
        %v631 = vld [vmem:[%s169 + $0xd40] sm:$0xff]
        %v632 = vld [vmem:[%s169 + $0xd48] sm:$0xff]
        %v633 = vld [vmem:[%s169 + $0xd50] sm:$0xff]
        %v634 = vld [vmem:[%s169 + $0xd58] sm:$0xff]
        %v635 = vld [vmem:[%s169 + $0xd60] sm:$0xff]
        %v636 = vld [vmem:[%s169 + $0xd68] sm:$0xff]
        %v637 = vld [vmem:[%s169 + $0xd70] sm:$0xff]
        %v638 = vld [vmem:[%s169 + $0xd78] sm:$0xff]
        %v639 = vld [vmem:[%s169 + $0xd80] sm:$0xff]
        %v640 = vld [vmem:[%s169 + $0xd88] sm:$0xff]
        %v641 = vld [vmem:[%s169 + $0xd90] sm:$0xff]
        %v642 = vld [vmem:[%s169 + $0xd98] sm:$0xff]
        %v643 = vld [vmem:[%s169 + $0xda0] sm:$0xff]
        %v644 = vld [vmem:[%s169 + $0xda8] sm:$0xff]
        %v645 = vld [vmem:[%s169 + $0xdb0] sm:$0xff]
        %v646 = vld [vmem:[%s169 + $0xdb8] sm:$0xff]
        %v647 = vld [vmem:[%s169 + $0xdc0] sm:$0xff]
        %v648 = vld [vmem:[%s169 + $0xdc8] sm:$0xff]
        %v649 = vld [vmem:[%s169 + $0xdd0] sm:$0xff]
        %v650 = vld [vmem:[%s169 + $0xdd8] sm:$0xff]
        %v651 = vld [vmem:[%s169 + $0xde0] sm:$0xff]
        %v652 = vld [vmem:[%s169 + $0xde8] sm:$0xff]
        %v653 = vld [vmem:[%s169 + $0xdf0] sm:$0xff]
        %v654 = vld [vmem:[%s169 + $0xdf8] sm:$0xff]
        %v655 = vld [vmem:[%s169 + $0xe00] sm:$0xff]
        %v656 = vld [vmem:[%s169 + $0xe08] sm:$0xff]
        %v657 = vld [vmem:[%s169 + $0xe10] sm:$0xff]
        %v658 = vld [vmem:[%s169 + $0xe18] sm:$0xff]
        %v659 = vld [vmem:[%s169 + $0xe20] sm:$0xff]
        %v660 = vld [vmem:[%s169 + $0xe28] sm:$0xff]
        %v661 = vld [vmem:[%s169 + $0xe30] sm:$0xff]
        %v662 = vld [vmem:[%s169 + $0xe38] sm:$0xff]
        %v663 = vld [vmem:[%s169 + $0xe40] sm:$0xff]
        %v664 = vld [vmem:[%s169 + $0xe48] sm:$0xff]
        %v665 = vld [vmem:[%s169 + $0xe50] sm:$0xff]
        %v666 = vld [vmem:[%s169 + $0xe58] sm:$0xff]
        %v667 = vld [vmem:[%s169 + $0xe60] sm:$0xff]
        %v668 = vld [vmem:[%s169 + $0xe68] sm:$0xff]
        %v669 = vld [vmem:[%s169 + $0xe70] sm:$0xff]
        %v670 = vld [vmem:[%s169 + $0xe78] sm:$0xff]
        %v671 = vld [vmem:[%s169 + $0xe80] sm:$0xff]
        %v672 = vld [vmem:[%s169 + $0xe88] sm:$0xff]
        %v673 = vld [vmem:[%s169 + $0xe90] sm:$0xff]
        %v674 = vld [vmem:[%s169 + $0xe98] sm:$0xff]
        %v675 = vld [vmem:[%s169 + $0xea0] sm:$0xff]
        %v676 = vld [vmem:[%s169 + $0xea8] sm:$0xff]
        %v677 = vld [vmem:[%s169 + $0xeb0] sm:$0xff]
        %v678 = vld [vmem:[%s169 + $0xeb8] sm:$0xff]
        %v679 = vld [vmem:[%s169 + $0xec0] sm:$0xff]
        %v680 = vld [vmem:[%s169 + $0xec8] sm:$0xff]
        %v681 = vld [vmem:[%s169 + $0xed0] sm:$0xff]
        %v682 = vld [vmem:[%s169 + $0xed8] sm:$0xff]
        %v683 = vld [vmem:[%s169 + $0xee0] sm:$0xff]
        %v684 = vld [vmem:[%s169 + $0xee8] sm:$0xff]
        %v685 = vld [vmem:[%s169 + $0xef0] sm:$0xff]
        %v686 = vld [vmem:[%s169 + $0xef8] sm:$0xff]
        %v687 = vld [vmem:[%s169 + $0xf00] sm:$0xff]
        %v688 = vld [vmem:[%s169 + $0xf08] sm:$0xff]
        %v689 = vld [vmem:[%s169 + $0xf10] sm:$0xff]
        %v690 = vld [vmem:[%s169 + $0xf18] sm:$0xff]
        %v691 = vld [vmem:[%s169 + $0xf20] sm:$0xff]
        %v692 = vld [vmem:[%s169 + $0xf28] sm:$0xff]
        %v693 = vld [vmem:[%s169 + $0xf30] sm:$0xff]
        %v694 = vld [vmem:[%s169 + $0xf38] sm:$0xff]
        %v695 = vld [vmem:[%s169 + $0xf40] sm:$0xff]
        %v696 = vld [vmem:[%s169 + $0xf48] sm:$0xff]
        %v697 = vld [vmem:[%s169 + $0xf50] sm:$0xff]
        %v698 = vld [vmem:[%s169 + $0xf58] sm:$0xff]
        %v699 = vld [vmem:[%s169 + $0xf60] sm:$0xff]
        %v700 = vld [vmem:[%s169 + $0xf68] sm:$0xff]
        %v701 = vld [vmem:[%s169 + $0xf70] sm:$0xff]
        %v702 = vld [vmem:[%s169 + $0xf78] sm:$0xff]
        %v703 = vld [vmem:[%s169 + $0xf80] sm:$0xff]
        %v704 = vld [vmem:[%s169 + $0xf88] sm:$0xff]
        %v705 = vld [vmem:[%s169 + $0xf90] sm:$0xff]
        %v706 = vld [vmem:[%s169 + $0xf98] sm:$0xff]
        %v707 = vld [vmem:[%s169 + $0xfa0] sm:$0xff]
        %v708 = vld [vmem:[%s169 + $0xfa8] sm:$0xff]
        %v709 = vld [vmem:[%s169 + $0xfb0] sm:$0xff]
        %v710 = vld [vmem:[%s169 + $0xfb8] sm:$0xff]
        %v711 = vld [vmem:[%s169 + $0xfc0] sm:$0xff]
        %v712 = vld [vmem:[%s169 + $0xfc8] sm:$0xff]
        %v713 = vld [vmem:[%s169 + $0xfd0] sm:$0xff]
        %v714 = vld [vmem:[%s169 + $0xfd8] sm:$0xff]
        %v715 = vld [vmem:[%s169 + $0xfe0] sm:$0xff]
        %v716 = vld [vmem:[%s169 + $0xfe8] sm:$0xff]
        %v717 = vld [vmem:[%s169 + $0xff0] sm:$0xff]
        %v718 = vld [vmem:[%s169 + $0xff8] sm:$0xff]
        %v719 = vld [vmem:[%s178] sm:$0xff]
        %v720 = vld [vmem:[%s178 + $0x8] sm:$0xff]
        %v721 = vld [vmem:[%s178 + $0x10] sm:$0xff]
        %v722 = vld [vmem:[%s178 + $0x18] sm:$0xff]
        %v723 = vld [vmem:[%s178 + $0x20] sm:$0xff]
        %v724 = vld [vmem:[%s178 + $0x28] sm:$0xff]
        %v725 = vld [vmem:[%s178 + $0x30] sm:$0xff]
        %v726 = vld [vmem:[%s178 + $0x38] sm:$0xff]
        %v727 = vld [vmem:[%s178 + $0x40] sm:$0xff]
        %v728 = vld [vmem:[%s178 + $0x48] sm:$0xff]
        %v729 = vld [vmem:[%s178 + $0x50] sm:$0xff]
        %v730 = vld [vmem:[%s178 + $0x58] sm:$0xff]
        %v731 = vld [vmem:[%s178 + $0x60] sm:$0xff]
        %v732 = vld [vmem:[%s178 + $0x68] sm:$0xff]
        %v733 = vld [vmem:[%s178 + $0x70] sm:$0xff]
        %v734 = vld [vmem:[%s178 + $0x78] sm:$0xff]
        %v735 = vld [vmem:[%s178 + $0x80] sm:$0xff]
        %v736 = vld [vmem:[%s178 + $0x88] sm:$0xff]
        %v737 = vld [vmem:[%s178 + $0x90] sm:$0xff]
        %v738 = vld [vmem:[%s178 + $0x98] sm:$0xff]
        %v739 = vld [vmem:[%s178 + $0xa0] sm:$0xff]
        %v740 = vld [vmem:[%s178 + $0xa8] sm:$0xff]
        %v741 = vld [vmem:[%s178 + $0xb0] sm:$0xff]
        %v742 = vld [vmem:[%s178 + $0xb8] sm:$0xff]
        %v743 = vld [vmem:[%s178 + $0xc0] sm:$0xff]
        %v744 = vld [vmem:[%s178 + $0xc8] sm:$0xff]
        %v745 = vld [vmem:[%s178 + $0xd0] sm:$0xff]
        %v746 = vld [vmem:[%s178 + $0xd8] sm:$0xff]
        %v747 = vld [vmem:[%s178 + $0xe0] sm:$0xff]
        %v748 = vld [vmem:[%s178 + $0xe8] sm:$0xff]
        %v749 = vld [vmem:[%s178 + $0xf0] sm:$0xff]
        %v750 = vld [vmem:[%s178 + $0xf8] sm:$0xff]
        %v751 = vld [vmem:[%s178 + $0x100] sm:$0xff]
        %v752 = vld [vmem:[%s178 + $0x108] sm:$0xff]
        %v753 = vld [vmem:[%s178 + $0x110] sm:$0xff]
        %v754 = vld [vmem:[%s178 + $0x118] sm:$0xff]
        %v755 = vld [vmem:[%s178 + $0x120] sm:$0xff]
        %v756 = vld [vmem:[%s178 + $0x128] sm:$0xff]
        %v757 = vld [vmem:[%s178 + $0x130] sm:$0xff]
        %v758 = vld [vmem:[%s178 + $0x138] sm:$0xff]
        %v759 = vld [vmem:[%s178 + $0x140] sm:$0xff]
        %v760 = vld [vmem:[%s178 + $0x148] sm:$0xff]
        %v761 = vld [vmem:[%s178 + $0x150] sm:$0xff]
        %v762 = vld [vmem:[%s178 + $0x158] sm:$0xff]
        %v763 = vld [vmem:[%s178 + $0x160] sm:$0xff]
        %v764 = vld [vmem:[%s178 + $0x168] sm:$0xff]
        %v765 = vld [vmem:[%s178 + $0x170] sm:$0xff]
        %v766 = vld [vmem:[%s178 + $0x178] sm:$0xff]
        %v767 = vld [vmem:[%s178 + $0x180] sm:$0xff]
        %v768 = vld [vmem:[%s178 + $0x188] sm:$0xff]
        %v769 = vld [vmem:[%s178 + $0x190] sm:$0xff]
        %v770 = vld [vmem:[%s178 + $0x198] sm:$0xff]
        %v771 = vld [vmem:[%s178 + $0x1a0] sm:$0xff]
        %v772 = vld [vmem:[%s178 + $0x1a8] sm:$0xff]
        %v773 = vld [vmem:[%s178 + $0x1b0] sm:$0xff]
        %v774 = vld [vmem:[%s178 + $0x1b8] sm:$0xff]
        %v775 = vld [vmem:[%s178 + $0x1c0] sm:$0xff]
        %v776 = vld [vmem:[%s178 + $0x1c8] sm:$0xff]
        %v777 = vld [vmem:[%s178 + $0x1d0] sm:$0xff]
        %v778 = vld [vmem:[%s178 + $0x1d8] sm:$0xff]
        %v779 = vld [vmem:[%s178 + $0x1e0] sm:$0xff]
        %v780 = vld [vmem:[%s178 + $0x1e8] sm:$0xff]
        %v781 = vld [vmem:[%s178 + $0x1f0] sm:$0xff]
        %v782 = vld [vmem:[%s178 + $0x1f8] sm:$0xff]
        %v783 = vld [vmem:[%s178 + $0x200] sm:$0xff]
        %v784 = vld [vmem:[%s178 + $0x208] sm:$0xff]
        %v785 = vld [vmem:[%s178 + $0x210] sm:$0xff]
        %v786 = vld [vmem:[%s178 + $0x218] sm:$0xff]
        %v787 = vld [vmem:[%s178 + $0x220] sm:$0xff]
        %v788 = vld [vmem:[%s178 + $0x228] sm:$0xff]
        %v789 = vld [vmem:[%s178 + $0x230] sm:$0xff]
        %v790 = vld [vmem:[%s178 + $0x238] sm:$0xff]
        %v791 = vld [vmem:[%s178 + $0x240] sm:$0xff]
        %v792 = vld [vmem:[%s178 + $0x248] sm:$0xff]
        %v793 = vld [vmem:[%s178 + $0x250] sm:$0xff]
        %v794 = vld [vmem:[%s178 + $0x258] sm:$0xff]
        %v795 = vld [vmem:[%s178 + $0x260] sm:$0xff]
        %v796 = vld [vmem:[%s178 + $0x268] sm:$0xff]
        %v797 = vld [vmem:[%s178 + $0x270] sm:$0xff]
        %v798 = vld [vmem:[%s178 + $0x278] sm:$0xff]
        %v799 = vld [vmem:[%s178 + $0x280] sm:$0xff]
        %v800 = vld [vmem:[%s178 + $0x288] sm:$0xff]
        %v801 = vld [vmem:[%s178 + $0x290] sm:$0xff]
        %v802 = vld [vmem:[%s178 + $0x298] sm:$0xff]
        %v803 = vld [vmem:[%s178 + $0x2a0] sm:$0xff]
        %v804 = vld [vmem:[%s178 + $0x2a8] sm:$0xff]
        %v805 = vld [vmem:[%s178 + $0x2b0] sm:$0xff]
        %v806 = vld [vmem:[%s178 + $0x2b8] sm:$0xff]
        %v807 = vld [vmem:[%s178 + $0x2c0] sm:$0xff]
        %v808 = vld [vmem:[%s178 + $0x2c8] sm:$0xff]
        %v809 = vld [vmem:[%s178 + $0x2d0] sm:$0xff]
        %v810 = vld [vmem:[%s178 + $0x2d8] sm:$0xff]
        %v811 = vld [vmem:[%s178 + $0x2e0] sm:$0xff]
        %v812 = vld [vmem:[%s178 + $0x2e8] sm:$0xff]
        %v813 = vld [vmem:[%s178 + $0x2f0] sm:$0xff]
        %v814 = vld [vmem:[%s178 + $0x2f8] sm:$0xff]
        %v815 = vld [vmem:[%s178 + $0x300] sm:$0xff]
        %v816 = vld [vmem:[%s178 + $0x308] sm:$0xff]
        %v817 = vld [vmem:[%s178 + $0x310] sm:$0xff]
        %v818 = vld [vmem:[%s178 + $0x318] sm:$0xff]
        %v819 = vld [vmem:[%s178 + $0x320] sm:$0xff]
        %v820 = vld [vmem:[%s178 + $0x328] sm:$0xff]
        %v821 = vld [vmem:[%s178 + $0x330] sm:$0xff]
        %v822 = vld [vmem:[%s178 + $0x338] sm:$0xff]
        %v823 = vld [vmem:[%s178 + $0x340] sm:$0xff]
        %v824 = vld [vmem:[%s178 + $0x348] sm:$0xff]
        %v825 = vld [vmem:[%s178 + $0x350] sm:$0xff]
        %v826 = vld [vmem:[%s178 + $0x358] sm:$0xff]
        %v827 = vld [vmem:[%s178 + $0x360] sm:$0xff]
        %v828 = vld [vmem:[%s178 + $0x368] sm:$0xff]
        %v829 = vld [vmem:[%s178 + $0x370] sm:$0xff]
        %v830 = vld [vmem:[%s178 + $0x378] sm:$0xff]
        %v831 = vld [vmem:[%s178 + $0x380] sm:$0xff]
        %v832 = vld [vmem:[%s178 + $0x388] sm:$0xff]
        %v833 = vld [vmem:[%s178 + $0x390] sm:$0xff]
        %v834 = vld [vmem:[%s178 + $0x398] sm:$0xff]
        %v835 = vld [vmem:[%s178 + $0x3a0] sm:$0xff]
        %v836 = vld [vmem:[%s178 + $0x3a8] sm:$0xff]
        %v837 = vld [vmem:[%s178 + $0x3b0] sm:$0xff]
        %v838 = vld [vmem:[%s178 + $0x3b8] sm:$0xff]
        %v839 = vld [vmem:[%s178 + $0x3c0] sm:$0xff]
        %v840 = vld [vmem:[%s178 + $0x3c8] sm:$0xff]
        %v841 = vld [vmem:[%s178 + $0x3d0] sm:$0xff]
        %v842 = vld [vmem:[%s178 + $0x3d8] sm:$0xff]
        %v843 = vld [vmem:[%s178 + $0x3e0] sm:$0xff]
        %v844 = vld [vmem:[%s178 + $0x3e8] sm:$0xff]
        %v845 = vld [vmem:[%s178 + $0x3f0] sm:$0xff]
        %v846 = vld [vmem:[%s178 + $0x3f8] sm:$0xff]
        %v847 = vld [vmem:[%s178 + $0x400] sm:$0xff]
        %v848 = vld [vmem:[%s178 + $0x408] sm:$0xff]
        %v849 = vld [vmem:[%s178 + $0x410] sm:$0xff]
        %v850 = vld [vmem:[%s178 + $0x418] sm:$0xff]
        %v851 = vld [vmem:[%s178 + $0x420] sm:$0xff]
        %v852 = vld [vmem:[%s178 + $0x428] sm:$0xff]
        %v853 = vld [vmem:[%s178 + $0x430] sm:$0xff]
        %v854 = vld [vmem:[%s178 + $0x438] sm:$0xff]
        %v855 = vld [vmem:[%s178 + $0x440] sm:$0xff]
        %v856 = vld [vmem:[%s178 + $0x448] sm:$0xff]
        %v857 = vld [vmem:[%s178 + $0x450] sm:$0xff]
        %v858 = vld [vmem:[%s178 + $0x458] sm:$0xff]
        %v859 = vld [vmem:[%s178 + $0x460] sm:$0xff]
        %v860 = vld [vmem:[%s178 + $0x468] sm:$0xff]
        %v861 = vld [vmem:[%s178 + $0x470] sm:$0xff]
        %v862 = vld [vmem:[%s178 + $0x478] sm:$0xff]
        %v863 = vld [vmem:[%s178 + $0x480] sm:$0xff]
        %v864 = vld [vmem:[%s178 + $0x488] sm:$0xff]
        %v865 = vld [vmem:[%s178 + $0x490] sm:$0xff]
        %v866 = vld [vmem:[%s178 + $0x498] sm:$0xff]
        %v867 = vld [vmem:[%s178 + $0x4a0] sm:$0xff]
        %v868 = vld [vmem:[%s178 + $0x4a8] sm:$0xff]
        %v869 = vld [vmem:[%s178 + $0x4b0] sm:$0xff]
        %v870 = vld [vmem:[%s178 + $0x4b8] sm:$0xff]
        %v871 = vld [vmem:[%s178 + $0x4c0] sm:$0xff]
        %v872 = vld [vmem:[%s178 + $0x4c8] sm:$0xff]
        %v873 = vld [vmem:[%s178 + $0x4d0] sm:$0xff]
        %v874 = vld [vmem:[%s178 + $0x4d8] sm:$0xff]
        %v875 = vld [vmem:[%s178 + $0x4e0] sm:$0xff]
        %v876 = vld [vmem:[%s178 + $0x4e8] sm:$0xff]
        %v877 = vld [vmem:[%s178 + $0x4f0] sm:$0xff]
        %v878 = vld [vmem:[%s178 + $0x4f8] sm:$0xff]
        %v879 = vld [vmem:[%s178 + $0x500] sm:$0xff]
        %v880 = vld [vmem:[%s178 + $0x508] sm:$0xff]
        %v881 = vld [vmem:[%s178 + $0x510] sm:$0xff]
        %v882 = vld [vmem:[%s178 + $0x518] sm:$0xff]
        %v883 = vld [vmem:[%s178 + $0x520] sm:$0xff]
        %v884 = vld [vmem:[%s178 + $0x528] sm:$0xff]
        %v885 = vld [vmem:[%s178 + $0x530] sm:$0xff]
        %v886 = vld [vmem:[%s178 + $0x538] sm:$0xff]
        %v887 = vld [vmem:[%s178 + $0x540] sm:$0xff]
        %v888 = vld [vmem:[%s178 + $0x548] sm:$0xff]
        %v889 = vld [vmem:[%s178 + $0x550] sm:$0xff]
        %v890 = vld [vmem:[%s178 + $0x558] sm:$0xff]
        %v891 = vld [vmem:[%s178 + $0x560] sm:$0xff]
        %v892 = vld [vmem:[%s178 + $0x568] sm:$0xff]
        %v893 = vld [vmem:[%s178 + $0x570] sm:$0xff]
        %v894 = vld [vmem:[%s178 + $0x578] sm:$0xff]
        %v895 = vld [vmem:[%s178 + $0x580] sm:$0xff]
        %v896 = vld [vmem:[%s178 + $0x588] sm:$0xff]
        %v897 = vld [vmem:[%s178 + $0x590] sm:$0xff]
        %v898 = vld [vmem:[%s178 + $0x598] sm:$0xff]
        %v899 = vld [vmem:[%s178 + $0x5a0] sm:$0xff]
        %v900 = vld [vmem:[%s178 + $0x5a8] sm:$0xff]
        %v901 = vld [vmem:[%s178 + $0x5b0] sm:$0xff]
        %v902 = vld [vmem:[%s178 + $0x5b8] sm:$0xff]
        %v903 = vld [vmem:[%s178 + $0x5c0] sm:$0xff]
        %v904 = vld [vmem:[%s178 + $0x5c8] sm:$0xff]
        %v905 = vld [vmem:[%s178 + $0x5d0] sm:$0xff]
        %v906 = vld [vmem:[%s178 + $0x5d8] sm:$0xff]
        %v907 = vld [vmem:[%s178 + $0x5e0] sm:$0xff]
        %v908 = vld [vmem:[%s178 + $0x5e8] sm:$0xff]
        %v909 = vld [vmem:[%s178 + $0x5f0] sm:$0xff]
        %v910 = vld [vmem:[%s178 + $0x5f8] sm:$0xff]
        %v911 = vld [vmem:[%s178 + $0x600] sm:$0xff]
        %v912 = vld [vmem:[%s178 + $0x608] sm:$0xff]
        %v913 = vld [vmem:[%s178 + $0x610] sm:$0xff]
        %v914 = vld [vmem:[%s178 + $0x618] sm:$0xff]
        %v915 = vld [vmem:[%s178 + $0x620] sm:$0xff]
        %v916 = vld [vmem:[%s178 + $0x628] sm:$0xff]
        %v917 = vld [vmem:[%s178 + $0x630] sm:$0xff]
        %v918 = vld [vmem:[%s178 + $0x638] sm:$0xff]
        %v919 = vld [vmem:[%s178 + $0x640] sm:$0xff]
        %v920 = vld [vmem:[%s178 + $0x648] sm:$0xff]
        %v921 = vld [vmem:[%s178 + $0x650] sm:$0xff]
        %v922 = vld [vmem:[%s178 + $0x658] sm:$0xff]
        %v923 = vld [vmem:[%s178 + $0x660] sm:$0xff]
        %v924 = vld [vmem:[%s178 + $0x668] sm:$0xff]
        %v925 = vld [vmem:[%s178 + $0x670] sm:$0xff]
        %v926 = vld [vmem:[%s178 + $0x678] sm:$0xff]
        %v927 = vld [vmem:[%s178 + $0x680] sm:$0xff]
        %v928 = vld [vmem:[%s178 + $0x688] sm:$0xff]
        %v929 = vld [vmem:[%s178 + $0x690] sm:$0xff]
        %v930 = vld [vmem:[%s178 + $0x698] sm:$0xff]
        %v931 = vld [vmem:[%s178 + $0x6a0] sm:$0xff]
        %v932 = vld [vmem:[%s178 + $0x6a8] sm:$0xff]
        %v933 = vld [vmem:[%s178 + $0x6b0] sm:$0xff]
        %v934 = vld [vmem:[%s178 + $0x6b8] sm:$0xff]
        %v935 = vld [vmem:[%s178 + $0x6c0] sm:$0xff]
        %v936 = vld [vmem:[%s178 + $0x6c8] sm:$0xff]
        %v937 = vld [vmem:[%s178 + $0x6d0] sm:$0xff]
        %v938 = vld [vmem:[%s178 + $0x6d8] sm:$0xff]
        %v939 = vld [vmem:[%s178 + $0x6e0] sm:$0xff]
        %v940 = vld [vmem:[%s178 + $0x6e8] sm:$0xff]
        %v941 = vld [vmem:[%s178 + $0x6f0] sm:$0xff]
        %v942 = vld [vmem:[%s178 + $0x6f8] sm:$0xff]
        %v943 = vld [vmem:[%s178 + $0x700] sm:$0xff]
        %v944 = vld [vmem:[%s178 + $0x708] sm:$0xff]
        %v945 = vld [vmem:[%s178 + $0x710] sm:$0xff]
        %v946 = vld [vmem:[%s178 + $0x718] sm:$0xff]
        %v947 = vld [vmem:[%s178 + $0x720] sm:$0xff]
        %v948 = vld [vmem:[%s178 + $0x728] sm:$0xff]
        %v949 = vld [vmem:[%s178 + $0x730] sm:$0xff]
        %v950 = vld [vmem:[%s178 + $0x738] sm:$0xff]
        %v951 = vld [vmem:[%s178 + $0x740] sm:$0xff]
        %v952 = vld [vmem:[%s178 + $0x748] sm:$0xff]
        %v953 = vld [vmem:[%s178 + $0x750] sm:$0xff]
        %v954 = vld [vmem:[%s178 + $0x758] sm:$0xff]
        %v955 = vld [vmem:[%s178 + $0x760] sm:$0xff]
        %v956 = vld [vmem:[%s178 + $0x768] sm:$0xff]
        %v957 = vld [vmem:[%s178 + $0x770] sm:$0xff]
        %v958 = vld [vmem:[%s178 + $0x778] sm:$0xff]
        %v959 = vld [vmem:[%s178 + $0x780] sm:$0xff]
        %v960 = vld [vmem:[%s178 + $0x788] sm:$0xff]
        %v961 = vld [vmem:[%s178 + $0x790] sm:$0xff]
        %v962 = vld [vmem:[%s178 + $0x798] sm:$0xff]
        %v963 = vld [vmem:[%s178 + $0x7a0] sm:$0xff]
        %v964 = vld [vmem:[%s178 + $0x7a8] sm:$0xff]
        %v965 = vld [vmem:[%s178 + $0x7b0] sm:$0xff]
        %v966 = vld [vmem:[%s178 + $0x7b8] sm:$0xff]
        %v967 = vld [vmem:[%s178 + $0x7c0] sm:$0xff]
        %v968 = vld [vmem:[%s178 + $0x7c8] sm:$0xff]
        %v969 = vld [vmem:[%s178 + $0x7d0] sm:$0xff]
        %v970 = vld [vmem:[%s178 + $0x7d8] sm:$0xff]
        %v971 = vld [vmem:[%s178 + $0x7e0] sm:$0xff]
        %v972 = vld [vmem:[%s178 + $0x7e8] sm:$0xff]
        %v973 = vld [vmem:[%s178 + $0x7f0] sm:$0xff]
        %v974 = vld [vmem:[%s178 + $0x7f8] sm:$0xff]
        %v975 = vld [vmem:[%s178 + $0x800] sm:$0xff]
        %v976 = vld [vmem:[%s178 + $0x808] sm:$0xff]
        %v977 = vld [vmem:[%s178 + $0x810] sm:$0xff]
        %v978 = vld [vmem:[%s178 + $0x818] sm:$0xff]
        %v979 = vld [vmem:[%s178 + $0x820] sm:$0xff]
        %v980 = vld [vmem:[%s178 + $0x828] sm:$0xff]
        %v981 = vld [vmem:[%s178 + $0x830] sm:$0xff]
        %v982 = vld [vmem:[%s178 + $0x838] sm:$0xff]
        %v983 = vld [vmem:[%s178 + $0x840] sm:$0xff]
        %v984 = vld [vmem:[%s178 + $0x848] sm:$0xff]
        %v985 = vld [vmem:[%s178 + $0x850] sm:$0xff]
        %v986 = vld [vmem:[%s178 + $0x858] sm:$0xff]
        %v987 = vld [vmem:[%s178 + $0x860] sm:$0xff]
        %v988 = vld [vmem:[%s178 + $0x868] sm:$0xff]
        %v989 = vld [vmem:[%s178 + $0x870] sm:$0xff]
        %v990 = vld [vmem:[%s178 + $0x878] sm:$0xff]
        %v991 = vld [vmem:[%s178 + $0x880] sm:$0xff]
        %v992 = vld [vmem:[%s178 + $0x888] sm:$0xff]
        %v993 = vld [vmem:[%s178 + $0x890] sm:$0xff]
        %v994 = vld [vmem:[%s178 + $0x898] sm:$0xff]
        %v995 = vld [vmem:[%s178 + $0x8a0] sm:$0xff]
        %v996 = vld [vmem:[%s178 + $0x8a8] sm:$0xff]
        %v997 = vld [vmem:[%s178 + $0x8b0] sm:$0xff]
        %v998 = vld [vmem:[%s178 + $0x8b8] sm:$0xff]
        %v999 = vld [vmem:[%s178 + $0x8c0] sm:$0xff]
        %v1000 = vld [vmem:[%s178 + $0x8c8] sm:$0xff]
        %v1001 = vld [vmem:[%s178 + $0x8d0] sm:$0xff]
        %v1002 = vld [vmem:[%s178 + $0x8d8] sm:$0xff]
        %v1003 = vld [vmem:[%s178 + $0x8e0] sm:$0xff]
        %v1004 = vld [vmem:[%s178 + $0x8e8] sm:$0xff]
        %v1005 = vld [vmem:[%s178 + $0x8f0] sm:$0xff]
        %v1006 = vld [vmem:[%s178 + $0x8f8] sm:$0xff]
        %v1007 = vld [vmem:[%s178 + $0x900] sm:$0xff]
        %v1008 = vld [vmem:[%s178 + $0x908] sm:$0xff]
        %v1009 = vld [vmem:[%s178 + $0x910] sm:$0xff]
        %v1010 = vld [vmem:[%s178 + $0x918] sm:$0xff]
        %v1011 = vld [vmem:[%s178 + $0x920] sm:$0xff]
        %v1012 = vld [vmem:[%s178 + $0x928] sm:$0xff]
        %v1013 = vld [vmem:[%s178 + $0x930] sm:$0xff]
        %v1014 = vld [vmem:[%s178 + $0x938] sm:$0xff]
        %v1015 = vld [vmem:[%s178 + $0x940] sm:$0xff]
        %v1016 = vld [vmem:[%s178 + $0x948] sm:$0xff]
        %v1017 = vld [vmem:[%s178 + $0x950] sm:$0xff]
        %v1018 = vld [vmem:[%s178 + $0x958] sm:$0xff]
        %v1019 = vld [vmem:[%s178 + $0x960] sm:$0xff]
        %v1020 = vld [vmem:[%s178 + $0x968] sm:$0xff]
        %v1021 = vld [vmem:[%s178 + $0x970] sm:$0xff]
        %v1022 = vld [vmem:[%s178 + $0x978] sm:$0xff]
        %v1023 = vld [vmem:[%s178 + $0x980] sm:$0xff]
        %v1024 = vld [vmem:[%s178 + $0x988] sm:$0xff]
        %v1025 = vld [vmem:[%s178 + $0x990] sm:$0xff]
        %v1026 = vld [vmem:[%s178 + $0x998] sm:$0xff]
        %v1027 = vld [vmem:[%s178 + $0x9a0] sm:$0xff]
        %v1028 = vld [vmem:[%s178 + $0x9a8] sm:$0xff]
        %v1029 = vld [vmem:[%s178 + $0x9b0] sm:$0xff]
        %v1030 = vld [vmem:[%s178 + $0x9b8] sm:$0xff]
        %v1031 = vld [vmem:[%s178 + $0x9c0] sm:$0xff]
        %v1032 = vld [vmem:[%s178 + $0x9c8] sm:$0xff]
        %v1033 = vld [vmem:[%s178 + $0x9d0] sm:$0xff]
        %v1034 = vld [vmem:[%s178 + $0x9d8] sm:$0xff]
        %v1035 = vld [vmem:[%s178 + $0x9e0] sm:$0xff]
        %v1036 = vld [vmem:[%s178 + $0x9e8] sm:$0xff]
        %v1037 = vld [vmem:[%s178 + $0x9f0] sm:$0xff]
        %v1038 = vld [vmem:[%s178 + $0x9f8] sm:$0xff]
        %v1039 = vld [vmem:[%s178 + $0xa00] sm:$0xff]
        %v1040 = vld [vmem:[%s178 + $0xa08] sm:$0xff]
        %v1041 = vld [vmem:[%s178 + $0xa10] sm:$0xff]
        %v1042 = vld [vmem:[%s178 + $0xa18] sm:$0xff]
        %v1043 = vld [vmem:[%s178 + $0xa20] sm:$0xff]
        %v1044 = vld [vmem:[%s178 + $0xa28] sm:$0xff]
        %v1045 = vld [vmem:[%s178 + $0xa30] sm:$0xff]
        %v1046 = vld [vmem:[%s178 + $0xa38] sm:$0xff]
        %v1047 = vld [vmem:[%s178 + $0xa40] sm:$0xff]
        %v1048 = vld [vmem:[%s178 + $0xa48] sm:$0xff]
        %v1049 = vld [vmem:[%s178 + $0xa50] sm:$0xff]
        %v1050 = vld [vmem:[%s178 + $0xa58] sm:$0xff]
        %v1051 = vld [vmem:[%s178 + $0xa60] sm:$0xff]
        %v1052 = vld [vmem:[%s178 + $0xa68] sm:$0xff]
        %v1053 = vld [vmem:[%s178 + $0xa70] sm:$0xff]
        %v1054 = vld [vmem:[%s178 + $0xa78] sm:$0xff]
        %v1055 = vld [vmem:[%s178 + $0xa80] sm:$0xff]
        %v1056 = vld [vmem:[%s178 + $0xa88] sm:$0xff]
        %v1057 = vld [vmem:[%s178 + $0xa90] sm:$0xff]
        %v1058 = vld [vmem:[%s178 + $0xa98] sm:$0xff]
        %v1059 = vld [vmem:[%s178 + $0xaa0] sm:$0xff]
        %v1060 = vld [vmem:[%s178 + $0xaa8] sm:$0xff]
        %v1061 = vld [vmem:[%s178 + $0xab0] sm:$0xff]
        %v1062 = vld [vmem:[%s178 + $0xab8] sm:$0xff]
        %v1063 = vld [vmem:[%s178 + $0xac0] sm:$0xff]
        %v1064 = vld [vmem:[%s178 + $0xac8] sm:$0xff]
        %v1065 = vld [vmem:[%s178 + $0xad0] sm:$0xff]
        %v1066 = vld [vmem:[%s178 + $0xad8] sm:$0xff]
        %v1067 = vld [vmem:[%s178 + $0xae0] sm:$0xff]
        %v1068 = vld [vmem:[%s178 + $0xae8] sm:$0xff]
        %v1069 = vld [vmem:[%s178 + $0xaf0] sm:$0xff]
        %v1070 = vld [vmem:[%s178 + $0xaf8] sm:$0xff]
        %v1071 = vld [vmem:[%s178 + $0xb00] sm:$0xff]
        %v1072 = vld [vmem:[%s178 + $0xb08] sm:$0xff]
        %v1073 = vld [vmem:[%s178 + $0xb10] sm:$0xff]
        %v1074 = vld [vmem:[%s178 + $0xb18] sm:$0xff]
        %v1075 = vld [vmem:[%s178 + $0xb20] sm:$0xff]
        %v1076 = vld [vmem:[%s178 + $0xb28] sm:$0xff]
        %v1077 = vld [vmem:[%s178 + $0xb30] sm:$0xff]
        %v1078 = vld [vmem:[%s178 + $0xb38] sm:$0xff]
        %v1079 = vld [vmem:[%s178 + $0xb40] sm:$0xff]
        %v1080 = vld [vmem:[%s178 + $0xb48] sm:$0xff]
        %v1081 = vld [vmem:[%s178 + $0xb50] sm:$0xff]
        %v1082 = vld [vmem:[%s178 + $0xb58] sm:$0xff]
        %v1083 = vld [vmem:[%s178 + $0xb60] sm:$0xff]
        %v1084 = vld [vmem:[%s178 + $0xb68] sm:$0xff]
        %v1085 = vld [vmem:[%s178 + $0xb70] sm:$0xff]
        %v1086 = vld [vmem:[%s178 + $0xb78] sm:$0xff]
        %v1087 = vld [vmem:[%s178 + $0xb80] sm:$0xff]
        %v1088 = vld [vmem:[%s178 + $0xb88] sm:$0xff]
        %v1089 = vld [vmem:[%s178 + $0xb90] sm:$0xff]
        %v1090 = vld [vmem:[%s178 + $0xb98] sm:$0xff]
        %v1091 = vld [vmem:[%s178 + $0xba0] sm:$0xff]
        %v1092 = vld [vmem:[%s178 + $0xba8] sm:$0xff]
        %v1093 = vld [vmem:[%s178 + $0xbb0] sm:$0xff]
        %v1094 = vld [vmem:[%s178 + $0xbb8] sm:$0xff]
        %v1095 = vld [vmem:[%s178 + $0xbc0] sm:$0xff]
        %v1096 = vld [vmem:[%s178 + $0xbc8] sm:$0xff]
        %v1097 = vld [vmem:[%s178 + $0xbd0] sm:$0xff]
        %v1098 = vld [vmem:[%s178 + $0xbd8] sm:$0xff]
        %v1099 = vld [vmem:[%s178 + $0xbe0] sm:$0xff]
        %v1100 = vld [vmem:[%s178 + $0xbe8] sm:$0xff]
        %v1101 = vld [vmem:[%s178 + $0xbf0] sm:$0xff]
        %v1102 = vld [vmem:[%s178 + $0xbf8] sm:$0xff]
        %v1103 = vld [vmem:[%s178 + $0xc00] sm:$0xff]
        %v1104 = vld [vmem:[%s178 + $0xc08] sm:$0xff]
        %v1105 = vld [vmem:[%s178 + $0xc10] sm:$0xff]
        %v1106 = vld [vmem:[%s178 + $0xc18] sm:$0xff]
        %v1107 = vld [vmem:[%s178 + $0xc20] sm:$0xff]
        %v1108 = vld [vmem:[%s178 + $0xc28] sm:$0xff]
        %v1109 = vld [vmem:[%s178 + $0xc30] sm:$0xff]
        %v1110 = vld [vmem:[%s178 + $0xc38] sm:$0xff]
        %v1111 = vld [vmem:[%s178 + $0xc40] sm:$0xff]
        %v1112 = vld [vmem:[%s178 + $0xc48] sm:$0xff]
        %v1113 = vld [vmem:[%s178 + $0xc50] sm:$0xff]
        %v1114 = vld [vmem:[%s178 + $0xc58] sm:$0xff]
        %v1115 = vld [vmem:[%s178 + $0xc60] sm:$0xff]
        %v1116 = vld [vmem:[%s178 + $0xc68] sm:$0xff]
        %v1117 = vld [vmem:[%s178 + $0xc70] sm:$0xff]
        %v1118 = vld [vmem:[%s178 + $0xc78] sm:$0xff]
        %v1119 = vld [vmem:[%s178 + $0xc80] sm:$0xff]
        %v1120 = vld [vmem:[%s178 + $0xc88] sm:$0xff]
        %v1121 = vld [vmem:[%s178 + $0xc90] sm:$0xff]
        %v1122 = vld [vmem:[%s178 + $0xc98] sm:$0xff]
        %v1123 = vld [vmem:[%s178 + $0xca0] sm:$0xff]
        %v1124 = vld [vmem:[%s178 + $0xca8] sm:$0xff]
        %v1125 = vld [vmem:[%s178 + $0xcb0] sm:$0xff]
        %v1126 = vld [vmem:[%s178 + $0xcb8] sm:$0xff]
        %v1127 = vld [vmem:[%s178 + $0xcc0] sm:$0xff]
        %v1128 = vld [vmem:[%s178 + $0xcc8] sm:$0xff]
        %v1129 = vld [vmem:[%s178 + $0xcd0] sm:$0xff]
        %v1130 = vld [vmem:[%s178 + $0xcd8] sm:$0xff]
        %v1131 = vld [vmem:[%s178 + $0xce0] sm:$0xff]
        %v1132 = vld [vmem:[%s178 + $0xce8] sm:$0xff]
        %v1133 = vld [vmem:[%s178 + $0xcf0] sm:$0xff]
        %v1134 = vld [vmem:[%s178 + $0xcf8] sm:$0xff]
        %v1135 = vld [vmem:[%s178 + $0xd00] sm:$0xff]
        %v1136 = vld [vmem:[%s178 + $0xd08] sm:$0xff]
        %v1137 = vld [vmem:[%s178 + $0xd10] sm:$0xff]
        %v1138 = vld [vmem:[%s178 + $0xd18] sm:$0xff]
        %v1139 = vld [vmem:[%s178 + $0xd20] sm:$0xff]
        %v1140 = vld [vmem:[%s178 + $0xd28] sm:$0xff]
        %v1141 = vld [vmem:[%s178 + $0xd30] sm:$0xff]
        %v1142 = vld [vmem:[%s178 + $0xd38] sm:$0xff]
        %v1143 = vld [vmem:[%s178 + $0xd40] sm:$0xff]
        %v1144 = vld [vmem:[%s178 + $0xd48] sm:$0xff]
        %v1145 = vld [vmem:[%s178 + $0xd50] sm:$0xff]
        %v1146 = vld [vmem:[%s178 + $0xd58] sm:$0xff]
        %v1147 = vld [vmem:[%s178 + $0xd60] sm:$0xff]
        %v1148 = vld [vmem:[%s178 + $0xd68] sm:$0xff]
        %v1149 = vld [vmem:[%s178 + $0xd70] sm:$0xff]
        %v1150 = vld [vmem:[%s178 + $0xd78] sm:$0xff]
        %v1151 = vld [vmem:[%s178 + $0xd80] sm:$0xff]
        %v1152 = vld [vmem:[%s178 + $0xd88] sm:$0xff]
        %v1153 = vld [vmem:[%s178 + $0xd90] sm:$0xff]
        %v1154 = vld [vmem:[%s178 + $0xd98] sm:$0xff]
        %v1155 = vld [vmem:[%s178 + $0xda0] sm:$0xff]
        %v1156 = vld [vmem:[%s178 + $0xda8] sm:$0xff]
        %v1157 = vld [vmem:[%s178 + $0xdb0] sm:$0xff]
        %v1158 = vld [vmem:[%s178 + $0xdb8] sm:$0xff]
        %v1159 = vld [vmem:[%s178 + $0xdc0] sm:$0xff]
        %v1160 = vld [vmem:[%s178 + $0xdc8] sm:$0xff]
        %v1161 = vld [vmem:[%s178 + $0xdd0] sm:$0xff]
        %v1162 = vld [vmem:[%s178 + $0xdd8] sm:$0xff]
        %v1163 = vld [vmem:[%s178 + $0xde0] sm:$0xff]
        %v1164 = vld [vmem:[%s178 + $0xde8] sm:$0xff]
        %v1165 = vld [vmem:[%s178 + $0xdf0] sm:$0xff]
        %v1166 = vld [vmem:[%s178 + $0xdf8] sm:$0xff]
        %v1167 = vld [vmem:[%s178 + $0xe00] sm:$0xff]
        %v1168 = vld [vmem:[%s178 + $0xe08] sm:$0xff]
        %v1169 = vld [vmem:[%s178 + $0xe10] sm:$0xff]
        %v1170 = vld [vmem:[%s178 + $0xe18] sm:$0xff]
        %v1171 = vld [vmem:[%s178 + $0xe20] sm:$0xff]
        %v1172 = vld [vmem:[%s178 + $0xe28] sm:$0xff]
        %v1173 = vld [vmem:[%s178 + $0xe30] sm:$0xff]
        %v1174 = vld [vmem:[%s178 + $0xe38] sm:$0xff]
        %v1175 = vld [vmem:[%s178 + $0xe40] sm:$0xff]
        %v1176 = vld [vmem:[%s178 + $0xe48] sm:$0xff]
        %v1177 = vld [vmem:[%s178 + $0xe50] sm:$0xff]
        %v1178 = vld [vmem:[%s178 + $0xe58] sm:$0xff]
        %v1179 = vld [vmem:[%s178 + $0xe60] sm:$0xff]
        %v1180 = vld [vmem:[%s178 + $0xe68] sm:$0xff]
        %v1181 = vld [vmem:[%s178 + $0xe70] sm:$0xff]
        %v1182 = vld [vmem:[%s178 + $0xe78] sm:$0xff]
        %v1183 = vld [vmem:[%s178 + $0xe80] sm:$0xff]
        %v1184 = vld [vmem:[%s178 + $0xe88] sm:$0xff]
        %v1185 = vld [vmem:[%s178 + $0xe90] sm:$0xff]
        %v1186 = vld [vmem:[%s178 + $0xe98] sm:$0xff]
        %v1187 = vld [vmem:[%s178 + $0xea0] sm:$0xff]
        %v1188 = vld [vmem:[%s178 + $0xea8] sm:$0xff]
        %v1189 = vld [vmem:[%s178 + $0xeb0] sm:$0xff]
        %v1190 = vld [vmem:[%s178 + $0xeb8] sm:$0xff]
        %v1191 = vld [vmem:[%s178 + $0xec0] sm:$0xff]
        %v1192 = vld [vmem:[%s178 + $0xec8] sm:$0xff]
        %v1193 = vld [vmem:[%s178 + $0xed0] sm:$0xff]
        %v1194 = vld [vmem:[%s178 + $0xed8] sm:$0xff]
        %v1195 = vld [vmem:[%s178 + $0xee0] sm:$0xff]
        %v1196 = vld [vmem:[%s178 + $0xee8] sm:$0xff]
        %v1197 = vld [vmem:[%s178 + $0xef0] sm:$0xff]
        %v1198 = vld [vmem:[%s178 + $0xef8] sm:$0xff]
        %v1199 = vld [vmem:[%s178 + $0xf00] sm:$0xff]
        %v1200 = vld [vmem:[%s178 + $0xf08] sm:$0xff]
        %v1201 = vld [vmem:[%s178 + $0xf10] sm:$0xff]
        %v1202 = vld [vmem:[%s178 + $0xf18] sm:$0xff]
        %v1203 = vld [vmem:[%s178 + $0xf20] sm:$0xff]
        %v1204 = vld [vmem:[%s178 + $0xf28] sm:$0xff]
        %v1205 = vld [vmem:[%s178 + $0xf30] sm:$0xff]
        %v1206 = vld [vmem:[%s178 + $0xf38] sm:$0xff]
        %v1207 = vld [vmem:[%s178 + $0xf40] sm:$0xff]
        %v1208 = vld [vmem:[%s178 + $0xf48] sm:$0xff]
        %v1209 = vld [vmem:[%s178 + $0xf50] sm:$0xff]
        %v1210 = vld [vmem:[%s178 + $0xf58] sm:$0xff]
        %v1211 = vld [vmem:[%s178 + $0xf60] sm:$0xff]
        %v1212 = vld [vmem:[%s178 + $0xf68] sm:$0xff]
        %v1213 = vld [vmem:[%s178 + $0xf70] sm:$0xff]
        %v1214 = vld [vmem:[%s178 + $0xf78] sm:$0xff]
        %v1215 = vld [vmem:[%s178 + $0xf80] sm:$0xff]
        %v1216 = vld [vmem:[%s178 + $0xf88] sm:$0xff]
        %v1217 = vld [vmem:[%s178 + $0xf90] sm:$0xff]
        %v1218 = vld [vmem:[%s178 + $0xf98] sm:$0xff]
        %v1219 = vld [vmem:[%s178 + $0xfa0] sm:$0xff]
        %v1220 = vld [vmem:[%s178 + $0xfa8] sm:$0xff]
        %v1221 = vld [vmem:[%s178 + $0xfb0] sm:$0xff]
        %v1222 = vld [vmem:[%s178 + $0xfb8] sm:$0xff]
        %v1223 = vld [vmem:[%s178 + $0xfc0] sm:$0xff]
        %v1224 = vld [vmem:[%s178 + $0xfc8] sm:$0xff]
        %v1225 = vld [vmem:[%s178 + $0xfd0] sm:$0xff]
        %v1226 = vld [vmem:[%s178 + $0xfd8] sm:$0xff]
        %v1227 = vld [vmem:[%s178 + $0xfe0] sm:$0xff]
        %v1228 = vld [vmem:[%s178 + $0xfe8] sm:$0xff]
        %v1229 = vld [vmem:[%s178 + $0xff0] sm:$0xff]
        %v1230 = vld [vmem:[%s178 + $0xff8] sm:$0xff]
        %v1231 = vmul.f32 %v207, 2.0
        %v1232 = vmul.f32 %v208, 2.0
        %v1233 = vmul.f32 %v209, 2.0
        %v1234 = vmul.f32 %v210, 2.0
        %v1235 = vmul.f32 %v211, 2.0
        %v1236 = vmul.f32 %v212, 2.0
        %v1237 = vmul.f32 %v213, 2.0
        %v1238 = vmul.f32 %v214, 2.0
        %v1239 = vmul.f32 %v215, 2.0
        %v1240 = vmul.f32 %v216, 2.0
        %v1241 = vmul.f32 %v217, 2.0
        %v1242 = vmul.f32 %v218, 2.0
        %v1243 = vmul.f32 %v219, 2.0
        %v1244 = vmul.f32 %v220, 2.0
        %v1245 = vmul.f32 %v221, 2.0
        %v1246 = vmul.f32 %v222, 2.0
        %v1247 = vmul.f32 %v223, 2.0
        %v1248 = vmul.f32 %v224, 2.0
        %v1249 = vmul.f32 %v225, 2.0
        %v1250 = vmul.f32 %v226, 2.0
        %v1251 = vmul.f32 %v227, 2.0
        %v1252 = vmul.f32 %v228, 2.0
        %v1253 = vmul.f32 %v229, 2.0
        %v1254 = vmul.f32 %v230, 2.0
        %v1255 = vmul.f32 %v231, 2.0
        %v1256 = vmul.f32 %v232, 2.0
        %v1257 = vmul.f32 %v233, 2.0
        %v1258 = vmul.f32 %v234, 2.0
        %v1259 = vmul.f32 %v235, 2.0
        %v1260 = vmul.f32 %v236, 2.0
        %v1261 = vmul.f32 %v237, 2.0
        %v1262 = vmul.f32 %v238, 2.0
        %v1263 = vmul.f32 %v239, 2.0
        %v1264 = vmul.f32 %v240, 2.0
        %v1265 = vmul.f32 %v241, 2.0
        %v1266 = vmul.f32 %v242, 2.0
        %v1267 = vmul.f32 %v243, 2.0
        %v1268 = vmul.f32 %v244, 2.0
        %v1269 = vmul.f32 %v245, 2.0
        %v1270 = vmul.f32 %v246, 2.0
        %v1271 = vmul.f32 %v247, 2.0
        %v1272 = vmul.f32 %v248, 2.0
        %v1273 = vmul.f32 %v249, 2.0
        %v1274 = vmul.f32 %v250, 2.0
        %v1275 = vmul.f32 %v251, 2.0
        %v1276 = vmul.f32 %v252, 2.0
        %v1277 = vmul.f32 %v253, 2.0
        %v1278 = vmul.f32 %v254, 2.0
        %v1279 = vmul.f32 %v255, 2.0
        %v1280 = vmul.f32 %v256, 2.0
        %v1281 = vmul.f32 %v257, 2.0
        %v1282 = vmul.f32 %v258, 2.0
        %v1283 = vmul.f32 %v259, 2.0
        %v1284 = vmul.f32 %v260, 2.0
        %v1285 = vmul.f32 %v261, 2.0
        %v1286 = vmul.f32 %v262, 2.0
        %v1287 = vmul.f32 %v263, 2.0
        %v1288 = vmul.f32 %v264, 2.0
        %v1289 = vmul.f32 %v265, 2.0
        %v1290 = vmul.f32 %v266, 2.0
        %v1291 = vmul.f32 %v267, 2.0
        %v1292 = vmul.f32 %v268, 2.0
        %v1293 = vmul.f32 %v269, 2.0
        %v1294 = vmul.f32 %v270, 2.0
        %v1295 = vmul.f32 %v271, 2.0
        %v1296 = vmul.f32 %v272, 2.0
        %v1297 = vmul.f32 %v273, 2.0
        %v1298 = vmul.f32 %v274, 2.0
        %v1299 = vmul.f32 %v275, 2.0
        %v1300 = vmul.f32 %v276, 2.0
        %v1301 = vmul.f32 %v277, 2.0
        %v1302 = vmul.f32 %v278, 2.0
        %v1303 = vmul.f32 %v279, 2.0
        %v1304 = vmul.f32 %v280, 2.0
        %v1305 = vmul.f32 %v281, 2.0
        %v1306 = vmul.f32 %v282, 2.0
        %v1307 = vmul.f32 %v283, 2.0
        %v1308 = vmul.f32 %v284, 2.0
        %v1309 = vmul.f32 %v285, 2.0
        %v1310 = vmul.f32 %v286, 2.0
        %v1311 = vmul.f32 %v287, 2.0
        %v1312 = vmul.f32 %v288, 2.0
        %v1313 = vmul.f32 %v289, 2.0
        %v1314 = vmul.f32 %v290, 2.0
        %v1315 = vmul.f32 %v291, 2.0
        %v1316 = vmul.f32 %v292, 2.0
        %v1317 = vmul.f32 %v293, 2.0
        %v1318 = vmul.f32 %v294, 2.0
        %v1319 = vmul.f32 %v295, 2.0
        %v1320 = vmul.f32 %v296, 2.0
        %v1321 = vmul.f32 %v297, 2.0
        %v1322 = vmul.f32 %v298, 2.0
        %v1323 = vmul.f32 %v299, 2.0
        %v1324 = vmul.f32 %v300, 2.0
        %v1325 = vmul.f32 %v301, 2.0
        %v1326 = vmul.f32 %v302, 2.0
        %v1327 = vmul.f32 %v303, 2.0
        %v1328 = vmul.f32 %v304, 2.0
        %v1329 = vmul.f32 %v305, 2.0
        %v1330 = vmul.f32 %v306, 2.0
        %v1331 = vmul.f32 %v307, 2.0
        %v1332 = vmul.f32 %v308, 2.0
        %v1333 = vmul.f32 %v309, 2.0
        %v1334 = vmul.f32 %v310, 2.0
        %v1335 = vmul.f32 %v311, 2.0
        %v1336 = vmul.f32 %v312, 2.0
        %v1337 = vmul.f32 %v313, 2.0
        %v1338 = vmul.f32 %v314, 2.0
        %v1339 = vmul.f32 %v315, 2.0
        %v1340 = vmul.f32 %v316, 2.0
        %v1341 = vmul.f32 %v317, 2.0
        %v1342 = vmul.f32 %v318, 2.0
        %v1343 = vmul.f32 %v319, 2.0
        %v1344 = vmul.f32 %v320, 2.0
        %v1345 = vmul.f32 %v321, 2.0
        %v1346 = vmul.f32 %v322, 2.0
        %v1347 = vmul.f32 %v323, 2.0
        %v1348 = vmul.f32 %v324, 2.0
        %v1349 = vmul.f32 %v325, 2.0
        %v1350 = vmul.f32 %v326, 2.0
        %v1351 = vmul.f32 %v327, 2.0
        %v1352 = vmul.f32 %v328, 2.0
        %v1353 = vmul.f32 %v329, 2.0
        %v1354 = vmul.f32 %v330, 2.0
        %v1355 = vmul.f32 %v331, 2.0
        %v1356 = vmul.f32 %v332, 2.0
        %v1357 = vmul.f32 %v333, 2.0
        %v1358 = vmul.f32 %v334, 2.0
        %v1359 = vmul.f32 %v335, 2.0
        %v1360 = vmul.f32 %v336, 2.0
        %v1361 = vmul.f32 %v337, 2.0
        %v1362 = vmul.f32 %v338, 2.0
        %v1363 = vmul.f32 %v339, 2.0
        %v1364 = vmul.f32 %v340, 2.0
        %v1365 = vmul.f32 %v341, 2.0
        %v1366 = vmul.f32 %v342, 2.0
        %v1367 = vmul.f32 %v343, 2.0
        %v1368 = vmul.f32 %v344, 2.0
        %v1369 = vmul.f32 %v345, 2.0
        %v1370 = vmul.f32 %v346, 2.0
        %v1371 = vmul.f32 %v347, 2.0
        %v1372 = vmul.f32 %v348, 2.0
        %v1373 = vmul.f32 %v349, 2.0
        %v1374 = vmul.f32 %v350, 2.0
        %v1375 = vmul.f32 %v351, 2.0
        %v1376 = vmul.f32 %v352, 2.0
        %v1377 = vmul.f32 %v353, 2.0
        %v1378 = vmul.f32 %v354, 2.0
        %v1379 = vmul.f32 %v355, 2.0
        %v1380 = vmul.f32 %v356, 2.0
        %v1381 = vmul.f32 %v357, 2.0
        %v1382 = vmul.f32 %v358, 2.0
        %v1383 = vmul.f32 %v359, 2.0
        %v1384 = vmul.f32 %v360, 2.0
        %v1385 = vmul.f32 %v361, 2.0
        %v1386 = vmul.f32 %v362, 2.0
        %v1387 = vmul.f32 %v363, 2.0
        %v1388 = vmul.f32 %v364, 2.0
        %v1389 = vmul.f32 %v365, 2.0
        %v1390 = vmul.f32 %v366, 2.0
        %v1391 = vmul.f32 %v367, 2.0
        %v1392 = vmul.f32 %v368, 2.0
        %v1393 = vmul.f32 %v369, 2.0
        %v1394 = vmul.f32 %v370, 2.0
        %v1395 = vmul.f32 %v371, 2.0
        %v1396 = vmul.f32 %v372, 2.0
        %v1397 = vmul.f32 %v373, 2.0
        %v1398 = vmul.f32 %v374, 2.0
        %v1399 = vmul.f32 %v375, 2.0
        %v1400 = vmul.f32 %v376, 2.0
        %v1401 = vmul.f32 %v377, 2.0
        %v1402 = vmul.f32 %v378, 2.0
        %v1403 = vmul.f32 %v379, 2.0
        %v1404 = vmul.f32 %v380, 2.0
        %v1405 = vmul.f32 %v381, 2.0
        %v1406 = vmul.f32 %v382, 2.0
        %v1407 = vmul.f32 %v383, 2.0
        %v1408 = vmul.f32 %v384, 2.0
        %v1409 = vmul.f32 %v385, 2.0
        %v1410 = vmul.f32 %v386, 2.0
        %v1411 = vmul.f32 %v387, 2.0
        %v1412 = vmul.f32 %v388, 2.0
        %v1413 = vmul.f32 %v389, 2.0
        %v1414 = vmul.f32 %v390, 2.0
        %v1415 = vmul.f32 %v391, 2.0
        %v1416 = vmul.f32 %v392, 2.0
        %v1417 = vmul.f32 %v393, 2.0
        %v1418 = vmul.f32 %v394, 2.0
        %v1419 = vmul.f32 %v395, 2.0
        %v1420 = vmul.f32 %v396, 2.0
        %v1421 = vmul.f32 %v397, 2.0
        %v1422 = vmul.f32 %v398, 2.0
        %v1423 = vmul.f32 %v399, 2.0
        %v1424 = vmul.f32 %v400, 2.0
        %v1425 = vmul.f32 %v401, 2.0
        %v1426 = vmul.f32 %v402, 2.0
        %v1427 = vmul.f32 %v403, 2.0
        %v1428 = vmul.f32 %v404, 2.0
        %v1429 = vmul.f32 %v405, 2.0
        %v1430 = vmul.f32 %v406, 2.0
        %v1431 = vmul.f32 %v407, 2.0
        %v1432 = vmul.f32 %v408, 2.0
        %v1433 = vmul.f32 %v409, 2.0
        %v1434 = vmul.f32 %v410, 2.0
        %v1435 = vmul.f32 %v411, 2.0
        %v1436 = vmul.f32 %v412, 2.0
        %v1437 = vmul.f32 %v413, 2.0
        %v1438 = vmul.f32 %v414, 2.0
        %v1439 = vmul.f32 %v415, 2.0
        %v1440 = vmul.f32 %v416, 2.0
        %v1441 = vmul.f32 %v417, 2.0
        %v1442 = vmul.f32 %v418, 2.0
        %v1443 = vmul.f32 %v419, 2.0
        %v1444 = vmul.f32 %v420, 2.0
        %v1445 = vmul.f32 %v421, 2.0
        %v1446 = vmul.f32 %v422, 2.0
        %v1447 = vmul.f32 %v423, 2.0
        %v1448 = vmul.f32 %v424, 2.0
        %v1449 = vmul.f32 %v425, 2.0
        %v1450 = vmul.f32 %v426, 2.0
        %v1451 = vmul.f32 %v427, 2.0
        %v1452 = vmul.f32 %v428, 2.0
        %v1453 = vmul.f32 %v429, 2.0
        %v1454 = vmul.f32 %v430, 2.0
        %v1455 = vmul.f32 %v431, 2.0
        %v1456 = vmul.f32 %v432, 2.0
        %v1457 = vmul.f32 %v433, 2.0
        %v1458 = vmul.f32 %v434, 2.0
        %v1459 = vmul.f32 %v435, 2.0
        %v1460 = vmul.f32 %v436, 2.0
        %v1461 = vmul.f32 %v437, 2.0
        %v1462 = vmul.f32 %v438, 2.0
        %v1463 = vmul.f32 %v439, 2.0
        %v1464 = vmul.f32 %v440, 2.0
        %v1465 = vmul.f32 %v441, 2.0
        %v1466 = vmul.f32 %v442, 2.0
        %v1467 = vmul.f32 %v443, 2.0
        %v1468 = vmul.f32 %v444, 2.0
        %v1469 = vmul.f32 %v445, 2.0
        %v1470 = vmul.f32 %v446, 2.0
        %v1471 = vmul.f32 %v447, 2.0
        %v1472 = vmul.f32 %v448, 2.0
        %v1473 = vmul.f32 %v449, 2.0
        %v1474 = vmul.f32 %v450, 2.0
        %v1475 = vmul.f32 %v451, 2.0
        %v1476 = vmul.f32 %v452, 2.0
        %v1477 = vmul.f32 %v453, 2.0
        %v1478 = vmul.f32 %v454, 2.0
        %v1479 = vmul.f32 %v455, 2.0
        %v1480 = vmul.f32 %v456, 2.0
        %v1481 = vmul.f32 %v457, 2.0
        %v1482 = vmul.f32 %v458, 2.0
        %v1483 = vmul.f32 %v459, 2.0
        %v1484 = vmul.f32 %v460, 2.0
        %v1485 = vmul.f32 %v461, 2.0
        %v1486 = vmul.f32 %v462, 2.0
        %v1487 = vmul.f32 %v463, 2.0
        %v1488 = vmul.f32 %v464, 2.0
        %v1489 = vmul.f32 %v465, 2.0
        %v1490 = vmul.f32 %v466, 2.0
        %v1491 = vmul.f32 %v467, 2.0
        %v1492 = vmul.f32 %v468, 2.0
        %v1493 = vmul.f32 %v469, 2.0
        %v1494 = vmul.f32 %v470, 2.0
        %v1495 = vmul.f32 %v471, 2.0
        %v1496 = vmul.f32 %v472, 2.0
        %v1497 = vmul.f32 %v473, 2.0
        %v1498 = vmul.f32 %v474, 2.0
        %v1499 = vmul.f32 %v475, 2.0
        %v1500 = vmul.f32 %v476, 2.0
        %v1501 = vmul.f32 %v477, 2.0
        %v1502 = vmul.f32 %v478, 2.0
        %v1503 = vmul.f32 %v479, 2.0
        %v1504 = vmul.f32 %v480, 2.0
        %v1505 = vmul.f32 %v481, 2.0
        %v1506 = vmul.f32 %v482, 2.0
        %v1507 = vmul.f32 %v483, 2.0
        %v1508 = vmul.f32 %v484, 2.0
        %v1509 = vmul.f32 %v485, 2.0
        %v1510 = vmul.f32 %v486, 2.0
        %v1511 = vmul.f32 %v487, 2.0
        %v1512 = vmul.f32 %v488, 2.0
        %v1513 = vmul.f32 %v489, 2.0
        %v1514 = vmul.f32 %v490, 2.0
        %v1515 = vmul.f32 %v491, 2.0
        %v1516 = vmul.f32 %v492, 2.0
        %v1517 = vmul.f32 %v493, 2.0
        %v1518 = vmul.f32 %v494, 2.0
        %v1519 = vmul.f32 %v495, 2.0
        %v1520 = vmul.f32 %v496, 2.0
        %v1521 = vmul.f32 %v497, 2.0
        %v1522 = vmul.f32 %v498, 2.0
        %v1523 = vmul.f32 %v499, 2.0
        %v1524 = vmul.f32 %v500, 2.0
        %v1525 = vmul.f32 %v501, 2.0
        %v1526 = vmul.f32 %v502, 2.0
        %v1527 = vmul.f32 %v503, 2.0
        %v1528 = vmul.f32 %v504, 2.0
        %v1529 = vmul.f32 %v505, 2.0
        %v1530 = vmul.f32 %v506, 2.0
        %v1531 = vmul.f32 %v507, 2.0
        %v1532 = vmul.f32 %v508, 2.0
        %v1533 = vmul.f32 %v509, 2.0
        %v1534 = vmul.f32 %v510, 2.0
        %v1535 = vmul.f32 %v511, 2.0
        %v1536 = vmul.f32 %v512, 2.0
        %v1537 = vmul.f32 %v513, 2.0
        %v1538 = vmul.f32 %v514, 2.0
        %v1539 = vmul.f32 %v515, 2.0
        %v1540 = vmul.f32 %v516, 2.0
        %v1541 = vmul.f32 %v517, 2.0
        %v1542 = vmul.f32 %v518, 2.0
        %v1543 = vmul.f32 %v519, 2.0
        %v1544 = vmul.f32 %v520, 2.0
        %v1545 = vmul.f32 %v521, 2.0
        %v1546 = vmul.f32 %v522, 2.0
        %v1547 = vmul.f32 %v523, 2.0
        %v1548 = vmul.f32 %v524, 2.0
        %v1549 = vmul.f32 %v525, 2.0
        %v1550 = vmul.f32 %v526, 2.0
        %v1551 = vmul.f32 %v527, 2.0
        %v1552 = vmul.f32 %v528, 2.0
        %v1553 = vmul.f32 %v529, 2.0
        %v1554 = vmul.f32 %v530, 2.0
        %v1555 = vmul.f32 %v531, 2.0
        %v1556 = vmul.f32 %v532, 2.0
        %v1557 = vmul.f32 %v533, 2.0
        %v1558 = vmul.f32 %v534, 2.0
        %v1559 = vmul.f32 %v535, 2.0
        %v1560 = vmul.f32 %v536, 2.0
        %v1561 = vmul.f32 %v537, 2.0
        %v1562 = vmul.f32 %v538, 2.0
        %v1563 = vmul.f32 %v539, 2.0
        %v1564 = vmul.f32 %v540, 2.0
        %v1565 = vmul.f32 %v541, 2.0
        %v1566 = vmul.f32 %v542, 2.0
        %v1567 = vmul.f32 %v543, 2.0
        %v1568 = vmul.f32 %v544, 2.0
        %v1569 = vmul.f32 %v545, 2.0
        %v1570 = vmul.f32 %v546, 2.0
        %v1571 = vmul.f32 %v547, 2.0
        %v1572 = vmul.f32 %v548, 2.0
        %v1573 = vmul.f32 %v549, 2.0
        %v1574 = vmul.f32 %v550, 2.0
        %v1575 = vmul.f32 %v551, 2.0
        %v1576 = vmul.f32 %v552, 2.0
        %v1577 = vmul.f32 %v553, 2.0
        %v1578 = vmul.f32 %v554, 2.0
        %v1579 = vmul.f32 %v555, 2.0
        %v1580 = vmul.f32 %v556, 2.0
        %v1581 = vmul.f32 %v557, 2.0
        %v1582 = vmul.f32 %v558, 2.0
        %v1583 = vmul.f32 %v559, 2.0
        %v1584 = vmul.f32 %v560, 2.0
        %v1585 = vmul.f32 %v561, 2.0
        %v1586 = vmul.f32 %v562, 2.0
        %v1587 = vmul.f32 %v563, 2.0
        %v1588 = vmul.f32 %v564, 2.0
        %v1589 = vmul.f32 %v565, 2.0
        %v1590 = vmul.f32 %v566, 2.0
        %v1591 = vmul.f32 %v567, 2.0
        %v1592 = vmul.f32 %v568, 2.0
        %v1593 = vmul.f32 %v569, 2.0
        %v1594 = vmul.f32 %v570, 2.0
        %v1595 = vmul.f32 %v571, 2.0
        %v1596 = vmul.f32 %v572, 2.0
        %v1597 = vmul.f32 %v573, 2.0
        %v1598 = vmul.f32 %v574, 2.0
        %v1599 = vmul.f32 %v575, 2.0
        %v1600 = vmul.f32 %v576, 2.0
        %v1601 = vmul.f32 %v577, 2.0
        %v1602 = vmul.f32 %v578, 2.0
        %v1603 = vmul.f32 %v579, 2.0
        %v1604 = vmul.f32 %v580, 2.0
        %v1605 = vmul.f32 %v581, 2.0
        %v1606 = vmul.f32 %v582, 2.0
        %v1607 = vmul.f32 %v583, 2.0
        %v1608 = vmul.f32 %v584, 2.0
        %v1609 = vmul.f32 %v585, 2.0
        %v1610 = vmul.f32 %v586, 2.0
        %v1611 = vmul.f32 %v587, 2.0
        %v1612 = vmul.f32 %v588, 2.0
        %v1613 = vmul.f32 %v589, 2.0
        %v1614 = vmul.f32 %v590, 2.0
        %v1615 = vmul.f32 %v591, 2.0
        %v1616 = vmul.f32 %v592, 2.0
        %v1617 = vmul.f32 %v593, 2.0
        %v1618 = vmul.f32 %v594, 2.0
        %v1619 = vmul.f32 %v595, 2.0
        %v1620 = vmul.f32 %v596, 2.0
        %v1621 = vmul.f32 %v597, 2.0
        %v1622 = vmul.f32 %v598, 2.0
        %v1623 = vmul.f32 %v599, 2.0
        %v1624 = vmul.f32 %v600, 2.0
        %v1625 = vmul.f32 %v601, 2.0
        %v1626 = vmul.f32 %v602, 2.0
        %v1627 = vmul.f32 %v603, 2.0
        %v1628 = vmul.f32 %v604, 2.0
        %v1629 = vmul.f32 %v605, 2.0
        %v1630 = vmul.f32 %v606, 2.0
        %v1631 = vmul.f32 %v607, 2.0
        %v1632 = vmul.f32 %v608, 2.0
        %v1633 = vmul.f32 %v609, 2.0
        %v1634 = vmul.f32 %v610, 2.0
        %v1635 = vmul.f32 %v611, 2.0
        %v1636 = vmul.f32 %v612, 2.0
        %v1637 = vmul.f32 %v613, 2.0
        %v1638 = vmul.f32 %v614, 2.0
        %v1639 = vmul.f32 %v615, 2.0
        %v1640 = vmul.f32 %v616, 2.0
        %v1641 = vmul.f32 %v617, 2.0
        %v1642 = vmul.f32 %v618, 2.0
        %v1643 = vmul.f32 %v619, 2.0
        %v1644 = vmul.f32 %v620, 2.0
        %v1645 = vmul.f32 %v621, 2.0
        %v1646 = vmul.f32 %v622, 2.0
        %v1647 = vmul.f32 %v623, 2.0
        %v1648 = vmul.f32 %v624, 2.0
        %v1649 = vmul.f32 %v625, 2.0
        %v1650 = vmul.f32 %v626, 2.0
        %v1651 = vmul.f32 %v627, 2.0
        %v1652 = vmul.f32 %v628, 2.0
        %v1653 = vmul.f32 %v629, 2.0
        %v1654 = vmul.f32 %v630, 2.0
        %v1655 = vmul.f32 %v631, 2.0
        %v1656 = vmul.f32 %v632, 2.0
        %v1657 = vmul.f32 %v633, 2.0
        %v1658 = vmul.f32 %v634, 2.0
        %v1659 = vmul.f32 %v635, 2.0
        %v1660 = vmul.f32 %v636, 2.0
        %v1661 = vmul.f32 %v637, 2.0
        %v1662 = vmul.f32 %v638, 2.0
        %v1663 = vmul.f32 %v639, 2.0
        %v1664 = vmul.f32 %v640, 2.0
        %v1665 = vmul.f32 %v641, 2.0
        %v1666 = vmul.f32 %v642, 2.0
        %v1667 = vmul.f32 %v643, 2.0
        %v1668 = vmul.f32 %v644, 2.0
        %v1669 = vmul.f32 %v645, 2.0
        %v1670 = vmul.f32 %v646, 2.0
        %v1671 = vmul.f32 %v647, 2.0
        %v1672 = vmul.f32 %v648, 2.0
        %v1673 = vmul.f32 %v649, 2.0
        %v1674 = vmul.f32 %v650, 2.0
        %v1675 = vmul.f32 %v651, 2.0
        %v1676 = vmul.f32 %v652, 2.0
        %v1677 = vmul.f32 %v653, 2.0
        %v1678 = vmul.f32 %v654, 2.0
        %v1679 = vmul.f32 %v655, 2.0
        %v1680 = vmul.f32 %v656, 2.0
        %v1681 = vmul.f32 %v657, 2.0
        %v1682 = vmul.f32 %v658, 2.0
        %v1683 = vmul.f32 %v659, 2.0
        %v1684 = vmul.f32 %v660, 2.0
        %v1685 = vmul.f32 %v661, 2.0
        %v1686 = vmul.f32 %v662, 2.0
        %v1687 = vmul.f32 %v663, 2.0
        %v1688 = vmul.f32 %v664, 2.0
        %v1689 = vmul.f32 %v665, 2.0
        %v1690 = vmul.f32 %v666, 2.0
        %v1691 = vmul.f32 %v667, 2.0
        %v1692 = vmul.f32 %v668, 2.0
        %v1693 = vmul.f32 %v669, 2.0
        %v1694 = vmul.f32 %v670, 2.0
        %v1695 = vmul.f32 %v671, 2.0
        %v1696 = vmul.f32 %v672, 2.0
        %v1697 = vmul.f32 %v673, 2.0
        %v1698 = vmul.f32 %v674, 2.0
        %v1699 = vmul.f32 %v675, 2.0
        %v1700 = vmul.f32 %v676, 2.0
        %v1701 = vmul.f32 %v677, 2.0
        %v1702 = vmul.f32 %v678, 2.0
        %v1703 = vmul.f32 %v679, 2.0
        %v1704 = vmul.f32 %v680, 2.0
        %v1705 = vmul.f32 %v681, 2.0
        %v1706 = vmul.f32 %v682, 2.0
        %v1707 = vmul.f32 %v683, 2.0
        %v1708 = vmul.f32 %v684, 2.0
        %v1709 = vmul.f32 %v685, 2.0
        %v1710 = vmul.f32 %v686, 2.0
        %v1711 = vmul.f32 %v687, 2.0
        %v1712 = vmul.f32 %v688, 2.0
        %v1713 = vmul.f32 %v689, 2.0
        %v1714 = vmul.f32 %v690, 2.0
        %v1715 = vmul.f32 %v691, 2.0
        %v1716 = vmul.f32 %v692, 2.0
        %v1717 = vmul.f32 %v693, 2.0
        %v1718 = vmul.f32 %v694, 2.0
        %v1719 = vmul.f32 %v695, 2.0
        %v1720 = vmul.f32 %v696, 2.0
        %v1721 = vmul.f32 %v697, 2.0
        %v1722 = vmul.f32 %v698, 2.0
        %v1723 = vmul.f32 %v699, 2.0
        %v1724 = vmul.f32 %v700, 2.0
        %v1725 = vmul.f32 %v701, 2.0
        %v1726 = vmul.f32 %v702, 2.0
        %v1727 = vmul.f32 %v703, 2.0
        %v1728 = vmul.f32 %v704, 2.0
        %v1729 = vmul.f32 %v705, 2.0
        %v1730 = vmul.f32 %v706, 2.0
        %v1731 = vmul.f32 %v707, 2.0
        %v1732 = vmul.f32 %v708, 2.0
        %v1733 = vmul.f32 %v709, 2.0
        %v1734 = vmul.f32 %v710, 2.0
        %v1735 = vmul.f32 %v711, 2.0
        %v1736 = vmul.f32 %v712, 2.0
        %v1737 = vmul.f32 %v713, 2.0
        %v1738 = vmul.f32 %v714, 2.0
        %v1739 = vmul.f32 %v715, 2.0
        %v1740 = vmul.f32 %v716, 2.0
        %v1741 = vmul.f32 %v717, 2.0
        %v1742 = vmul.f32 %v718, 2.0
        %v1743 = vmul.f32 %v1231, %v719
        %v1744 = vmul.f32 %v1232, %v720
        %v1745 = vmul.f32 %v1233, %v721
        %v1746 = vmul.f32 %v1234, %v722
        %v1747 = vmul.f32 %v1235, %v723
        %v1748 = vmul.f32 %v1236, %v724
        %v1749 = vmul.f32 %v1237, %v725
        %v1750 = vmul.f32 %v1238, %v726
        %v1751 = vmul.f32 %v1239, %v727
        %v1752 = vmul.f32 %v1240, %v728
        %v1753 = vmul.f32 %v1241, %v729
        %v1754 = vmul.f32 %v1242, %v730
        %v1755 = vmul.f32 %v1243, %v731
        %v1756 = vmul.f32 %v1244, %v732
        %v1757 = vmul.f32 %v1245, %v733
        %v1758 = vmul.f32 %v1246, %v734
        %v1759 = vmul.f32 %v1247, %v735
        %v1760 = vmul.f32 %v1248, %v736
        %v1761 = vmul.f32 %v1249, %v737
        %v1762 = vmul.f32 %v1250, %v738
        %v1763 = vmul.f32 %v1251, %v739
        %v1764 = vmul.f32 %v1252, %v740
        %v1765 = vmul.f32 %v1253, %v741
        %v1766 = vmul.f32 %v1254, %v742
        %v1767 = vmul.f32 %v1255, %v743
        %v1768 = vmul.f32 %v1256, %v744
        %v1769 = vmul.f32 %v1257, %v745
        %v1770 = vmul.f32 %v1258, %v746
        %v1771 = vmul.f32 %v1259, %v747
        %v1772 = vmul.f32 %v1260, %v748
        %v1773 = vmul.f32 %v1261, %v749
        %v1774 = vmul.f32 %v1262, %v750
        %v1775 = vmul.f32 %v1263, %v751
        %v1776 = vmul.f32 %v1264, %v752
        %v1777 = vmul.f32 %v1265, %v753
        %v1778 = vmul.f32 %v1266, %v754
        %v1779 = vmul.f32 %v1267, %v755
        %v1780 = vmul.f32 %v1268, %v756
        %v1781 = vmul.f32 %v1269, %v757
        %v1782 = vmul.f32 %v1270, %v758
        %v1783 = vmul.f32 %v1271, %v759
        %v1784 = vmul.f32 %v1272, %v760
        %v1785 = vmul.f32 %v1273, %v761
        %v1786 = vmul.f32 %v1274, %v762
        %v1787 = vmul.f32 %v1275, %v763
        %v1788 = vmul.f32 %v1276, %v764
        %v1789 = vmul.f32 %v1277, %v765
        %v1790 = vmul.f32 %v1278, %v766
        %v1791 = vmul.f32 %v1279, %v767
        %v1792 = vmul.f32 %v1280, %v768
        %v1793 = vmul.f32 %v1281, %v769
        %v1794 = vmul.f32 %v1282, %v770
        %v1795 = vmul.f32 %v1283, %v771
        %v1796 = vmul.f32 %v1284, %v772
        %v1797 = vmul.f32 %v1285, %v773
        %v1798 = vmul.f32 %v1286, %v774
        %v1799 = vmul.f32 %v1287, %v775
        %v1800 = vmul.f32 %v1288, %v776
        %v1801 = vmul.f32 %v1289, %v777
        %v1802 = vmul.f32 %v1290, %v778
        %v1803 = vmul.f32 %v1291, %v779
        %v1804 = vmul.f32 %v1292, %v780
        %v1805 = vmul.f32 %v1293, %v781
        %v1806 = vmul.f32 %v1294, %v782
        %v1807 = vmul.f32 %v1295, %v783
        %v1808 = vmul.f32 %v1296, %v784
        %v1809 = vmul.f32 %v1297, %v785
        %v1810 = vmul.f32 %v1298, %v786
        %v1811 = vmul.f32 %v1299, %v787
        %v1812 = vmul.f32 %v1300, %v788
        %v1813 = vmul.f32 %v1301, %v789
        %v1814 = vmul.f32 %v1302, %v790
        %v1815 = vmul.f32 %v1303, %v791
        %v1816 = vmul.f32 %v1304, %v792
        %v1817 = vmul.f32 %v1305, %v793
        %v1818 = vmul.f32 %v1306, %v794
        %v1819 = vmul.f32 %v1307, %v795
        %v1820 = vmul.f32 %v1308, %v796
        %v1821 = vmul.f32 %v1309, %v797
        %v1822 = vmul.f32 %v1310, %v798
        %v1823 = vmul.f32 %v1311, %v799
        %v1824 = vmul.f32 %v1312, %v800
        %v1825 = vmul.f32 %v1313, %v801
        %v1826 = vmul.f32 %v1314, %v802
        %v1827 = vmul.f32 %v1315, %v803
        %v1828 = vmul.f32 %v1316, %v804
        %v1829 = vmul.f32 %v1317, %v805
        %v1830 = vmul.f32 %v1318, %v806
        %v1831 = vmul.f32 %v1319, %v807
        %v1832 = vmul.f32 %v1320, %v808
        %v1833 = vmul.f32 %v1321, %v809
        %v1834 = vmul.f32 %v1322, %v810
        %v1835 = vmul.f32 %v1323, %v811
        %v1836 = vmul.f32 %v1324, %v812
        %v1837 = vmul.f32 %v1325, %v813
        %v1838 = vmul.f32 %v1326, %v814
        %v1839 = vmul.f32 %v1327, %v815
        %v1840 = vmul.f32 %v1328, %v816
        %v1841 = vmul.f32 %v1329, %v817
        %v1842 = vmul.f32 %v1330, %v818
        %v1843 = vmul.f32 %v1331, %v819
        %v1844 = vmul.f32 %v1332, %v820
        %v1845 = vmul.f32 %v1333, %v821
        %v1846 = vmul.f32 %v1334, %v822
        %v1847 = vmul.f32 %v1335, %v823
        %v1848 = vmul.f32 %v1336, %v824
        %v1849 = vmul.f32 %v1337, %v825
        %v1850 = vmul.f32 %v1338, %v826
        %v1851 = vmul.f32 %v1339, %v827
        %v1852 = vmul.f32 %v1340, %v828
        %v1853 = vmul.f32 %v1341, %v829
        %v1854 = vmul.f32 %v1342, %v830
        %v1855 = vmul.f32 %v1343, %v831
        %v1856 = vmul.f32 %v1344, %v832
        %v1857 = vmul.f32 %v1345, %v833
        %v1858 = vmul.f32 %v1346, %v834
        %v1859 = vmul.f32 %v1347, %v835
        %v1860 = vmul.f32 %v1348, %v836
        %v1861 = vmul.f32 %v1349, %v837
        %v1862 = vmul.f32 %v1350, %v838
        %v1863 = vmul.f32 %v1351, %v839
        %v1864 = vmul.f32 %v1352, %v840
        %v1865 = vmul.f32 %v1353, %v841
        %v1866 = vmul.f32 %v1354, %v842
        %v1867 = vmul.f32 %v1355, %v843
        %v1868 = vmul.f32 %v1356, %v844
        %v1869 = vmul.f32 %v1357, %v845
        %v1870 = vmul.f32 %v1358, %v846
        %v1871 = vmul.f32 %v1359, %v847
        %v1872 = vmul.f32 %v1360, %v848
        %v1873 = vmul.f32 %v1361, %v849
        %v1874 = vmul.f32 %v1362, %v850
        %v1875 = vmul.f32 %v1363, %v851
        %v1876 = vmul.f32 %v1364, %v852
        %v1877 = vmul.f32 %v1365, %v853
        %v1878 = vmul.f32 %v1366, %v854
        %v1879 = vmul.f32 %v1367, %v855
        %v1880 = vmul.f32 %v1368, %v856
        %v1881 = vmul.f32 %v1369, %v857
        %v1882 = vmul.f32 %v1370, %v858
        %v1883 = vmul.f32 %v1371, %v859
        %v1884 = vmul.f32 %v1372, %v860
        %v1885 = vmul.f32 %v1373, %v861
        %v1886 = vmul.f32 %v1374, %v862
        %v1887 = vmul.f32 %v1375, %v863
        %v1888 = vmul.f32 %v1376, %v864
        %v1889 = vmul.f32 %v1377, %v865
        %v1890 = vmul.f32 %v1378, %v866
        %v1891 = vmul.f32 %v1379, %v867
        %v1892 = vmul.f32 %v1380, %v868
        %v1893 = vmul.f32 %v1381, %v869
        %v1894 = vmul.f32 %v1382, %v870
        %v1895 = vmul.f32 %v1383, %v871
        %v1896 = vmul.f32 %v1384, %v872
        %v1897 = vmul.f32 %v1385, %v873
        %v1898 = vmul.f32 %v1386, %v874
        %v1899 = vmul.f32 %v1387, %v875
        %v1900 = vmul.f32 %v1388, %v876
        %v1901 = vmul.f32 %v1389, %v877
        %v1902 = vmul.f32 %v1390, %v878
        %v1903 = vmul.f32 %v1391, %v879
        %v1904 = vmul.f32 %v1392, %v880
        %v1905 = vmul.f32 %v1393, %v881
        %v1906 = vmul.f32 %v1394, %v882
        %v1907 = vmul.f32 %v1395, %v883
        %v1908 = vmul.f32 %v1396, %v884
        %v1909 = vmul.f32 %v1397, %v885
        %v1910 = vmul.f32 %v1398, %v886
        %v1911 = vmul.f32 %v1399, %v887
        %v1912 = vmul.f32 %v1400, %v888
        %v1913 = vmul.f32 %v1401, %v889
        %v1914 = vmul.f32 %v1402, %v890
        %v1915 = vmul.f32 %v1403, %v891
        %v1916 = vmul.f32 %v1404, %v892
        %v1917 = vmul.f32 %v1405, %v893
        %v1918 = vmul.f32 %v1406, %v894
        %v1919 = vmul.f32 %v1407, %v895
        %v1920 = vmul.f32 %v1408, %v896
        %v1921 = vmul.f32 %v1409, %v897
        %v1922 = vmul.f32 %v1410, %v898
        %v1923 = vmul.f32 %v1411, %v899
        %v1924 = vmul.f32 %v1412, %v900
        %v1925 = vmul.f32 %v1413, %v901
        %v1926 = vmul.f32 %v1414, %v902
        %v1927 = vmul.f32 %v1415, %v903
        %v1928 = vmul.f32 %v1416, %v904
        %v1929 = vmul.f32 %v1417, %v905
        %v1930 = vmul.f32 %v1418, %v906
        %v1931 = vmul.f32 %v1419, %v907
        %v1932 = vmul.f32 %v1420, %v908
        %v1933 = vmul.f32 %v1421, %v909
        %v1934 = vmul.f32 %v1422, %v910
        %v1935 = vmul.f32 %v1423, %v911
        %v1936 = vmul.f32 %v1424, %v912
        %v1937 = vmul.f32 %v1425, %v913
        %v1938 = vmul.f32 %v1426, %v914
        %v1939 = vmul.f32 %v1427, %v915
        %v1940 = vmul.f32 %v1428, %v916
        %v1941 = vmul.f32 %v1429, %v917
        %v1942 = vmul.f32 %v1430, %v918
        %v1943 = vmul.f32 %v1431, %v919
        %v1944 = vmul.f32 %v1432, %v920
        %v1945 = vmul.f32 %v1433, %v921
        %v1946 = vmul.f32 %v1434, %v922
        %v1947 = vmul.f32 %v1435, %v923
        %v1948 = vmul.f32 %v1436, %v924
        %v1949 = vmul.f32 %v1437, %v925
        %v1950 = vmul.f32 %v1438, %v926
        %v1951 = vmul.f32 %v1439, %v927
        %v1952 = vmul.f32 %v1440, %v928
        %v1953 = vmul.f32 %v1441, %v929
        %v1954 = vmul.f32 %v1442, %v930
        %v1955 = vmul.f32 %v1443, %v931
        %v1956 = vmul.f32 %v1444, %v932
        %v1957 = vmul.f32 %v1445, %v933
        %v1958 = vmul.f32 %v1446, %v934
        %v1959 = vmul.f32 %v1447, %v935
        %v1960 = vmul.f32 %v1448, %v936
        %v1961 = vmul.f32 %v1449, %v937
        %v1962 = vmul.f32 %v1450, %v938
        %v1963 = vmul.f32 %v1451, %v939
        %v1964 = vmul.f32 %v1452, %v940
        %v1965 = vmul.f32 %v1453, %v941
        %v1966 = vmul.f32 %v1454, %v942
        %v1967 = vmul.f32 %v1455, %v943
        %v1968 = vmul.f32 %v1456, %v944
        %v1969 = vmul.f32 %v1457, %v945
        %v1970 = vmul.f32 %v1458, %v946
        %v1971 = vmul.f32 %v1459, %v947
        %v1972 = vmul.f32 %v1460, %v948
        %v1973 = vmul.f32 %v1461, %v949
        %v1974 = vmul.f32 %v1462, %v950
        %v1975 = vmul.f32 %v1463, %v951
        %v1976 = vmul.f32 %v1464, %v952
        %v1977 = vmul.f32 %v1465, %v953
        %v1978 = vmul.f32 %v1466, %v954
        %v1979 = vmul.f32 %v1467, %v955
        %v1980 = vmul.f32 %v1468, %v956
        %v1981 = vmul.f32 %v1469, %v957
        %v1982 = vmul.f32 %v1470, %v958
        %v1983 = vmul.f32 %v1471, %v959
        %v1984 = vmul.f32 %v1472, %v960
        %v1985 = vmul.f32 %v1473, %v961
        %v1986 = vmul.f32 %v1474, %v962
        %v1987 = vmul.f32 %v1475, %v963
        %v1988 = vmul.f32 %v1476, %v964
        %v1989 = vmul.f32 %v1477, %v965
        %v1990 = vmul.f32 %v1478, %v966
        %v1991 = vmul.f32 %v1479, %v967
        %v1992 = vmul.f32 %v1480, %v968
        %v1993 = vmul.f32 %v1481, %v969
        %v1994 = vmul.f32 %v1482, %v970
        %v1995 = vmul.f32 %v1483, %v971
        %v1996 = vmul.f32 %v1484, %v972
        %v1997 = vmul.f32 %v1485, %v973
        %v1998 = vmul.f32 %v1486, %v974
        %v1999 = vmul.f32 %v1487, %v975
        %v2000 = vmul.f32 %v1488, %v976
        %v2001 = vmul.f32 %v1489, %v977
        %v2002 = vmul.f32 %v1490, %v978
        %v2003 = vmul.f32 %v1491, %v979
        %v2004 = vmul.f32 %v1492, %v980
        %v2005 = vmul.f32 %v1493, %v981
        %v2006 = vmul.f32 %v1494, %v982
        %v2007 = vmul.f32 %v1495, %v983
        %v2008 = vmul.f32 %v1496, %v984
        %v2009 = vmul.f32 %v1497, %v985
        %v2010 = vmul.f32 %v1498, %v986
        %v2011 = vmul.f32 %v1499, %v987
        %v2012 = vmul.f32 %v1500, %v988
        %v2013 = vmul.f32 %v1501, %v989
        %v2014 = vmul.f32 %v1502, %v990
        %v2015 = vmul.f32 %v1503, %v991
        %v2016 = vmul.f32 %v1504, %v992
        %v2017 = vmul.f32 %v1505, %v993
        %v2018 = vmul.f32 %v1506, %v994
        %v2019 = vmul.f32 %v1507, %v995
        %v2020 = vmul.f32 %v1508, %v996
        %v2021 = vmul.f32 %v1509, %v997
        %v2022 = vmul.f32 %v1510, %v998
        %v2023 = vmul.f32 %v1511, %v999
        %v2024 = vmul.f32 %v1512, %v1000
        %v2025 = vmul.f32 %v1513, %v1001
        %v2026 = vmul.f32 %v1514, %v1002
        %v2027 = vmul.f32 %v1515, %v1003
        %v2028 = vmul.f32 %v1516, %v1004
        %v2029 = vmul.f32 %v1517, %v1005
        %v2030 = vmul.f32 %v1518, %v1006
        %v2031 = vmul.f32 %v1519, %v1007
        %v2032 = vmul.f32 %v1520, %v1008
        %v2033 = vmul.f32 %v1521, %v1009
        %v2034 = vmul.f32 %v1522, %v1010
        %v2035 = vmul.f32 %v1523, %v1011
        %v2036 = vmul.f32 %v1524, %v1012
        %v2037 = vmul.f32 %v1525, %v1013
        %v2038 = vmul.f32 %v1526, %v1014
        %v2039 = vmul.f32 %v1527, %v1015
        %v2040 = vmul.f32 %v1528, %v1016
        %v2041 = vmul.f32 %v1529, %v1017
        %v2042 = vmul.f32 %v1530, %v1018
        %v2043 = vmul.f32 %v1531, %v1019
        %v2044 = vmul.f32 %v1532, %v1020
        %v2045 = vmul.f32 %v1533, %v1021
        %v2046 = vmul.f32 %v1534, %v1022
        %v2047 = vmul.f32 %v1535, %v1023
        %v2048 = vmul.f32 %v1536, %v1024
        %v2049 = vmul.f32 %v1537, %v1025
        %v2050 = vmul.f32 %v1538, %v1026
        %v2051 = vmul.f32 %v1539, %v1027
        %v2052 = vmul.f32 %v1540, %v1028
        %v2053 = vmul.f32 %v1541, %v1029
        %v2054 = vmul.f32 %v1542, %v1030
        %v2055 = vmul.f32 %v1543, %v1031
        %v2056 = vmul.f32 %v1544, %v1032
        %v2057 = vmul.f32 %v1545, %v1033
        %v2058 = vmul.f32 %v1546, %v1034
        %v2059 = vmul.f32 %v1547, %v1035
        %v2060 = vmul.f32 %v1548, %v1036
        %v2061 = vmul.f32 %v1549, %v1037
        %v2062 = vmul.f32 %v1550, %v1038
        %v2063 = vmul.f32 %v1551, %v1039
        %v2064 = vmul.f32 %v1552, %v1040
        %v2065 = vmul.f32 %v1553, %v1041
        %v2066 = vmul.f32 %v1554, %v1042
        %v2067 = vmul.f32 %v1555, %v1043
        %v2068 = vmul.f32 %v1556, %v1044
        %v2069 = vmul.f32 %v1557, %v1045
        %v2070 = vmul.f32 %v1558, %v1046
        %v2071 = vmul.f32 %v1559, %v1047
        %v2072 = vmul.f32 %v1560, %v1048
        %v2073 = vmul.f32 %v1561, %v1049
        %v2074 = vmul.f32 %v1562, %v1050
        %v2075 = vmul.f32 %v1563, %v1051
        %v2076 = vmul.f32 %v1564, %v1052
        %v2077 = vmul.f32 %v1565, %v1053
        %v2078 = vmul.f32 %v1566, %v1054
        %v2079 = vmul.f32 %v1567, %v1055
        %v2080 = vmul.f32 %v1568, %v1056
        %v2081 = vmul.f32 %v1569, %v1057
        %v2082 = vmul.f32 %v1570, %v1058
        %v2083 = vmul.f32 %v1571, %v1059
        %v2084 = vmul.f32 %v1572, %v1060
        %v2085 = vmul.f32 %v1573, %v1061
        %v2086 = vmul.f32 %v1574, %v1062
        %v2087 = vmul.f32 %v1575, %v1063
        %v2088 = vmul.f32 %v1576, %v1064
        %v2089 = vmul.f32 %v1577, %v1065
        %v2090 = vmul.f32 %v1578, %v1066
        %v2091 = vmul.f32 %v1579, %v1067
        %v2092 = vmul.f32 %v1580, %v1068
        %v2093 = vmul.f32 %v1581, %v1069
        %v2094 = vmul.f32 %v1582, %v1070
        %v2095 = vmul.f32 %v1583, %v1071
        %v2096 = vmul.f32 %v1584, %v1072
        %v2097 = vmul.f32 %v1585, %v1073
        %v2098 = vmul.f32 %v1586, %v1074
        %v2099 = vmul.f32 %v1587, %v1075
        %v2100 = vmul.f32 %v1588, %v1076
        %v2101 = vmul.f32 %v1589, %v1077
        %v2102 = vmul.f32 %v1590, %v1078
        %v2103 = vmul.f32 %v1591, %v1079
        %v2104 = vmul.f32 %v1592, %v1080
        %v2105 = vmul.f32 %v1593, %v1081
        %v2106 = vmul.f32 %v1594, %v1082
        %v2107 = vmul.f32 %v1595, %v1083
        %v2108 = vmul.f32 %v1596, %v1084
        %v2109 = vmul.f32 %v1597, %v1085
        %v2110 = vmul.f32 %v1598, %v1086
        %v2111 = vmul.f32 %v1599, %v1087
        %v2112 = vmul.f32 %v1600, %v1088
        %v2113 = vmul.f32 %v1601, %v1089
        %v2114 = vmul.f32 %v1602, %v1090
        %v2115 = vmul.f32 %v1603, %v1091
        %v2116 = vmul.f32 %v1604, %v1092
        %v2117 = vmul.f32 %v1605, %v1093
        %v2118 = vmul.f32 %v1606, %v1094
        %v2119 = vmul.f32 %v1607, %v1095
        %v2120 = vmul.f32 %v1608, %v1096
        %v2121 = vmul.f32 %v1609, %v1097
        %v2122 = vmul.f32 %v1610, %v1098
        %v2123 = vmul.f32 %v1611, %v1099
        %v2124 = vmul.f32 %v1612, %v1100
        %v2125 = vmul.f32 %v1613, %v1101
        %v2126 = vmul.f32 %v1614, %v1102
        %v2127 = vmul.f32 %v1615, %v1103
        %v2128 = vmul.f32 %v1616, %v1104
        %v2129 = vmul.f32 %v1617, %v1105
        %v2130 = vmul.f32 %v1618, %v1106
        %v2131 = vmul.f32 %v1619, %v1107
        %v2132 = vmul.f32 %v1620, %v1108
        %v2133 = vmul.f32 %v1621, %v1109
        %v2134 = vmul.f32 %v1622, %v1110
        %v2135 = vmul.f32 %v1623, %v1111
        %v2136 = vmul.f32 %v1624, %v1112
        %v2137 = vmul.f32 %v1625, %v1113
        %v2138 = vmul.f32 %v1626, %v1114
        %v2139 = vmul.f32 %v1627, %v1115
        %v2140 = vmul.f32 %v1628, %v1116
        %v2141 = vmul.f32 %v1629, %v1117
        %v2142 = vmul.f32 %v1630, %v1118
        %v2143 = vmul.f32 %v1631, %v1119
        %v2144 = vmul.f32 %v1632, %v1120
        %v2145 = vmul.f32 %v1633, %v1121
        %v2146 = vmul.f32 %v1634, %v1122
        %v2147 = vmul.f32 %v1635, %v1123
        %v2148 = vmul.f32 %v1636, %v1124
        %v2149 = vmul.f32 %v1637, %v1125
        %v2150 = vmul.f32 %v1638, %v1126
        %v2151 = vmul.f32 %v1639, %v1127
        %v2152 = vmul.f32 %v1640, %v1128
        %v2153 = vmul.f32 %v1641, %v1129
        %v2154 = vmul.f32 %v1642, %v1130
        %v2155 = vmul.f32 %v1643, %v1131
        %v2156 = vmul.f32 %v1644, %v1132
        %v2157 = vmul.f32 %v1645, %v1133
        %v2158 = vmul.f32 %v1646, %v1134
        %v2159 = vmul.f32 %v1647, %v1135
        %v2160 = vmul.f32 %v1648, %v1136
        %v2161 = vmul.f32 %v1649, %v1137
        %v2162 = vmul.f32 %v1650, %v1138
        %v2163 = vmul.f32 %v1651, %v1139
        %v2164 = vmul.f32 %v1652, %v1140
        %v2165 = vmul.f32 %v1653, %v1141
        %v2166 = vmul.f32 %v1654, %v1142
        %v2167 = vmul.f32 %v1655, %v1143
        %v2168 = vmul.f32 %v1656, %v1144
        %v2169 = vmul.f32 %v1657, %v1145
        %v2170 = vmul.f32 %v1658, %v1146
        %v2171 = vmul.f32 %v1659, %v1147
        %v2172 = vmul.f32 %v1660, %v1148
        %v2173 = vmul.f32 %v1661, %v1149
        %v2174 = vmul.f32 %v1662, %v1150
        %v2175 = vmul.f32 %v1663, %v1151
        %v2176 = vmul.f32 %v1664, %v1152
        %v2177 = vmul.f32 %v1665, %v1153
        %v2178 = vmul.f32 %v1666, %v1154
        %v2179 = vmul.f32 %v1667, %v1155
        %v2180 = vmul.f32 %v1668, %v1156
        %v2181 = vmul.f32 %v1669, %v1157
        %v2182 = vmul.f32 %v1670, %v1158
        %v2183 = vmul.f32 %v1671, %v1159
        %v2184 = vmul.f32 %v1672, %v1160
        %v2185 = vmul.f32 %v1673, %v1161
        %v2186 = vmul.f32 %v1674, %v1162
        %v2187 = vmul.f32 %v1675, %v1163
        %v2188 = vmul.f32 %v1676, %v1164
        %v2189 = vmul.f32 %v1677, %v1165
        %v2190 = vmul.f32 %v1678, %v1166
        %v2191 = vmul.f32 %v1679, %v1167
        %v2192 = vmul.f32 %v1680, %v1168
        %v2193 = vmul.f32 %v1681, %v1169
        %v2194 = vmul.f32 %v1682, %v1170
        %v2195 = vmul.f32 %v1683, %v1171
        %v2196 = vmul.f32 %v1684, %v1172
        %v2197 = vmul.f32 %v1685, %v1173
        %v2198 = vmul.f32 %v1686, %v1174
        %v2199 = vmul.f32 %v1687, %v1175
        %v2200 = vmul.f32 %v1688, %v1176
        %v2201 = vmul.f32 %v1689, %v1177
        %v2202 = vmul.f32 %v1690, %v1178
        %v2203 = vmul.f32 %v1691, %v1179
        %v2204 = vmul.f32 %v1692, %v1180
        %v2205 = vmul.f32 %v1693, %v1181
        %v2206 = vmul.f32 %v1694, %v1182
        %v2207 = vmul.f32 %v1695, %v1183
        %v2208 = vmul.f32 %v1696, %v1184
        %v2209 = vmul.f32 %v1697, %v1185
        %v2210 = vmul.f32 %v1698, %v1186
        %v2211 = vmul.f32 %v1699, %v1187
        %v2212 = vmul.f32 %v1700, %v1188
        %v2213 = vmul.f32 %v1701, %v1189
        %v2214 = vmul.f32 %v1702, %v1190
        %v2215 = vmul.f32 %v1703, %v1191
        %v2216 = vmul.f32 %v1704, %v1192
        %v2217 = vmul.f32 %v1705, %v1193
        %v2218 = vmul.f32 %v1706, %v1194
        %v2219 = vmul.f32 %v1707, %v1195
        %v2220 = vmul.f32 %v1708, %v1196
        %v2221 = vmul.f32 %v1709, %v1197
        %v2222 = vmul.f32 %v1710, %v1198
        %v2223 = vmul.f32 %v1711, %v1199
        %v2224 = vmul.f32 %v1712, %v1200
        %v2225 = vmul.f32 %v1713, %v1201
        %v2226 = vmul.f32 %v1714, %v1202
        %v2227 = vmul.f32 %v1715, %v1203
        %v2228 = vmul.f32 %v1716, %v1204
        %v2229 = vmul.f32 %v1717, %v1205
        %v2230 = vmul.f32 %v1718, %v1206
        %v2231 = vmul.f32 %v1719, %v1207
        %v2232 = vmul.f32 %v1720, %v1208
        %v2233 = vmul.f32 %v1721, %v1209
        %v2234 = vmul.f32 %v1722, %v1210
        %v2235 = vmul.f32 %v1723, %v1211
        %v2236 = vmul.f32 %v1724, %v1212
        %v2237 = vmul.f32 %v1725, %v1213
        %v2238 = vmul.f32 %v1726, %v1214
        %v2239 = vmul.f32 %v1727, %v1215
        %v2240 = vmul.f32 %v1728, %v1216
        %v2241 = vmul.f32 %v1729, %v1217
        %v2242 = vmul.f32 %v1730, %v1218
        %v2243 = vmul.f32 %v1731, %v1219
        %v2244 = vmul.f32 %v1732, %v1220
        %v2245 = vmul.f32 %v1733, %v1221
        %v2246 = vmul.f32 %v1734, %v1222
        %v2247 = vmul.f32 %v1735, %v1223
        %v2248 = vmul.f32 %v1736, %v1224
        %v2249 = vmul.f32 %v1737, %v1225
        %v2250 = vmul.f32 %v1738, %v1226
        %v2251 = vmul.f32 %v1739, %v1227
        %v2252 = vmul.f32 %v1740, %v1228
        %v2253 = vmul.f32 %v1741, %v1229
        %v2254 = vmul.f32 %v1742, %v1230
        %v2255 = vadd.f32 %v207, %v719
        %v2256 = vadd.f32 %v208, %v720
        %v2257 = vadd.f32 %v209, %v721
        %v2258 = vadd.f32 %v210, %v722
        %v2259 = vadd.f32 %v211, %v723
        %v2260 = vadd.f32 %v212, %v724
        %v2261 = vadd.f32 %v213, %v725
        %v2262 = vadd.f32 %v214, %v726
        %v2263 = vadd.f32 %v215, %v727
        %v2264 = vadd.f32 %v216, %v728
        %v2265 = vadd.f32 %v217, %v729
        %v2266 = vadd.f32 %v218, %v730
        %v2267 = vadd.f32 %v219, %v731
        %v2268 = vadd.f32 %v220, %v732
        %v2269 = vadd.f32 %v221, %v733
        %v2270 = vadd.f32 %v222, %v734
        %v2271 = vadd.f32 %v223, %v735
        %v2272 = vadd.f32 %v224, %v736
        %v2273 = vadd.f32 %v225, %v737
        %v2274 = vadd.f32 %v226, %v738
        %v2275 = vadd.f32 %v227, %v739
        %v2276 = vadd.f32 %v228, %v740
        %v2277 = vadd.f32 %v229, %v741
        %v2278 = vadd.f32 %v230, %v742
        %v2279 = vadd.f32 %v231, %v743
        %v2280 = vadd.f32 %v232, %v744
        %v2281 = vadd.f32 %v233, %v745
        %v2282 = vadd.f32 %v234, %v746
        %v2283 = vadd.f32 %v235, %v747
        %v2284 = vadd.f32 %v236, %v748
        %v2285 = vadd.f32 %v237, %v749
        %v2286 = vadd.f32 %v238, %v750
        %v2287 = vadd.f32 %v239, %v751
        %v2288 = vadd.f32 %v240, %v752
        %v2289 = vadd.f32 %v241, %v753
        %v2290 = vadd.f32 %v242, %v754
        %v2291 = vadd.f32 %v243, %v755
        %v2292 = vadd.f32 %v244, %v756
        %v2293 = vadd.f32 %v245, %v757
        %v2294 = vadd.f32 %v246, %v758
        %v2295 = vadd.f32 %v247, %v759
        %v2296 = vadd.f32 %v248, %v760
        %v2297 = vadd.f32 %v249, %v761
        %v2298 = vadd.f32 %v250, %v762
        %v2299 = vadd.f32 %v251, %v763
        %v2300 = vadd.f32 %v252, %v764
        %v2301 = vadd.f32 %v253, %v765
        %v2302 = vadd.f32 %v254, %v766
        %v2303 = vadd.f32 %v255, %v767
        %v2304 = vadd.f32 %v256, %v768
        %v2305 = vadd.f32 %v257, %v769
        %v2306 = vadd.f32 %v258, %v770
        %v2307 = vadd.f32 %v259, %v771
        %v2308 = vadd.f32 %v260, %v772
        %v2309 = vadd.f32 %v261, %v773
        %v2310 = vadd.f32 %v262, %v774
        %v2311 = vadd.f32 %v263, %v775
        %v2312 = vadd.f32 %v264, %v776
        %v2313 = vadd.f32 %v265, %v777
        %v2314 = vadd.f32 %v266, %v778
        %v2315 = vadd.f32 %v267, %v779
        %v2316 = vadd.f32 %v268, %v780
        %v2317 = vadd.f32 %v269, %v781
        %v2318 = vadd.f32 %v270, %v782
        %v2319 = vadd.f32 %v271, %v783
        %v2320 = vadd.f32 %v272, %v784
        %v2321 = vadd.f32 %v273, %v785
        %v2322 = vadd.f32 %v274, %v786
        %v2323 = vadd.f32 %v275, %v787
        %v2324 = vadd.f32 %v276, %v788
        %v2325 = vadd.f32 %v277, %v789
        %v2326 = vadd.f32 %v278, %v790
        %v2327 = vadd.f32 %v279, %v791
        %v2328 = vadd.f32 %v280, %v792
        %v2329 = vadd.f32 %v281, %v793
        %v2330 = vadd.f32 %v282, %v794
        %v2331 = vadd.f32 %v283, %v795
        %v2332 = vadd.f32 %v284, %v796
        %v2333 = vadd.f32 %v285, %v797
        %v2334 = vadd.f32 %v286, %v798
        %v2335 = vadd.f32 %v287, %v799
        %v2336 = vadd.f32 %v288, %v800
        %v2337 = vadd.f32 %v289, %v801
        %v2338 = vadd.f32 %v290, %v802
        %v2339 = vadd.f32 %v291, %v803
        %v2340 = vadd.f32 %v292, %v804
        %v2341 = vadd.f32 %v293, %v805
        %v2342 = vadd.f32 %v294, %v806
        %v2343 = vadd.f32 %v295, %v807
        %v2344 = vadd.f32 %v296, %v808
        %v2345 = vadd.f32 %v297, %v809
        %v2346 = vadd.f32 %v298, %v810
        %v2347 = vadd.f32 %v299, %v811
        %v2348 = vadd.f32 %v300, %v812
        %v2349 = vadd.f32 %v301, %v813
        %v2350 = vadd.f32 %v302, %v814
        %v2351 = vadd.f32 %v303, %v815
        %v2352 = vadd.f32 %v304, %v816
        %v2353 = vadd.f32 %v305, %v817
        %v2354 = vadd.f32 %v306, %v818
        %v2355 = vadd.f32 %v307, %v819
        %v2356 = vadd.f32 %v308, %v820
        %v2357 = vadd.f32 %v309, %v821
        %v2358 = vadd.f32 %v310, %v822
        %v2359 = vadd.f32 %v311, %v823
        %v2360 = vadd.f32 %v312, %v824
        %v2361 = vadd.f32 %v313, %v825
        %v2362 = vadd.f32 %v314, %v826
        %v2363 = vadd.f32 %v315, %v827
        %v2364 = vadd.f32 %v316, %v828
        %v2365 = vadd.f32 %v317, %v829
        %v2366 = vadd.f32 %v318, %v830
        %v2367 = vadd.f32 %v319, %v831
        %v2368 = vadd.f32 %v320, %v832
        %v2369 = vadd.f32 %v321, %v833
        %v2370 = vadd.f32 %v322, %v834
        %v2371 = vadd.f32 %v323, %v835
        %v2372 = vadd.f32 %v324, %v836
        %v2373 = vadd.f32 %v325, %v837
        %v2374 = vadd.f32 %v326, %v838
        %v2375 = vadd.f32 %v327, %v839
        %v2376 = vadd.f32 %v328, %v840
        %v2377 = vadd.f32 %v329, %v841
        %v2378 = vadd.f32 %v330, %v842
        %v2379 = vadd.f32 %v331, %v843
        %v2380 = vadd.f32 %v332, %v844
        %v2381 = vadd.f32 %v333, %v845
        %v2382 = vadd.f32 %v334, %v846
        %v2383 = vadd.f32 %v335, %v847
        %v2384 = vadd.f32 %v336, %v848
        %v2385 = vadd.f32 %v337, %v849
        %v2386 = vadd.f32 %v338, %v850
        %v2387 = vadd.f32 %v339, %v851
        %v2388 = vadd.f32 %v340, %v852
        %v2389 = vadd.f32 %v341, %v853
        %v2390 = vadd.f32 %v342, %v854
        %v2391 = vadd.f32 %v343, %v855
        %v2392 = vadd.f32 %v344, %v856
        %v2393 = vadd.f32 %v345, %v857
        %v2394 = vadd.f32 %v346, %v858
        %v2395 = vadd.f32 %v347, %v859
        %v2396 = vadd.f32 %v348, %v860
        %v2397 = vadd.f32 %v349, %v861
        %v2398 = vadd.f32 %v350, %v862
        %v2399 = vadd.f32 %v351, %v863
        %v2400 = vadd.f32 %v352, %v864
        %v2401 = vadd.f32 %v353, %v865
        %v2402 = vadd.f32 %v354, %v866
        %v2403 = vadd.f32 %v355, %v867
        %v2404 = vadd.f32 %v356, %v868
        %v2405 = vadd.f32 %v357, %v869
        %v2406 = vadd.f32 %v358, %v870
        %v2407 = vadd.f32 %v359, %v871
        %v2408 = vadd.f32 %v360, %v872
        %v2409 = vadd.f32 %v361, %v873
        %v2410 = vadd.f32 %v362, %v874
        %v2411 = vadd.f32 %v363, %v875
        %v2412 = vadd.f32 %v364, %v876
        %v2413 = vadd.f32 %v365, %v877
        %v2414 = vadd.f32 %v366, %v878
        %v2415 = vadd.f32 %v367, %v879
        %v2416 = vadd.f32 %v368, %v880
        %v2417 = vadd.f32 %v369, %v881
        %v2418 = vadd.f32 %v370, %v882
        %v2419 = vadd.f32 %v371, %v883
        %v2420 = vadd.f32 %v372, %v884
        %v2421 = vadd.f32 %v373, %v885
        %v2422 = vadd.f32 %v374, %v886
        %v2423 = vadd.f32 %v375, %v887
        %v2424 = vadd.f32 %v376, %v888
        %v2425 = vadd.f32 %v377, %v889
        %v2426 = vadd.f32 %v378, %v890
        %v2427 = vadd.f32 %v379, %v891
        %v2428 = vadd.f32 %v380, %v892
        %v2429 = vadd.f32 %v381, %v893
        %v2430 = vadd.f32 %v382, %v894
        %v2431 = vadd.f32 %v383, %v895
        %v2432 = vadd.f32 %v384, %v896
        %v2433 = vadd.f32 %v385, %v897
        %v2434 = vadd.f32 %v386, %v898
        %v2435 = vadd.f32 %v387, %v899
        %v2436 = vadd.f32 %v388, %v900
        %v2437 = vadd.f32 %v389, %v901
        %v2438 = vadd.f32 %v390, %v902
        %v2439 = vadd.f32 %v391, %v903
        %v2440 = vadd.f32 %v392, %v904
        %v2441 = vadd.f32 %v393, %v905
        %v2442 = vadd.f32 %v394, %v906
        %v2443 = vadd.f32 %v395, %v907
        %v2444 = vadd.f32 %v396, %v908
        %v2445 = vadd.f32 %v397, %v909
        %v2446 = vadd.f32 %v398, %v910
        %v2447 = vadd.f32 %v399, %v911
        %v2448 = vadd.f32 %v400, %v912
        %v2449 = vadd.f32 %v401, %v913
        %v2450 = vadd.f32 %v402, %v914
        %v2451 = vadd.f32 %v403, %v915
        %v2452 = vadd.f32 %v404, %v916
        %v2453 = vadd.f32 %v405, %v917
        %v2454 = vadd.f32 %v406, %v918
        %v2455 = vadd.f32 %v407, %v919
        %v2456 = vadd.f32 %v408, %v920
        %v2457 = vadd.f32 %v409, %v921
        %v2458 = vadd.f32 %v410, %v922
        %v2459 = vadd.f32 %v411, %v923
        %v2460 = vadd.f32 %v412, %v924
        %v2461 = vadd.f32 %v413, %v925
        %v2462 = vadd.f32 %v414, %v926
        %v2463 = vadd.f32 %v415, %v927
        %v2464 = vadd.f32 %v416, %v928
        %v2465 = vadd.f32 %v417, %v929
        %v2466 = vadd.f32 %v418, %v930
        %v2467 = vadd.f32 %v419, %v931
        %v2468 = vadd.f32 %v420, %v932
        %v2469 = vadd.f32 %v421, %v933
        %v2470 = vadd.f32 %v422, %v934
        %v2471 = vadd.f32 %v423, %v935
        %v2472 = vadd.f32 %v424, %v936
        %v2473 = vadd.f32 %v425, %v937
        %v2474 = vadd.f32 %v426, %v938
        %v2475 = vadd.f32 %v427, %v939
        %v2476 = vadd.f32 %v428, %v940
        %v2477 = vadd.f32 %v429, %v941
        %v2478 = vadd.f32 %v430, %v942
        %v2479 = vadd.f32 %v431, %v943
        %v2480 = vadd.f32 %v432, %v944
        %v2481 = vadd.f32 %v433, %v945
        %v2482 = vadd.f32 %v434, %v946
        %v2483 = vadd.f32 %v435, %v947
        %v2484 = vadd.f32 %v436, %v948
        %v2485 = vadd.f32 %v437, %v949
        %v2486 = vadd.f32 %v438, %v950
        %v2487 = vadd.f32 %v439, %v951
        %v2488 = vadd.f32 %v440, %v952
        %v2489 = vadd.f32 %v441, %v953
        %v2490 = vadd.f32 %v442, %v954
        %v2491 = vadd.f32 %v443, %v955
        %v2492 = vadd.f32 %v444, %v956
        %v2493 = vadd.f32 %v445, %v957
        %v2494 = vadd.f32 %v446, %v958
        %v2495 = vadd.f32 %v447, %v959
        %v2496 = vadd.f32 %v448, %v960
        %v2497 = vadd.f32 %v449, %v961
        %v2498 = vadd.f32 %v450, %v962
        %v2499 = vadd.f32 %v451, %v963
        %v2500 = vadd.f32 %v452, %v964
        %v2501 = vadd.f32 %v453, %v965
        %v2502 = vadd.f32 %v454, %v966
        %v2503 = vadd.f32 %v455, %v967
        %v2504 = vadd.f32 %v456, %v968
        %v2505 = vadd.f32 %v457, %v969
        %v2506 = vadd.f32 %v458, %v970
        %v2507 = vadd.f32 %v459, %v971
        %v2508 = vadd.f32 %v460, %v972
        %v2509 = vadd.f32 %v461, %v973
        %v2510 = vadd.f32 %v462, %v974
        %v2511 = vadd.f32 %v463, %v975
        %v2512 = vadd.f32 %v464, %v976
        %v2513 = vadd.f32 %v465, %v977
        %v2514 = vadd.f32 %v466, %v978
        %v2515 = vadd.f32 %v467, %v979
        %v2516 = vadd.f32 %v468, %v980
        %v2517 = vadd.f32 %v469, %v981
        %v2518 = vadd.f32 %v470, %v982
        %v2519 = vadd.f32 %v471, %v983
        %v2520 = vadd.f32 %v472, %v984
        %v2521 = vadd.f32 %v473, %v985
        %v2522 = vadd.f32 %v474, %v986
        %v2523 = vadd.f32 %v475, %v987
        %v2524 = vadd.f32 %v476, %v988
        %v2525 = vadd.f32 %v477, %v989
        %v2526 = vadd.f32 %v478, %v990
        %v2527 = vadd.f32 %v479, %v991
        %v2528 = vadd.f32 %v480, %v992
        %v2529 = vadd.f32 %v481, %v993
        %v2530 = vadd.f32 %v482, %v994
        %v2531 = vadd.f32 %v483, %v995
        %v2532 = vadd.f32 %v484, %v996
        %v2533 = vadd.f32 %v485, %v997
        %v2534 = vadd.f32 %v486, %v998
        %v2535 = vadd.f32 %v487, %v999
        %v2536 = vadd.f32 %v488, %v1000
        %v2537 = vadd.f32 %v489, %v1001
        %v2538 = vadd.f32 %v490, %v1002
        %v2539 = vadd.f32 %v491, %v1003
        %v2540 = vadd.f32 %v492, %v1004
        %v2541 = vadd.f32 %v493, %v1005
        %v2542 = vadd.f32 %v494, %v1006
        %v2543 = vadd.f32 %v495, %v1007
        %v2544 = vadd.f32 %v496, %v1008
        %v2545 = vadd.f32 %v497, %v1009
        %v2546 = vadd.f32 %v498, %v1010
        %v2547 = vadd.f32 %v499, %v1011
        %v2548 = vadd.f32 %v500, %v1012
        %v2549 = vadd.f32 %v501, %v1013
        %v2550 = vadd.f32 %v502, %v1014
        %v2551 = vadd.f32 %v503, %v1015
        %v2552 = vadd.f32 %v504, %v1016
        %v2553 = vadd.f32 %v505, %v1017
        %v2554 = vadd.f32 %v506, %v1018
        %v2555 = vadd.f32 %v507, %v1019
        %v2556 = vadd.f32 %v508, %v1020
        %v2557 = vadd.f32 %v509, %v1021
        %v2558 = vadd.f32 %v510, %v1022
        %v2559 = vadd.f32 %v511, %v1023
        %v2560 = vadd.f32 %v512, %v1024
        %v2561 = vadd.f32 %v513, %v1025
        %v2562 = vadd.f32 %v514, %v1026
        %v2563 = vadd.f32 %v515, %v1027
        %v2564 = vadd.f32 %v516, %v1028
        %v2565 = vadd.f32 %v517, %v1029
        %v2566 = vadd.f32 %v518, %v1030
        %v2567 = vadd.f32 %v519, %v1031
        %v2568 = vadd.f32 %v520, %v1032
        %v2569 = vadd.f32 %v521, %v1033
        %v2570 = vadd.f32 %v522, %v1034
        %v2571 = vadd.f32 %v523, %v1035
        %v2572 = vadd.f32 %v524, %v1036
        %v2573 = vadd.f32 %v525, %v1037
        %v2574 = vadd.f32 %v526, %v1038
        %v2575 = vadd.f32 %v527, %v1039
        %v2576 = vadd.f32 %v528, %v1040
        %v2577 = vadd.f32 %v529, %v1041
        %v2578 = vadd.f32 %v530, %v1042
        %v2579 = vadd.f32 %v531, %v1043
        %v2580 = vadd.f32 %v532, %v1044
        %v2581 = vadd.f32 %v533, %v1045
        %v2582 = vadd.f32 %v534, %v1046
        %v2583 = vadd.f32 %v535, %v1047
        %v2584 = vadd.f32 %v536, %v1048
        %v2585 = vadd.f32 %v537, %v1049
        %v2586 = vadd.f32 %v538, %v1050
        %v2587 = vadd.f32 %v539, %v1051
        %v2588 = vadd.f32 %v540, %v1052
        %v2589 = vadd.f32 %v541, %v1053
        %v2590 = vadd.f32 %v542, %v1054
        %v2591 = vadd.f32 %v543, %v1055
        %v2592 = vadd.f32 %v544, %v1056
        %v2593 = vadd.f32 %v545, %v1057
        %v2594 = vadd.f32 %v546, %v1058
        %v2595 = vadd.f32 %v547, %v1059
        %v2596 = vadd.f32 %v548, %v1060
        %v2597 = vadd.f32 %v549, %v1061
        %v2598 = vadd.f32 %v550, %v1062
        %v2599 = vadd.f32 %v551, %v1063
        %v2600 = vadd.f32 %v552, %v1064
        %v2601 = vadd.f32 %v553, %v1065
        %v2602 = vadd.f32 %v554, %v1066
        %v2603 = vadd.f32 %v555, %v1067
        %v2604 = vadd.f32 %v556, %v1068
        %v2605 = vadd.f32 %v557, %v1069
        %v2606 = vadd.f32 %v558, %v1070
        %v2607 = vadd.f32 %v559, %v1071
        %v2608 = vadd.f32 %v560, %v1072
        %v2609 = vadd.f32 %v561, %v1073
        %v2610 = vadd.f32 %v562, %v1074
        %v2611 = vadd.f32 %v563, %v1075
        %v2612 = vadd.f32 %v564, %v1076
        %v2613 = vadd.f32 %v565, %v1077
        %v2614 = vadd.f32 %v566, %v1078
        %v2615 = vadd.f32 %v567, %v1079
        %v2616 = vadd.f32 %v568, %v1080
        %v2617 = vadd.f32 %v569, %v1081
        %v2618 = vadd.f32 %v570, %v1082
        %v2619 = vadd.f32 %v571, %v1083
        %v2620 = vadd.f32 %v572, %v1084
        %v2621 = vadd.f32 %v573, %v1085
        %v2622 = vadd.f32 %v574, %v1086
        %v2623 = vadd.f32 %v575, %v1087
        %v2624 = vadd.f32 %v576, %v1088
        %v2625 = vadd.f32 %v577, %v1089
        %v2626 = vadd.f32 %v578, %v1090
        %v2627 = vadd.f32 %v579, %v1091
        %v2628 = vadd.f32 %v580, %v1092
        %v2629 = vadd.f32 %v581, %v1093
        %v2630 = vadd.f32 %v582, %v1094
        %v2631 = vadd.f32 %v583, %v1095
        %v2632 = vadd.f32 %v584, %v1096
        %v2633 = vadd.f32 %v585, %v1097
        %v2634 = vadd.f32 %v586, %v1098
        %v2635 = vadd.f32 %v587, %v1099
        %v2636 = vadd.f32 %v588, %v1100
        %v2637 = vadd.f32 %v589, %v1101
        %v2638 = vadd.f32 %v590, %v1102
        %v2639 = vadd.f32 %v591, %v1103
        %v2640 = vadd.f32 %v592, %v1104
        %v2641 = vadd.f32 %v593, %v1105
        %v2642 = vadd.f32 %v594, %v1106
        %v2643 = vadd.f32 %v595, %v1107
        %v2644 = vadd.f32 %v596, %v1108
        %v2645 = vadd.f32 %v597, %v1109
        %v2646 = vadd.f32 %v598, %v1110
        %v2647 = vadd.f32 %v599, %v1111
        %v2648 = vadd.f32 %v600, %v1112
        %v2649 = vadd.f32 %v601, %v1113
        %v2650 = vadd.f32 %v602, %v1114
        %v2651 = vadd.f32 %v603, %v1115
        %v2652 = vadd.f32 %v604, %v1116
        %v2653 = vadd.f32 %v605, %v1117
        %v2654 = vadd.f32 %v606, %v1118
        %v2655 = vadd.f32 %v607, %v1119
        %v2656 = vadd.f32 %v608, %v1120
        %v2657 = vadd.f32 %v609, %v1121
        %v2658 = vadd.f32 %v610, %v1122
        %v2659 = vadd.f32 %v611, %v1123
        %v2660 = vadd.f32 %v612, %v1124
        %v2661 = vadd.f32 %v613, %v1125
        %v2662 = vadd.f32 %v614, %v1126
        %v2663 = vadd.f32 %v615, %v1127
        %v2664 = vadd.f32 %v616, %v1128
        %v2665 = vadd.f32 %v617, %v1129
        %v2666 = vadd.f32 %v618, %v1130
        %v2667 = vadd.f32 %v619, %v1131
        %v2668 = vadd.f32 %v620, %v1132
        %v2669 = vadd.f32 %v621, %v1133
        %v2670 = vadd.f32 %v622, %v1134
        %v2671 = vadd.f32 %v623, %v1135
        %v2672 = vadd.f32 %v624, %v1136
        %v2673 = vadd.f32 %v625, %v1137
        %v2674 = vadd.f32 %v626, %v1138
        %v2675 = vadd.f32 %v627, %v1139
        %v2676 = vadd.f32 %v628, %v1140
        %v2677 = vadd.f32 %v629, %v1141
        %v2678 = vadd.f32 %v630, %v1142
        %v2679 = vadd.f32 %v631, %v1143
        %v2680 = vadd.f32 %v632, %v1144
        %v2681 = vadd.f32 %v633, %v1145
        %v2682 = vadd.f32 %v634, %v1146
        %v2683 = vadd.f32 %v635, %v1147
        %v2684 = vadd.f32 %v636, %v1148
        %v2685 = vadd.f32 %v637, %v1149
        %v2686 = vadd.f32 %v638, %v1150
        %v2687 = vadd.f32 %v639, %v1151
        %v2688 = vadd.f32 %v640, %v1152
        %v2689 = vadd.f32 %v641, %v1153
        %v2690 = vadd.f32 %v642, %v1154
        %v2691 = vadd.f32 %v643, %v1155
        %v2692 = vadd.f32 %v644, %v1156
        %v2693 = vadd.f32 %v645, %v1157
        %v2694 = vadd.f32 %v646, %v1158
        %v2695 = vadd.f32 %v647, %v1159
        %v2696 = vadd.f32 %v648, %v1160
        %v2697 = vadd.f32 %v649, %v1161
        %v2698 = vadd.f32 %v650, %v1162
        %v2699 = vadd.f32 %v651, %v1163
        %v2700 = vadd.f32 %v652, %v1164
        %v2701 = vadd.f32 %v653, %v1165
        %v2702 = vadd.f32 %v654, %v1166
        %v2703 = vadd.f32 %v655, %v1167
        %v2704 = vadd.f32 %v656, %v1168
        %v2705 = vadd.f32 %v657, %v1169
        %v2706 = vadd.f32 %v658, %v1170
        %v2707 = vadd.f32 %v659, %v1171
        %v2708 = vadd.f32 %v660, %v1172
        %v2709 = vadd.f32 %v661, %v1173
        %v2710 = vadd.f32 %v662, %v1174
        %v2711 = vadd.f32 %v663, %v1175
        %v2712 = vadd.f32 %v664, %v1176
        %v2713 = vadd.f32 %v665, %v1177
        %v2714 = vadd.f32 %v666, %v1178
        %v2715 = vadd.f32 %v667, %v1179
        %v2716 = vadd.f32 %v668, %v1180
        %v2717 = vadd.f32 %v669, %v1181
        %v2718 = vadd.f32 %v670, %v1182
        %v2719 = vadd.f32 %v671, %v1183
        %v2720 = vadd.f32 %v672, %v1184
        %v2721 = vadd.f32 %v673, %v1185
        %v2722 = vadd.f32 %v674, %v1186
        %v2723 = vadd.f32 %v675, %v1187
        %v2724 = vadd.f32 %v676, %v1188
        %v2725 = vadd.f32 %v677, %v1189
        %v2726 = vadd.f32 %v678, %v1190
        %v2727 = vadd.f32 %v679, %v1191
        %v2728 = vadd.f32 %v680, %v1192
        %v2729 = vadd.f32 %v681, %v1193
        %v2730 = vadd.f32 %v682, %v1194
        %v2731 = vadd.f32 %v683, %v1195
        %v2732 = vadd.f32 %v684, %v1196
        %v2733 = vadd.f32 %v685, %v1197
        %v2734 = vadd.f32 %v686, %v1198
        %v2735 = vadd.f32 %v687, %v1199
        %v2736 = vadd.f32 %v688, %v1200
        %v2737 = vadd.f32 %v689, %v1201
        %v2738 = vadd.f32 %v690, %v1202
        %v2739 = vadd.f32 %v691, %v1203
        %v2740 = vadd.f32 %v692, %v1204
        %v2741 = vadd.f32 %v693, %v1205
        %v2742 = vadd.f32 %v694, %v1206
        %v2743 = vadd.f32 %v695, %v1207
        %v2744 = vadd.f32 %v696, %v1208
        %v2745 = vadd.f32 %v697, %v1209
        %v2746 = vadd.f32 %v698, %v1210
        %v2747 = vadd.f32 %v699, %v1211
        %v2748 = vadd.f32 %v700, %v1212
        %v2749 = vadd.f32 %v701, %v1213
        %v2750 = vadd.f32 %v702, %v1214
        %v2751 = vadd.f32 %v703, %v1215
        %v2752 = vadd.f32 %v704, %v1216
        %v2753 = vadd.f32 %v705, %v1217
        %v2754 = vadd.f32 %v706, %v1218
        %v2755 = vadd.f32 %v707, %v1219
        %v2756 = vadd.f32 %v708, %v1220
        %v2757 = vadd.f32 %v709, %v1221
        %v2758 = vadd.f32 %v710, %v1222
        %v2759 = vadd.f32 %v711, %v1223
        %v2760 = vadd.f32 %v712, %v1224
        %v2761 = vadd.f32 %v713, %v1225
        %v2762 = vadd.f32 %v714, %v1226
        %v2763 = vadd.f32 %v715, %v1227
        %v2764 = vadd.f32 %v716, %v1228
        %v2765 = vadd.f32 %v717, %v1229
        %v2766 = vadd.f32 %v718, %v1230
        %v2767 = vadd.f32 %v2255, 1e-09
        %v2768 = vadd.f32 %v2256, 1e-09
        %v2769 = vadd.f32 %v2257, 1e-09
        %v2770 = vadd.f32 %v2258, 1e-09
        %v2771 = vadd.f32 %v2259, 1e-09
        %v2772 = vadd.f32 %v2260, 1e-09
        %v2773 = vadd.f32 %v2261, 1e-09
        %v2774 = vadd.f32 %v2262, 1e-09
        %v2775 = vadd.f32 %v2263, 1e-09
        %v2776 = vadd.f32 %v2264, 1e-09
        %v2777 = vadd.f32 %v2265, 1e-09
        %v2778 = vadd.f32 %v2266, 1e-09
        %v2779 = vadd.f32 %v2267, 1e-09
        %v2780 = vadd.f32 %v2268, 1e-09
        %v2781 = vadd.f32 %v2269, 1e-09
        %v2782 = vadd.f32 %v2270, 1e-09
        %v2783 = vadd.f32 %v2271, 1e-09
        %v2784 = vadd.f32 %v2272, 1e-09
        %v2785 = vadd.f32 %v2273, 1e-09
        %v2786 = vadd.f32 %v2274, 1e-09
        %v2787 = vadd.f32 %v2275, 1e-09
        %v2788 = vadd.f32 %v2276, 1e-09
        %v2789 = vadd.f32 %v2277, 1e-09
        %v2790 = vadd.f32 %v2278, 1e-09
        %v2791 = vadd.f32 %v2279, 1e-09
        %v2792 = vadd.f32 %v2280, 1e-09
        %v2793 = vadd.f32 %v2281, 1e-09
        %v2794 = vadd.f32 %v2282, 1e-09
        %v2795 = vadd.f32 %v2283, 1e-09
        %v2796 = vadd.f32 %v2284, 1e-09
        %v2797 = vadd.f32 %v2285, 1e-09
        %v2798 = vadd.f32 %v2286, 1e-09
        %v2799 = vadd.f32 %v2287, 1e-09
        %v2800 = vadd.f32 %v2288, 1e-09
        %v2801 = vadd.f32 %v2289, 1e-09
        %v2802 = vadd.f32 %v2290, 1e-09
        %v2803 = vadd.f32 %v2291, 1e-09
        %v2804 = vadd.f32 %v2292, 1e-09
        %v2805 = vadd.f32 %v2293, 1e-09
        %v2806 = vadd.f32 %v2294, 1e-09
        %v2807 = vadd.f32 %v2295, 1e-09
        %v2808 = vadd.f32 %v2296, 1e-09
        %v2809 = vadd.f32 %v2297, 1e-09
        %v2810 = vadd.f32 %v2298, 1e-09
        %v2811 = vadd.f32 %v2299, 1e-09
        %v2812 = vadd.f32 %v2300, 1e-09
        %v2813 = vadd.f32 %v2301, 1e-09
        %v2814 = vadd.f32 %v2302, 1e-09
        %v2815 = vadd.f32 %v2303, 1e-09
        %v2816 = vadd.f32 %v2304, 1e-09
        %v2817 = vadd.f32 %v2305, 1e-09
        %v2818 = vadd.f32 %v2306, 1e-09
        %v2819 = vadd.f32 %v2307, 1e-09
        %v2820 = vadd.f32 %v2308, 1e-09
        %v2821 = vadd.f32 %v2309, 1e-09
        %v2822 = vadd.f32 %v2310, 1e-09
        %v2823 = vadd.f32 %v2311, 1e-09
        %v2824 = vadd.f32 %v2312, 1e-09
        %v2825 = vadd.f32 %v2313, 1e-09
        %v2826 = vadd.f32 %v2314, 1e-09
        %v2827 = vadd.f32 %v2315, 1e-09
        %v2828 = vadd.f32 %v2316, 1e-09
        %v2829 = vadd.f32 %v2317, 1e-09
        %v2830 = vadd.f32 %v2318, 1e-09
        %v2831 = vadd.f32 %v2319, 1e-09
        %v2832 = vadd.f32 %v2320, 1e-09
        %v2833 = vadd.f32 %v2321, 1e-09
        %v2834 = vadd.f32 %v2322, 1e-09
        %v2835 = vadd.f32 %v2323, 1e-09
        %v2836 = vadd.f32 %v2324, 1e-09
        %v2837 = vadd.f32 %v2325, 1e-09
        %v2838 = vadd.f32 %v2326, 1e-09
        %v2839 = vadd.f32 %v2327, 1e-09
        %v2840 = vadd.f32 %v2328, 1e-09
        %v2841 = vadd.f32 %v2329, 1e-09
        %v2842 = vadd.f32 %v2330, 1e-09
        %v2843 = vadd.f32 %v2331, 1e-09
        %v2844 = vadd.f32 %v2332, 1e-09
        %v2845 = vadd.f32 %v2333, 1e-09
        %v2846 = vadd.f32 %v2334, 1e-09
        %v2847 = vadd.f32 %v2335, 1e-09
        %v2848 = vadd.f32 %v2336, 1e-09
        %v2849 = vadd.f32 %v2337, 1e-09
        %v2850 = vadd.f32 %v2338, 1e-09
        %v2851 = vadd.f32 %v2339, 1e-09
        %v2852 = vadd.f32 %v2340, 1e-09
        %v2853 = vadd.f32 %v2341, 1e-09
        %v2854 = vadd.f32 %v2342, 1e-09
        %v2855 = vadd.f32 %v2343, 1e-09
        %v2856 = vadd.f32 %v2344, 1e-09
        %v2857 = vadd.f32 %v2345, 1e-09
        %v2858 = vadd.f32 %v2346, 1e-09
        %v2859 = vadd.f32 %v2347, 1e-09
        %v2860 = vadd.f32 %v2348, 1e-09
        %v2861 = vadd.f32 %v2349, 1e-09
        %v2862 = vadd.f32 %v2350, 1e-09
        %v2863 = vadd.f32 %v2351, 1e-09
        %v2864 = vadd.f32 %v2352, 1e-09
        %v2865 = vadd.f32 %v2353, 1e-09
        %v2866 = vadd.f32 %v2354, 1e-09
        %v2867 = vadd.f32 %v2355, 1e-09
        %v2868 = vadd.f32 %v2356, 1e-09
        %v2869 = vadd.f32 %v2357, 1e-09
        %v2870 = vadd.f32 %v2358, 1e-09
        %v2871 = vadd.f32 %v2359, 1e-09
        %v2872 = vadd.f32 %v2360, 1e-09
        %v2873 = vadd.f32 %v2361, 1e-09
        %v2874 = vadd.f32 %v2362, 1e-09
        %v2875 = vadd.f32 %v2363, 1e-09
        %v2876 = vadd.f32 %v2364, 1e-09
        %v2877 = vadd.f32 %v2365, 1e-09
        %v2878 = vadd.f32 %v2366, 1e-09
        %v2879 = vadd.f32 %v2367, 1e-09
        %v2880 = vadd.f32 %v2368, 1e-09
        %v2881 = vadd.f32 %v2369, 1e-09
        %v2882 = vadd.f32 %v2370, 1e-09
        %v2883 = vadd.f32 %v2371, 1e-09
        %v2884 = vadd.f32 %v2372, 1e-09
        %v2885 = vadd.f32 %v2373, 1e-09
        %v2886 = vadd.f32 %v2374, 1e-09
        %v2887 = vadd.f32 %v2375, 1e-09
        %v2888 = vadd.f32 %v2376, 1e-09
        %v2889 = vadd.f32 %v2377, 1e-09
        %v2890 = vadd.f32 %v2378, 1e-09
        %v2891 = vadd.f32 %v2379, 1e-09
        %v2892 = vadd.f32 %v2380, 1e-09
        %v2893 = vadd.f32 %v2381, 1e-09
        %v2894 = vadd.f32 %v2382, 1e-09
        %v2895 = vadd.f32 %v2383, 1e-09
        %v2896 = vadd.f32 %v2384, 1e-09
        %v2897 = vadd.f32 %v2385, 1e-09
        %v2898 = vadd.f32 %v2386, 1e-09
        %v2899 = vadd.f32 %v2387, 1e-09
        %v2900 = vadd.f32 %v2388, 1e-09
        %v2901 = vadd.f32 %v2389, 1e-09
        %v2902 = vadd.f32 %v2390, 1e-09
        %v2903 = vadd.f32 %v2391, 1e-09
        %v2904 = vadd.f32 %v2392, 1e-09
        %v2905 = vadd.f32 %v2393, 1e-09
        %v2906 = vadd.f32 %v2394, 1e-09
        %v2907 = vadd.f32 %v2395, 1e-09
        %v2908 = vadd.f32 %v2396, 1e-09
        %v2909 = vadd.f32 %v2397, 1e-09
        %v2910 = vadd.f32 %v2398, 1e-09
        %v2911 = vadd.f32 %v2399, 1e-09
        %v2912 = vadd.f32 %v2400, 1e-09
        %v2913 = vadd.f32 %v2401, 1e-09
        %v2914 = vadd.f32 %v2402, 1e-09
        %v2915 = vadd.f32 %v2403, 1e-09
        %v2916 = vadd.f32 %v2404, 1e-09
        %v2917 = vadd.f32 %v2405, 1e-09
        %v2918 = vadd.f32 %v2406, 1e-09
        %v2919 = vadd.f32 %v2407, 1e-09
        %v2920 = vadd.f32 %v2408, 1e-09
        %v2921 = vadd.f32 %v2409, 1e-09
        %v2922 = vadd.f32 %v2410, 1e-09
        %v2923 = vadd.f32 %v2411, 1e-09
        %v2924 = vadd.f32 %v2412, 1e-09
        %v2925 = vadd.f32 %v2413, 1e-09
        %v2926 = vadd.f32 %v2414, 1e-09
        %v2927 = vadd.f32 %v2415, 1e-09
        %v2928 = vadd.f32 %v2416, 1e-09
        %v2929 = vadd.f32 %v2417, 1e-09
        %v2930 = vadd.f32 %v2418, 1e-09
        %v2931 = vadd.f32 %v2419, 1e-09
        %v2932 = vadd.f32 %v2420, 1e-09
        %v2933 = vadd.f32 %v2421, 1e-09
        %v2934 = vadd.f32 %v2422, 1e-09
        %v2935 = vadd.f32 %v2423, 1e-09
        %v2936 = vadd.f32 %v2424, 1e-09
        %v2937 = vadd.f32 %v2425, 1e-09
        %v2938 = vadd.f32 %v2426, 1e-09
        %v2939 = vadd.f32 %v2427, 1e-09
        %v2940 = vadd.f32 %v2428, 1e-09
        %v2941 = vadd.f32 %v2429, 1e-09
        %v2942 = vadd.f32 %v2430, 1e-09
        %v2943 = vadd.f32 %v2431, 1e-09
        %v2944 = vadd.f32 %v2432, 1e-09
        %v2945 = vadd.f32 %v2433, 1e-09
        %v2946 = vadd.f32 %v2434, 1e-09
        %v2947 = vadd.f32 %v2435, 1e-09
        %v2948 = vadd.f32 %v2436, 1e-09
        %v2949 = vadd.f32 %v2437, 1e-09
        %v2950 = vadd.f32 %v2438, 1e-09
        %v2951 = vadd.f32 %v2439, 1e-09
        %v2952 = vadd.f32 %v2440, 1e-09
        %v2953 = vadd.f32 %v2441, 1e-09
        %v2954 = vadd.f32 %v2442, 1e-09
        %v2955 = vadd.f32 %v2443, 1e-09
        %v2956 = vadd.f32 %v2444, 1e-09
        %v2957 = vadd.f32 %v2445, 1e-09
        %v2958 = vadd.f32 %v2446, 1e-09
        %v2959 = vadd.f32 %v2447, 1e-09
        %v2960 = vadd.f32 %v2448, 1e-09
        %v2961 = vadd.f32 %v2449, 1e-09
        %v2962 = vadd.f32 %v2450, 1e-09
        %v2963 = vadd.f32 %v2451, 1e-09
        %v2964 = vadd.f32 %v2452, 1e-09
        %v2965 = vadd.f32 %v2453, 1e-09
        %v2966 = vadd.f32 %v2454, 1e-09
        %v2967 = vadd.f32 %v2455, 1e-09
        %v2968 = vadd.f32 %v2456, 1e-09
        %v2969 = vadd.f32 %v2457, 1e-09
        %v2970 = vadd.f32 %v2458, 1e-09
        %v2971 = vadd.f32 %v2459, 1e-09
        %v2972 = vadd.f32 %v2460, 1e-09
        %v2973 = vadd.f32 %v2461, 1e-09
        %v2974 = vadd.f32 %v2462, 1e-09
        %v2975 = vadd.f32 %v2463, 1e-09
        %v2976 = vadd.f32 %v2464, 1e-09
        %v2977 = vadd.f32 %v2465, 1e-09
        %v2978 = vadd.f32 %v2466, 1e-09
        %v2979 = vadd.f32 %v2467, 1e-09
        %v2980 = vadd.f32 %v2468, 1e-09
        %v2981 = vadd.f32 %v2469, 1e-09
        %v2982 = vadd.f32 %v2470, 1e-09
        %v2983 = vadd.f32 %v2471, 1e-09
        %v2984 = vadd.f32 %v2472, 1e-09
        %v2985 = vadd.f32 %v2473, 1e-09
        %v2986 = vadd.f32 %v2474, 1e-09
        %v2987 = vadd.f32 %v2475, 1e-09
        %v2988 = vadd.f32 %v2476, 1e-09
        %v2989 = vadd.f32 %v2477, 1e-09
        %v2990 = vadd.f32 %v2478, 1e-09
        %v2991 = vadd.f32 %v2479, 1e-09
        %v2992 = vadd.f32 %v2480, 1e-09
        %v2993 = vadd.f32 %v2481, 1e-09
        %v2994 = vadd.f32 %v2482, 1e-09
        %v2995 = vadd.f32 %v2483, 1e-09
        %v2996 = vadd.f32 %v2484, 1e-09
        %v2997 = vadd.f32 %v2485, 1e-09
        %v2998 = vadd.f32 %v2486, 1e-09
        %v2999 = vadd.f32 %v2487, 1e-09
        %v3000 = vadd.f32 %v2488, 1e-09
        %v3001 = vadd.f32 %v2489, 1e-09
        %v3002 = vadd.f32 %v2490, 1e-09
        %v3003 = vadd.f32 %v2491, 1e-09
        %v3004 = vadd.f32 %v2492, 1e-09
        %v3005 = vadd.f32 %v2493, 1e-09
        %v3006 = vadd.f32 %v2494, 1e-09
        %v3007 = vadd.f32 %v2495, 1e-09
        %v3008 = vadd.f32 %v2496, 1e-09
        %v3009 = vadd.f32 %v2497, 1e-09
        %v3010 = vadd.f32 %v2498, 1e-09
        %v3011 = vadd.f32 %v2499, 1e-09
        %v3012 = vadd.f32 %v2500, 1e-09
        %v3013 = vadd.f32 %v2501, 1e-09
        %v3014 = vadd.f32 %v2502, 1e-09
        %v3015 = vadd.f32 %v2503, 1e-09
        %v3016 = vadd.f32 %v2504, 1e-09
        %v3017 = vadd.f32 %v2505, 1e-09
        %v3018 = vadd.f32 %v2506, 1e-09
        %v3019 = vadd.f32 %v2507, 1e-09
        %v3020 = vadd.f32 %v2508, 1e-09
        %v3021 = vadd.f32 %v2509, 1e-09
        %v3022 = vadd.f32 %v2510, 1e-09
        %v3023 = vadd.f32 %v2511, 1e-09
        %v3024 = vadd.f32 %v2512, 1e-09
        %v3025 = vadd.f32 %v2513, 1e-09
        %v3026 = vadd.f32 %v2514, 1e-09
        %v3027 = vadd.f32 %v2515, 1e-09
        %v3028 = vadd.f32 %v2516, 1e-09
        %v3029 = vadd.f32 %v2517, 1e-09
        %v3030 = vadd.f32 %v2518, 1e-09
        %v3031 = vadd.f32 %v2519, 1e-09
        %v3032 = vadd.f32 %v2520, 1e-09
        %v3033 = vadd.f32 %v2521, 1e-09
        %v3034 = vadd.f32 %v2522, 1e-09
        %v3035 = vadd.f32 %v2523, 1e-09
        %v3036 = vadd.f32 %v2524, 1e-09
        %v3037 = vadd.f32 %v2525, 1e-09
        %v3038 = vadd.f32 %v2526, 1e-09
        %v3039 = vadd.f32 %v2527, 1e-09
        %v3040 = vadd.f32 %v2528, 1e-09
        %v3041 = vadd.f32 %v2529, 1e-09
        %v3042 = vadd.f32 %v2530, 1e-09
        %v3043 = vadd.f32 %v2531, 1e-09
        %v3044 = vadd.f32 %v2532, 1e-09
        %v3045 = vadd.f32 %v2533, 1e-09
        %v3046 = vadd.f32 %v2534, 1e-09
        %v3047 = vadd.f32 %v2535, 1e-09
        %v3048 = vadd.f32 %v2536, 1e-09
        %v3049 = vadd.f32 %v2537, 1e-09
        %v3050 = vadd.f32 %v2538, 1e-09
        %v3051 = vadd.f32 %v2539, 1e-09
        %v3052 = vadd.f32 %v2540, 1e-09
        %v3053 = vadd.f32 %v2541, 1e-09
        %v3054 = vadd.f32 %v2542, 1e-09
        %v3055 = vadd.f32 %v2543, 1e-09
        %v3056 = vadd.f32 %v2544, 1e-09
        %v3057 = vadd.f32 %v2545, 1e-09
        %v3058 = vadd.f32 %v2546, 1e-09
        %v3059 = vadd.f32 %v2547, 1e-09
        %v3060 = vadd.f32 %v2548, 1e-09
        %v3061 = vadd.f32 %v2549, 1e-09
        %v3062 = vadd.f32 %v2550, 1e-09
        %v3063 = vadd.f32 %v2551, 1e-09
        %v3064 = vadd.f32 %v2552, 1e-09
        %v3065 = vadd.f32 %v2553, 1e-09
        %v3066 = vadd.f32 %v2554, 1e-09
        %v3067 = vadd.f32 %v2555, 1e-09
        %v3068 = vadd.f32 %v2556, 1e-09
        %v3069 = vadd.f32 %v2557, 1e-09
        %v3070 = vadd.f32 %v2558, 1e-09
        %v3071 = vadd.f32 %v2559, 1e-09
        %v3072 = vadd.f32 %v2560, 1e-09
        %v3073 = vadd.f32 %v2561, 1e-09
        %v3074 = vadd.f32 %v2562, 1e-09
        %v3075 = vadd.f32 %v2563, 1e-09
        %v3076 = vadd.f32 %v2564, 1e-09
        %v3077 = vadd.f32 %v2565, 1e-09
        %v3078 = vadd.f32 %v2566, 1e-09
        %v3079 = vadd.f32 %v2567, 1e-09
        %v3080 = vadd.f32 %v2568, 1e-09
        %v3081 = vadd.f32 %v2569, 1e-09
        %v3082 = vadd.f32 %v2570, 1e-09
        %v3083 = vadd.f32 %v2571, 1e-09
        %v3084 = vadd.f32 %v2572, 1e-09
        %v3085 = vadd.f32 %v2573, 1e-09
        %v3086 = vadd.f32 %v2574, 1e-09
        %v3087 = vadd.f32 %v2575, 1e-09
        %v3088 = vadd.f32 %v2576, 1e-09
        %v3089 = vadd.f32 %v2577, 1e-09
        %v3090 = vadd.f32 %v2578, 1e-09
        %v3091 = vadd.f32 %v2579, 1e-09
        %v3092 = vadd.f32 %v2580, 1e-09
        %v3093 = vadd.f32 %v2581, 1e-09
        %v3094 = vadd.f32 %v2582, 1e-09
        %v3095 = vadd.f32 %v2583, 1e-09
        %v3096 = vadd.f32 %v2584, 1e-09
        %v3097 = vadd.f32 %v2585, 1e-09
        %v3098 = vadd.f32 %v2586, 1e-09
        %v3099 = vadd.f32 %v2587, 1e-09
        %v3100 = vadd.f32 %v2588, 1e-09
        %v3101 = vadd.f32 %v2589, 1e-09
        %v3102 = vadd.f32 %v2590, 1e-09
        %v3103 = vadd.f32 %v2591, 1e-09
        %v3104 = vadd.f32 %v2592, 1e-09
        %v3105 = vadd.f32 %v2593, 1e-09
        %v3106 = vadd.f32 %v2594, 1e-09
        %v3107 = vadd.f32 %v2595, 1e-09
        %v3108 = vadd.f32 %v2596, 1e-09
        %v3109 = vadd.f32 %v2597, 1e-09
        %v3110 = vadd.f32 %v2598, 1e-09
        %v3111 = vadd.f32 %v2599, 1e-09
        %v3112 = vadd.f32 %v2600, 1e-09
        %v3113 = vadd.f32 %v2601, 1e-09
        %v3114 = vadd.f32 %v2602, 1e-09
        %v3115 = vadd.f32 %v2603, 1e-09
        %v3116 = vadd.f32 %v2604, 1e-09
        %v3117 = vadd.f32 %v2605, 1e-09
        %v3118 = vadd.f32 %v2606, 1e-09
        %v3119 = vadd.f32 %v2607, 1e-09
        %v3120 = vadd.f32 %v2608, 1e-09
        %v3121 = vadd.f32 %v2609, 1e-09
        %v3122 = vadd.f32 %v2610, 1e-09
        %v3123 = vadd.f32 %v2611, 1e-09
        %v3124 = vadd.f32 %v2612, 1e-09
        %v3125 = vadd.f32 %v2613, 1e-09
        %v3126 = vadd.f32 %v2614, 1e-09
        %v3127 = vadd.f32 %v2615, 1e-09
        %v3128 = vadd.f32 %v2616, 1e-09
        %v3129 = vadd.f32 %v2617, 1e-09
        %v3130 = vadd.f32 %v2618, 1e-09
        %v3131 = vadd.f32 %v2619, 1e-09
        %v3132 = vadd.f32 %v2620, 1e-09
        %v3133 = vadd.f32 %v2621, 1e-09
        %v3134 = vadd.f32 %v2622, 1e-09
        %v3135 = vadd.f32 %v2623, 1e-09
        %v3136 = vadd.f32 %v2624, 1e-09
        %v3137 = vadd.f32 %v2625, 1e-09
        %v3138 = vadd.f32 %v2626, 1e-09
        %v3139 = vadd.f32 %v2627, 1e-09
        %v3140 = vadd.f32 %v2628, 1e-09
        %v3141 = vadd.f32 %v2629, 1e-09
        %v3142 = vadd.f32 %v2630, 1e-09
        %v3143 = vadd.f32 %v2631, 1e-09
        %v3144 = vadd.f32 %v2632, 1e-09
        %v3145 = vadd.f32 %v2633, 1e-09
        %v3146 = vadd.f32 %v2634, 1e-09
        %v3147 = vadd.f32 %v2635, 1e-09
        %v3148 = vadd.f32 %v2636, 1e-09
        %v3149 = vadd.f32 %v2637, 1e-09
        %v3150 = vadd.f32 %v2638, 1e-09
        %v3151 = vadd.f32 %v2639, 1e-09
        %v3152 = vadd.f32 %v2640, 1e-09
        %v3153 = vadd.f32 %v2641, 1e-09
        %v3154 = vadd.f32 %v2642, 1e-09
        %v3155 = vadd.f32 %v2643, 1e-09
        %v3156 = vadd.f32 %v2644, 1e-09
        %v3157 = vadd.f32 %v2645, 1e-09
        %v3158 = vadd.f32 %v2646, 1e-09
        %v3159 = vadd.f32 %v2647, 1e-09
        %v3160 = vadd.f32 %v2648, 1e-09
        %v3161 = vadd.f32 %v2649, 1e-09
        %v3162 = vadd.f32 %v2650, 1e-09
        %v3163 = vadd.f32 %v2651, 1e-09
        %v3164 = vadd.f32 %v2652, 1e-09
        %v3165 = vadd.f32 %v2653, 1e-09
        %v3166 = vadd.f32 %v2654, 1e-09
        %v3167 = vadd.f32 %v2655, 1e-09
        %v3168 = vadd.f32 %v2656, 1e-09
        %v3169 = vadd.f32 %v2657, 1e-09
        %v3170 = vadd.f32 %v2658, 1e-09
        %v3171 = vadd.f32 %v2659, 1e-09
        %v3172 = vadd.f32 %v2660, 1e-09
        %v3173 = vadd.f32 %v2661, 1e-09
        %v3174 = vadd.f32 %v2662, 1e-09
        %v3175 = vadd.f32 %v2663, 1e-09
        %v3176 = vadd.f32 %v2664, 1e-09
        %v3177 = vadd.f32 %v2665, 1e-09
        %v3178 = vadd.f32 %v2666, 1e-09
        %v3179 = vadd.f32 %v2667, 1e-09
        %v3180 = vadd.f32 %v2668, 1e-09
        %v3181 = vadd.f32 %v2669, 1e-09
        %v3182 = vadd.f32 %v2670, 1e-09
        %v3183 = vadd.f32 %v2671, 1e-09
        %v3184 = vadd.f32 %v2672, 1e-09
        %v3185 = vadd.f32 %v2673, 1e-09
        %v3186 = vadd.f32 %v2674, 1e-09
        %v3187 = vadd.f32 %v2675, 1e-09
        %v3188 = vadd.f32 %v2676, 1e-09
        %v3189 = vadd.f32 %v2677, 1e-09
        %v3190 = vadd.f32 %v2678, 1e-09
        %v3191 = vadd.f32 %v2679, 1e-09
        %v3192 = vadd.f32 %v2680, 1e-09
        %v3193 = vadd.f32 %v2681, 1e-09
        %v3194 = vadd.f32 %v2682, 1e-09
        %v3195 = vadd.f32 %v2683, 1e-09
        %v3196 = vadd.f32 %v2684, 1e-09
        %v3197 = vadd.f32 %v2685, 1e-09
        %v3198 = vadd.f32 %v2686, 1e-09
        %v3199 = vadd.f32 %v2687, 1e-09
        %v3200 = vadd.f32 %v2688, 1e-09
        %v3201 = vadd.f32 %v2689, 1e-09
        %v3202 = vadd.f32 %v2690, 1e-09
        %v3203 = vadd.f32 %v2691, 1e-09
        %v3204 = vadd.f32 %v2692, 1e-09
        %v3205 = vadd.f32 %v2693, 1e-09
        %v3206 = vadd.f32 %v2694, 1e-09
        %v3207 = vadd.f32 %v2695, 1e-09
        %v3208 = vadd.f32 %v2696, 1e-09
        %v3209 = vadd.f32 %v2697, 1e-09
        %v3210 = vadd.f32 %v2698, 1e-09
        %v3211 = vadd.f32 %v2699, 1e-09
        %v3212 = vadd.f32 %v2700, 1e-09
        %v3213 = vadd.f32 %v2701, 1e-09
        %v3214 = vadd.f32 %v2702, 1e-09
        %v3215 = vadd.f32 %v2703, 1e-09
        %v3216 = vadd.f32 %v2704, 1e-09
        %v3217 = vadd.f32 %v2705, 1e-09
        %v3218 = vadd.f32 %v2706, 1e-09
        %v3219 = vadd.f32 %v2707, 1e-09
        %v3220 = vadd.f32 %v2708, 1e-09
        %v3221 = vadd.f32 %v2709, 1e-09
        %v3222 = vadd.f32 %v2710, 1e-09
        %v3223 = vadd.f32 %v2711, 1e-09
        %v3224 = vadd.f32 %v2712, 1e-09
        %v3225 = vadd.f32 %v2713, 1e-09
        %v3226 = vadd.f32 %v2714, 1e-09
        %v3227 = vadd.f32 %v2715, 1e-09
        %v3228 = vadd.f32 %v2716, 1e-09
        %v3229 = vadd.f32 %v2717, 1e-09
        %v3230 = vadd.f32 %v2718, 1e-09
        %v3231 = vadd.f32 %v2719, 1e-09
        %v3232 = vadd.f32 %v2720, 1e-09
        %v3233 = vadd.f32 %v2721, 1e-09
        %v3234 = vadd.f32 %v2722, 1e-09
        %v3235 = vadd.f32 %v2723, 1e-09
        %v3236 = vadd.f32 %v2724, 1e-09
        %v3237 = vadd.f32 %v2725, 1e-09
        %v3238 = vadd.f32 %v2726, 1e-09
        %v3239 = vadd.f32 %v2727, 1e-09
        %v3240 = vadd.f32 %v2728, 1e-09
        %v3241 = vadd.f32 %v2729, 1e-09
        %v3242 = vadd.f32 %v2730, 1e-09
        %v3243 = vadd.f32 %v2731, 1e-09
        %v3244 = vadd.f32 %v2732, 1e-09
        %v3245 = vadd.f32 %v2733, 1e-09
        %v3246 = vadd.f32 %v2734, 1e-09
        %v3247 = vadd.f32 %v2735, 1e-09
        %v3248 = vadd.f32 %v2736, 1e-09
        %v3249 = vadd.f32 %v2737, 1e-09
        %v3250 = vadd.f32 %v2738, 1e-09
        %v3251 = vadd.f32 %v2739, 1e-09
        %v3252 = vadd.f32 %v2740, 1e-09
        %v3253 = vadd.f32 %v2741, 1e-09
        %v3254 = vadd.f32 %v2742, 1e-09
        %v3255 = vadd.f32 %v2743, 1e-09
        %v3256 = vadd.f32 %v2744, 1e-09
        %v3257 = vadd.f32 %v2745, 1e-09
        %v3258 = vadd.f32 %v2746, 1e-09
        %v3259 = vadd.f32 %v2747, 1e-09
        %v3260 = vadd.f32 %v2748, 1e-09
        %v3261 = vadd.f32 %v2749, 1e-09
        %v3262 = vadd.f32 %v2750, 1e-09
        %v3263 = vadd.f32 %v2751, 1e-09
        %v3264 = vadd.f32 %v2752, 1e-09
        %v3265 = vadd.f32 %v2753, 1e-09
        %v3266 = vadd.f32 %v2754, 1e-09
        %v3267 = vadd.f32 %v2755, 1e-09
        %v3268 = vadd.f32 %v2756, 1e-09
        %v3269 = vadd.f32 %v2757, 1e-09
        %v3270 = vadd.f32 %v2758, 1e-09
        %v3271 = vadd.f32 %v2759, 1e-09
        %v3272 = vadd.f32 %v2760, 1e-09
        %v3273 = vadd.f32 %v2761, 1e-09
        %v3274 = vadd.f32 %v2762, 1e-09
        %v3275 = vadd.f32 %v2763, 1e-09
        %v3276 = vadd.f32 %v2764, 1e-09
        %v3277 = vadd.f32 %v2765, 1e-09
        %v3278 = vadd.f32 %v2766, 1e-09
        %v3279 = vrcp.pop %v2767
        %v3280 = vmul.f32 %v1743, %v3279
        %v3281 = vrcp.pop %v2768
        %v3282 = vmul.f32 %v1744, %v3281
        %v3283 = vrcp.pop %v2769
        %v3284 = vmul.f32 %v1745, %v3283
        %v3285 = vrcp.pop %v2770
        %v3286 = vmul.f32 %v1746, %v3285
        %v3287 = vrcp.pop %v2771
        %v3288 = vmul.f32 %v1747, %v3287
        %v3289 = vrcp.pop %v2772
        %v3290 = vmul.f32 %v1748, %v3289
        %v3291 = vrcp.pop %v2773
        %v3292 = vmul.f32 %v1749, %v3291
        %v3293 = vrcp.pop %v2774
        %v3294 = vmul.f32 %v1750, %v3293
        %v3295 = vrcp.pop %v2775
        %v3296 = vmul.f32 %v1751, %v3295
        %v3297 = vrcp.pop %v2776
        %v3298 = vmul.f32 %v1752, %v3297
        %v3299 = vrcp.pop %v2777
        %v3300 = vmul.f32 %v1753, %v3299
        %v3301 = vrcp.pop %v2778
        %v3302 = vmul.f32 %v1754, %v3301
        %v3303 = vrcp.pop %v2779
        %v3304 = vmul.f32 %v1755, %v3303
        %v3305 = vrcp.pop %v2780
        %v3306 = vmul.f32 %v1756, %v3305
        %v3307 = vrcp.pop %v2781
        %v3308 = vmul.f32 %v1757, %v3307
        %v3309 = vrcp.pop %v2782
        %v3310 = vmul.f32 %v1758, %v3309
        %v3311 = vrcp.pop %v2783
        %v3312 = vmul.f32 %v1759, %v3311
        %v3313 = vrcp.pop %v2784
        %v3314 = vmul.f32 %v1760, %v3313
        %v3315 = vrcp.pop %v2785
        %v3316 = vmul.f32 %v1761, %v3315
        %v3317 = vrcp.pop %v2786
        %v3318 = vmul.f32 %v1762, %v3317
        %v3319 = vrcp.pop %v2787
        %v3320 = vmul.f32 %v1763, %v3319
        %v3321 = vrcp.pop %v2788
        %v3322 = vmul.f32 %v1764, %v3321
        %v3323 = vrcp.pop %v2789
        %v3324 = vmul.f32 %v1765, %v3323
        %v3325 = vrcp.pop %v2790
        %v3326 = vmul.f32 %v1766, %v3325
        %v3327 = vrcp.pop %v2791
        %v3328 = vmul.f32 %v1767, %v3327
        %v3329 = vrcp.pop %v2792
        %v3330 = vmul.f32 %v1768, %v3329
        %v3331 = vrcp.pop %v2793
        %v3332 = vmul.f32 %v1769, %v3331
        %v3333 = vrcp.pop %v2794
        %v3334 = vmul.f32 %v1770, %v3333
        %v3335 = vrcp.pop %v2795
        %v3336 = vmul.f32 %v1771, %v3335
        %v3337 = vrcp.pop %v2796
        %v3338 = vmul.f32 %v1772, %v3337
        %v3339 = vrcp.pop %v2797
        %v3340 = vmul.f32 %v1773, %v3339
        %v3341 = vrcp.pop %v2798
        %v3342 = vmul.f32 %v1774, %v3341
        %v3343 = vrcp.pop %v2799
        %v3344 = vmul.f32 %v1775, %v3343
        %v3345 = vrcp.pop %v2800
        %v3346 = vmul.f32 %v1776, %v3345
        %v3347 = vrcp.pop %v2801
        %v3348 = vmul.f32 %v1777, %v3347
        %v3349 = vrcp.pop %v2802
        %v3350 = vmul.f32 %v1778, %v3349
        %v3351 = vrcp.pop %v2803
        %v3352 = vmul.f32 %v1779, %v3351
        %v3353 = vrcp.pop %v2804
        %v3354 = vmul.f32 %v1780, %v3353
        %v3355 = vrcp.pop %v2805
        %v3356 = vmul.f32 %v1781, %v3355
        %v3357 = vrcp.pop %v2806
        %v3358 = vmul.f32 %v1782, %v3357
        %v3359 = vrcp.pop %v2807
        %v3360 = vmul.f32 %v1783, %v3359
        %v3361 = vrcp.pop %v2808
        %v3362 = vmul.f32 %v1784, %v3361
        %v3363 = vrcp.pop %v2809
        %v3364 = vmul.f32 %v1785, %v3363
        %v3365 = vrcp.pop %v2810
        %v3366 = vmul.f32 %v1786, %v3365
        %v3367 = vrcp.pop %v2811
        %v3368 = vmul.f32 %v1787, %v3367
        %v3369 = vrcp.pop %v2812
        %v3370 = vmul.f32 %v1788, %v3369
        %v3371 = vrcp.pop %v2813
        %v3372 = vmul.f32 %v1789, %v3371
        %v3373 = vrcp.pop %v2814
        %v3374 = vmul.f32 %v1790, %v3373
        %v3375 = vrcp.pop %v2815
        %v3376 = vmul.f32 %v1791, %v3375
        %v3377 = vrcp.pop %v2816
        %v3378 = vmul.f32 %v1792, %v3377
        %v3379 = vrcp.pop %v2817
        %v3380 = vmul.f32 %v1793, %v3379
        %v3381 = vrcp.pop %v2818
        %v3382 = vmul.f32 %v1794, %v3381
        %v3383 = vrcp.pop %v2819
        %v3384 = vmul.f32 %v1795, %v3383
        %v3385 = vrcp.pop %v2820
        %v3386 = vmul.f32 %v1796, %v3385
        %v3387 = vrcp.pop %v2821
        %v3388 = vmul.f32 %v1797, %v3387
        %v3389 = vrcp.pop %v2822
        %v3390 = vmul.f32 %v1798, %v3389
        %v3391 = vrcp.pop %v2823
        %v3392 = vmul.f32 %v1799, %v3391
        %v3393 = vrcp.pop %v2824
        %v3394 = vmul.f32 %v1800, %v3393
        %v3395 = vrcp.pop %v2825
        %v3396 = vmul.f32 %v1801, %v3395
        %v3397 = vrcp.pop %v2826
        %v3398 = vmul.f32 %v1802, %v3397
        %v3399 = vrcp.pop %v2827
        %v3400 = vmul.f32 %v1803, %v3399
        %v3401 = vrcp.pop %v2828
        %v3402 = vmul.f32 %v1804, %v3401
        %v3403 = vrcp.pop %v2829
        %v3404 = vmul.f32 %v1805, %v3403
        %v3405 = vrcp.pop %v2830
        %v3406 = vmul.f32 %v1806, %v3405
        %v3407 = vrcp.pop %v2831
        %v3408 = vmul.f32 %v1807, %v3407
        %v3409 = vrcp.pop %v2832
        %v3410 = vmul.f32 %v1808, %v3409
        %v3411 = vrcp.pop %v2833
        %v3412 = vmul.f32 %v1809, %v3411
        %v3413 = vrcp.pop %v2834
        %v3414 = vmul.f32 %v1810, %v3413
        %v3415 = vrcp.pop %v2835
        %v3416 = vmul.f32 %v1811, %v3415
        %v3417 = vrcp.pop %v2836
        %v3418 = vmul.f32 %v1812, %v3417
        %v3419 = vrcp.pop %v2837
        %v3420 = vmul.f32 %v1813, %v3419
        %v3421 = vrcp.pop %v2838
        %v3422 = vmul.f32 %v1814, %v3421
        %v3423 = vrcp.pop %v2839
        %v3424 = vmul.f32 %v1815, %v3423
        %v3425 = vrcp.pop %v2840
        %v3426 = vmul.f32 %v1816, %v3425
        %v3427 = vrcp.pop %v2841
        %v3428 = vmul.f32 %v1817, %v3427
        %v3429 = vrcp.pop %v2842
        %v3430 = vmul.f32 %v1818, %v3429
        %v3431 = vrcp.pop %v2843
        %v3432 = vmul.f32 %v1819, %v3431
        %v3433 = vrcp.pop %v2844
        %v3434 = vmul.f32 %v1820, %v3433
        %v3435 = vrcp.pop %v2845
        %v3436 = vmul.f32 %v1821, %v3435
        %v3437 = vrcp.pop %v2846
        %v3438 = vmul.f32 %v1822, %v3437
        %v3439 = vrcp.pop %v2847
        %v3440 = vmul.f32 %v1823, %v3439
        %v3441 = vrcp.pop %v2848
        %v3442 = vmul.f32 %v1824, %v3441
        %v3443 = vrcp.pop %v2849
        %v3444 = vmul.f32 %v1825, %v3443
        %v3445 = vrcp.pop %v2850
        %v3446 = vmul.f32 %v1826, %v3445
        %v3447 = vrcp.pop %v2851
        %v3448 = vmul.f32 %v1827, %v3447
        %v3449 = vrcp.pop %v2852
        %v3450 = vmul.f32 %v1828, %v3449
        %v3451 = vrcp.pop %v2853
        %v3452 = vmul.f32 %v1829, %v3451
        %v3453 = vrcp.pop %v2854
        %v3454 = vmul.f32 %v1830, %v3453
        %v3455 = vrcp.pop %v2855
        %v3456 = vmul.f32 %v1831, %v3455
        %v3457 = vrcp.pop %v2856
        %v3458 = vmul.f32 %v1832, %v3457
        %v3459 = vrcp.pop %v2857
        %v3460 = vmul.f32 %v1833, %v3459
        %v3461 = vrcp.pop %v2858
        %v3462 = vmul.f32 %v1834, %v3461
        %v3463 = vrcp.pop %v2859
        %v3464 = vmul.f32 %v1835, %v3463
        %v3465 = vrcp.pop %v2860
        %v3466 = vmul.f32 %v1836, %v3465
        %v3467 = vrcp.pop %v2861
        %v3468 = vmul.f32 %v1837, %v3467
        %v3469 = vrcp.pop %v2862
        %v3470 = vmul.f32 %v1838, %v3469
        %v3471 = vrcp.pop %v2863
        %v3472 = vmul.f32 %v1839, %v3471
        %v3473 = vrcp.pop %v2864
        %v3474 = vmul.f32 %v1840, %v3473
        %v3475 = vrcp.pop %v2865
        %v3476 = vmul.f32 %v1841, %v3475
        %v3477 = vrcp.pop %v2866
        %v3478 = vmul.f32 %v1842, %v3477
        %v3479 = vrcp.pop %v2867
        %v3480 = vmul.f32 %v1843, %v3479
        %v3481 = vrcp.pop %v2868
        %v3482 = vmul.f32 %v1844, %v3481
        %v3483 = vrcp.pop %v2869
        %v3484 = vmul.f32 %v1845, %v3483
        %v3485 = vrcp.pop %v2870
        %v3486 = vmul.f32 %v1846, %v3485
        %v3487 = vrcp.pop %v2871
        %v3488 = vmul.f32 %v1847, %v3487
        %v3489 = vrcp.pop %v2872
        %v3490 = vmul.f32 %v1848, %v3489
        %v3491 = vrcp.pop %v2873
        %v3492 = vmul.f32 %v1849, %v3491
        %v3493 = vrcp.pop %v2874
        %v3494 = vmul.f32 %v1850, %v3493
        %v3495 = vrcp.pop %v2875
        %v3496 = vmul.f32 %v1851, %v3495
        %v3497 = vrcp.pop %v2876
        %v3498 = vmul.f32 %v1852, %v3497
        %v3499 = vrcp.pop %v2877
        %v3500 = vmul.f32 %v1853, %v3499
        %v3501 = vrcp.pop %v2878
        %v3502 = vmul.f32 %v1854, %v3501
        %v3503 = vrcp.pop %v2879
        %v3504 = vmul.f32 %v1855, %v3503
        %v3505 = vrcp.pop %v2880
        %v3506 = vmul.f32 %v1856, %v3505
        %v3507 = vrcp.pop %v2881
        %v3508 = vmul.f32 %v1857, %v3507
        %v3509 = vrcp.pop %v2882
        %v3510 = vmul.f32 %v1858, %v3509
        %v3511 = vrcp.pop %v2883
        %v3512 = vmul.f32 %v1859, %v3511
        %v3513 = vrcp.pop %v2884
        %v3514 = vmul.f32 %v1860, %v3513
        %v3515 = vrcp.pop %v2885
        %v3516 = vmul.f32 %v1861, %v3515
        %v3517 = vrcp.pop %v2886
        %v3518 = vmul.f32 %v1862, %v3517
        %v3519 = vrcp.pop %v2887
        %v3520 = vmul.f32 %v1863, %v3519
        %v3521 = vrcp.pop %v2888
        %v3522 = vmul.f32 %v1864, %v3521
        %v3523 = vrcp.pop %v2889
        %v3524 = vmul.f32 %v1865, %v3523
        %v3525 = vrcp.pop %v2890
        %v3526 = vmul.f32 %v1866, %v3525
        %v3527 = vrcp.pop %v2891
        %v3528 = vmul.f32 %v1867, %v3527
        %v3529 = vrcp.pop %v2892
        %v3530 = vmul.f32 %v1868, %v3529
        %v3531 = vrcp.pop %v2893
        %v3532 = vmul.f32 %v1869, %v3531
        %v3533 = vrcp.pop %v2894
        %v3534 = vmul.f32 %v1870, %v3533
        %v3535 = vrcp.pop %v2895
        %v3536 = vmul.f32 %v1871, %v3535
        %v3537 = vrcp.pop %v2896
        %v3538 = vmul.f32 %v1872, %v3537
        %v3539 = vrcp.pop %v2897
        %v3540 = vmul.f32 %v1873, %v3539
        %v3541 = vrcp.pop %v2898
        %v3542 = vmul.f32 %v1874, %v3541
        %v3543 = vrcp.pop %v2899
        %v3544 = vmul.f32 %v1875, %v3543
        %v3545 = vrcp.pop %v2900
        %v3546 = vmul.f32 %v1876, %v3545
        %v3547 = vrcp.pop %v2901
        %v3548 = vmul.f32 %v1877, %v3547
        %v3549 = vrcp.pop %v2902
        %v3550 = vmul.f32 %v1878, %v3549
        %v3551 = vrcp.pop %v2903
        %v3552 = vmul.f32 %v1879, %v3551
        %v3553 = vrcp.pop %v2904
        %v3554 = vmul.f32 %v1880, %v3553
        %v3555 = vrcp.pop %v2905
        %v3556 = vmul.f32 %v1881, %v3555
        %v3557 = vrcp.pop %v2906
        %v3558 = vmul.f32 %v1882, %v3557
        %v3559 = vrcp.pop %v2907
        %v3560 = vmul.f32 %v1883, %v3559
        %v3561 = vrcp.pop %v2908
        %v3562 = vmul.f32 %v1884, %v3561
        %v3563 = vrcp.pop %v2909
        %v3564 = vmul.f32 %v1885, %v3563
        %v3565 = vrcp.pop %v2910
        %v3566 = vmul.f32 %v1886, %v3565
        %v3567 = vrcp.pop %v2911
        %v3568 = vmul.f32 %v1887, %v3567
        %v3569 = vrcp.pop %v2912
        %v3570 = vmul.f32 %v1888, %v3569
        %v3571 = vrcp.pop %v2913
        %v3572 = vmul.f32 %v1889, %v3571
        %v3573 = vrcp.pop %v2914
        %v3574 = vmul.f32 %v1890, %v3573
        %v3575 = vrcp.pop %v2915
        %v3576 = vmul.f32 %v1891, %v3575
        %v3577 = vrcp.pop %v2916
        %v3578 = vmul.f32 %v1892, %v3577
        %v3579 = vrcp.pop %v2917
        %v3580 = vmul.f32 %v1893, %v3579
        %v3581 = vrcp.pop %v2918
        %v3582 = vmul.f32 %v1894, %v3581
        %v3583 = vrcp.pop %v2919
        %v3584 = vmul.f32 %v1895, %v3583
        %v3585 = vrcp.pop %v2920
        %v3586 = vmul.f32 %v1896, %v3585
        %v3587 = vrcp.pop %v2921
        %v3588 = vmul.f32 %v1897, %v3587
        %v3589 = vrcp.pop %v2922
        %v3590 = vmul.f32 %v1898, %v3589
        %v3591 = vrcp.pop %v2923
        %v3592 = vmul.f32 %v1899, %v3591
        %v3593 = vrcp.pop %v2924
        %v3594 = vmul.f32 %v1900, %v3593
        %v3595 = vrcp.pop %v2925
        %v3596 = vmul.f32 %v1901, %v3595
        %v3597 = vrcp.pop %v2926
        %v3598 = vmul.f32 %v1902, %v3597
        %v3599 = vrcp.pop %v2927
        %v3600 = vmul.f32 %v1903, %v3599
        %v3601 = vrcp.pop %v2928
        %v3602 = vmul.f32 %v1904, %v3601
        %v3603 = vrcp.pop %v2929
        %v3604 = vmul.f32 %v1905, %v3603
        %v3605 = vrcp.pop %v2930
        %v3606 = vmul.f32 %v1906, %v3605
        %v3607 = vrcp.pop %v2931
        %v3608 = vmul.f32 %v1907, %v3607
        %v3609 = vrcp.pop %v2932
        %v3610 = vmul.f32 %v1908, %v3609
        %v3611 = vrcp.pop %v2933
        %v3612 = vmul.f32 %v1909, %v3611
        %v3613 = vrcp.pop %v2934
        %v3614 = vmul.f32 %v1910, %v3613
        %v3615 = vrcp.pop %v2935
        %v3616 = vmul.f32 %v1911, %v3615
        %v3617 = vrcp.pop %v2936
        %v3618 = vmul.f32 %v1912, %v3617
        %v3619 = vrcp.pop %v2937
        %v3620 = vmul.f32 %v1913, %v3619
        %v3621 = vrcp.pop %v2938
        %v3622 = vmul.f32 %v1914, %v3621
        %v3623 = vrcp.pop %v2939
        %v3624 = vmul.f32 %v1915, %v3623
        %v3625 = vrcp.pop %v2940
        %v3626 = vmul.f32 %v1916, %v3625
        %v3627 = vrcp.pop %v2941
        %v3628 = vmul.f32 %v1917, %v3627
        %v3629 = vrcp.pop %v2942
        %v3630 = vmul.f32 %v1918, %v3629
        %v3631 = vrcp.pop %v2943
        %v3632 = vmul.f32 %v1919, %v3631
        %v3633 = vrcp.pop %v2944
        %v3634 = vmul.f32 %v1920, %v3633
        %v3635 = vrcp.pop %v2945
        %v3636 = vmul.f32 %v1921, %v3635
        %v3637 = vrcp.pop %v2946
        %v3638 = vmul.f32 %v1922, %v3637
        %v3639 = vrcp.pop %v2947
        %v3640 = vmul.f32 %v1923, %v3639
        %v3641 = vrcp.pop %v2948
        %v3642 = vmul.f32 %v1924, %v3641
        %v3643 = vrcp.pop %v2949
        %v3644 = vmul.f32 %v1925, %v3643
        %v3645 = vrcp.pop %v2950
        %v3646 = vmul.f32 %v1926, %v3645
        %v3647 = vrcp.pop %v2951
        %v3648 = vmul.f32 %v1927, %v3647
        %v3649 = vrcp.pop %v2952
        %v3650 = vmul.f32 %v1928, %v3649
        %v3651 = vrcp.pop %v2953
        %v3652 = vmul.f32 %v1929, %v3651
        %v3653 = vrcp.pop %v2954
        %v3654 = vmul.f32 %v1930, %v3653
        %v3655 = vrcp.pop %v2955
        %v3656 = vmul.f32 %v1931, %v3655
        %v3657 = vrcp.pop %v2956
        %v3658 = vmul.f32 %v1932, %v3657
        %v3659 = vrcp.pop %v2957
        %v3660 = vmul.f32 %v1933, %v3659
        %v3661 = vrcp.pop %v2958
        %v3662 = vmul.f32 %v1934, %v3661
        %v3663 = vrcp.pop %v2959
        %v3664 = vmul.f32 %v1935, %v3663
        %v3665 = vrcp.pop %v2960
        %v3666 = vmul.f32 %v1936, %v3665
        %v3667 = vrcp.pop %v2961
        %v3668 = vmul.f32 %v1937, %v3667
        %v3669 = vrcp.pop %v2962
        %v3670 = vmul.f32 %v1938, %v3669
        %v3671 = vrcp.pop %v2963
        %v3672 = vmul.f32 %v1939, %v3671
        %v3673 = vrcp.pop %v2964
        %v3674 = vmul.f32 %v1940, %v3673
        %v3675 = vrcp.pop %v2965
        %v3676 = vmul.f32 %v1941, %v3675
        %v3677 = vrcp.pop %v2966
        %v3678 = vmul.f32 %v1942, %v3677
        %v3679 = vrcp.pop %v2967
        %v3680 = vmul.f32 %v1943, %v3679
        %v3681 = vrcp.pop %v2968
        %v3682 = vmul.f32 %v1944, %v3681
        %v3683 = vrcp.pop %v2969
        %v3684 = vmul.f32 %v1945, %v3683
        %v3685 = vrcp.pop %v2970
        %v3686 = vmul.f32 %v1946, %v3685
        %v3687 = vrcp.pop %v2971
        %v3688 = vmul.f32 %v1947, %v3687
        %v3689 = vrcp.pop %v2972
        %v3690 = vmul.f32 %v1948, %v3689
        %v3691 = vrcp.pop %v2973
        %v3692 = vmul.f32 %v1949, %v3691
        %v3693 = vrcp.pop %v2974
        %v3694 = vmul.f32 %v1950, %v3693
        %v3695 = vrcp.pop %v2975
        %v3696 = vmul.f32 %v1951, %v3695
        %v3697 = vrcp.pop %v2976
        %v3698 = vmul.f32 %v1952, %v3697
        %v3699 = vrcp.pop %v2977
        %v3700 = vmul.f32 %v1953, %v3699
        %v3701 = vrcp.pop %v2978
        %v3702 = vmul.f32 %v1954, %v3701
        %v3703 = vrcp.pop %v2979
        %v3704 = vmul.f32 %v1955, %v3703
        %v3705 = vrcp.pop %v2980
        %v3706 = vmul.f32 %v1956, %v3705
        %v3707 = vrcp.pop %v2981
        %v3708 = vmul.f32 %v1957, %v3707
        %v3709 = vrcp.pop %v2982
        %v3710 = vmul.f32 %v1958, %v3709
        %v3711 = vrcp.pop %v2983
        %v3712 = vmul.f32 %v1959, %v3711
        %v3713 = vrcp.pop %v2984
        %v3714 = vmul.f32 %v1960, %v3713
        %v3715 = vrcp.pop %v2985
        %v3716 = vmul.f32 %v1961, %v3715
        %v3717 = vrcp.pop %v2986
        %v3718 = vmul.f32 %v1962, %v3717
        %v3719 = vrcp.pop %v2987
        %v3720 = vmul.f32 %v1963, %v3719
        %v3721 = vrcp.pop %v2988
        %v3722 = vmul.f32 %v1964, %v3721
        %v3723 = vrcp.pop %v2989
        %v3724 = vmul.f32 %v1965, %v3723
        %v3725 = vrcp.pop %v2990
        %v3726 = vmul.f32 %v1966, %v3725
        %v3727 = vrcp.pop %v2991
        %v3728 = vmul.f32 %v1967, %v3727
        %v3729 = vrcp.pop %v2992
        %v3730 = vmul.f32 %v1968, %v3729
        %v3731 = vrcp.pop %v2993
        %v3732 = vmul.f32 %v1969, %v3731
        %v3733 = vrcp.pop %v2994
        %v3734 = vmul.f32 %v1970, %v3733
        %v3735 = vrcp.pop %v2995
        %v3736 = vmul.f32 %v1971, %v3735
        %v3737 = vrcp.pop %v2996
        %v3738 = vmul.f32 %v1972, %v3737
        %v3739 = vrcp.pop %v2997
        %v3740 = vmul.f32 %v1973, %v3739
        %v3741 = vrcp.pop %v2998
        %v3742 = vmul.f32 %v1974, %v3741
        %v3743 = vrcp.pop %v2999
        %v3744 = vmul.f32 %v1975, %v3743
        %v3745 = vrcp.pop %v3000
        %v3746 = vmul.f32 %v1976, %v3745
        %v3747 = vrcp.pop %v3001
        %v3748 = vmul.f32 %v1977, %v3747
        %v3749 = vrcp.pop %v3002
        %v3750 = vmul.f32 %v1978, %v3749
        %v3751 = vrcp.pop %v3003
        %v3752 = vmul.f32 %v1979, %v3751
        %v3753 = vrcp.pop %v3004
        %v3754 = vmul.f32 %v1980, %v3753
        %v3755 = vrcp.pop %v3005
        %v3756 = vmul.f32 %v1981, %v3755
        %v3757 = vrcp.pop %v3006
        %v3758 = vmul.f32 %v1982, %v3757
        %v3759 = vrcp.pop %v3007
        %v3760 = vmul.f32 %v1983, %v3759
        %v3761 = vrcp.pop %v3008
        %v3762 = vmul.f32 %v1984, %v3761
        %v3763 = vrcp.pop %v3009
        %v3764 = vmul.f32 %v1985, %v3763
        %v3765 = vrcp.pop %v3010
        %v3766 = vmul.f32 %v1986, %v3765
        %v3767 = vrcp.pop %v3011
        %v3768 = vmul.f32 %v1987, %v3767
        %v3769 = vrcp.pop %v3012
        %v3770 = vmul.f32 %v1988, %v3769
        %v3771 = vrcp.pop %v3013
        %v3772 = vmul.f32 %v1989, %v3771
        %v3773 = vrcp.pop %v3014
        %v3774 = vmul.f32 %v1990, %v3773
        %v3775 = vrcp.pop %v3015
        %v3776 = vmul.f32 %v1991, %v3775
        %v3777 = vrcp.pop %v3016
        %v3778 = vmul.f32 %v1992, %v3777
        %v3779 = vrcp.pop %v3017
        %v3780 = vmul.f32 %v1993, %v3779
        %v3781 = vrcp.pop %v3018
        %v3782 = vmul.f32 %v1994, %v3781
        %v3783 = vrcp.pop %v3019
        %v3784 = vmul.f32 %v1995, %v3783
        %v3785 = vrcp.pop %v3020
        %v3786 = vmul.f32 %v1996, %v3785
        %v3787 = vrcp.pop %v3021
        %v3788 = vmul.f32 %v1997, %v3787
        %v3789 = vrcp.pop %v3022
        %v3790 = vmul.f32 %v1998, %v3789
        %v3791 = vrcp.pop %v3023
        %v3792 = vmul.f32 %v1999, %v3791
        %v3793 = vrcp.pop %v3024
        %v3794 = vmul.f32 %v2000, %v3793
        %v3795 = vrcp.pop %v3025
        %v3796 = vmul.f32 %v2001, %v3795
        %v3797 = vrcp.pop %v3026
        %v3798 = vmul.f32 %v2002, %v3797
        %v3799 = vrcp.pop %v3027
        %v3800 = vmul.f32 %v2003, %v3799
        %v3801 = vrcp.pop %v3028
        %v3802 = vmul.f32 %v2004, %v3801
        %v3803 = vrcp.pop %v3029
        %v3804 = vmul.f32 %v2005, %v3803
        %v3805 = vrcp.pop %v3030
        %v3806 = vmul.f32 %v2006, %v3805
        %v3807 = vrcp.pop %v3031
        %v3808 = vmul.f32 %v2007, %v3807
        %v3809 = vrcp.pop %v3032
        %v3810 = vmul.f32 %v2008, %v3809
        %v3811 = vrcp.pop %v3033
        %v3812 = vmul.f32 %v2009, %v3811
        %v3813 = vrcp.pop %v3034
        %v3814 = vmul.f32 %v2010, %v3813
        %v3815 = vrcp.pop %v3035
        %v3816 = vmul.f32 %v2011, %v3815
        %v3817 = vrcp.pop %v3036
        %v3818 = vmul.f32 %v2012, %v3817
        %v3819 = vrcp.pop %v3037
        %v3820 = vmul.f32 %v2013, %v3819
        %v3821 = vrcp.pop %v3038
        %v3822 = vmul.f32 %v2014, %v3821
        %v3823 = vrcp.pop %v3039
        %v3824 = vmul.f32 %v2015, %v3823
        %v3825 = vrcp.pop %v3040
        %v3826 = vmul.f32 %v2016, %v3825
        %v3827 = vrcp.pop %v3041
        %v3828 = vmul.f32 %v2017, %v3827
        %v3829 = vrcp.pop %v3042
        %v3830 = vmul.f32 %v2018, %v3829
        %v3831 = vrcp.pop %v3043
        %v3832 = vmul.f32 %v2019, %v3831
        %v3833 = vrcp.pop %v3044
        %v3834 = vmul.f32 %v2020, %v3833
        %v3835 = vrcp.pop %v3045
        %v3836 = vmul.f32 %v2021, %v3835
        %v3837 = vrcp.pop %v3046
        %v3838 = vmul.f32 %v2022, %v3837
        %v3839 = vrcp.pop %v3047
        %v3840 = vmul.f32 %v2023, %v3839
        %v3841 = vrcp.pop %v3048
        %v3842 = vmul.f32 %v2024, %v3841
        %v3843 = vrcp.pop %v3049
        %v3844 = vmul.f32 %v2025, %v3843
        %v3845 = vrcp.pop %v3050
        %v3846 = vmul.f32 %v2026, %v3845
        %v3847 = vrcp.pop %v3051
        %v3848 = vmul.f32 %v2027, %v3847
        %v3849 = vrcp.pop %v3052
        %v3850 = vmul.f32 %v2028, %v3849
        %v3851 = vrcp.pop %v3053
        %v3852 = vmul.f32 %v2029, %v3851
        %v3853 = vrcp.pop %v3054
        %v3854 = vmul.f32 %v2030, %v3853
        %v3855 = vrcp.pop %v3055
        %v3856 = vmul.f32 %v2031, %v3855
        %v3857 = vrcp.pop %v3056
        %v3858 = vmul.f32 %v2032, %v3857
        %v3859 = vrcp.pop %v3057
        %v3860 = vmul.f32 %v2033, %v3859
        %v3861 = vrcp.pop %v3058
        %v3862 = vmul.f32 %v2034, %v3861
        %v3863 = vrcp.pop %v3059
        %v3864 = vmul.f32 %v2035, %v3863
        %v3865 = vrcp.pop %v3060
        %v3866 = vmul.f32 %v2036, %v3865
        %v3867 = vrcp.pop %v3061
        %v3868 = vmul.f32 %v2037, %v3867
        %v3869 = vrcp.pop %v3062
        %v3870 = vmul.f32 %v2038, %v3869
        %v3871 = vrcp.pop %v3063
        %v3872 = vmul.f32 %v2039, %v3871
        %v3873 = vrcp.pop %v3064
        %v3874 = vmul.f32 %v2040, %v3873
        %v3875 = vrcp.pop %v3065
        %v3876 = vmul.f32 %v2041, %v3875
        %v3877 = vrcp.pop %v3066
        %v3878 = vmul.f32 %v2042, %v3877
        %v3879 = vrcp.pop %v3067
        %v3880 = vmul.f32 %v2043, %v3879
        %v3881 = vrcp.pop %v3068
        %v3882 = vmul.f32 %v2044, %v3881
        %v3883 = vrcp.pop %v3069
        %v3884 = vmul.f32 %v2045, %v3883
        %v3885 = vrcp.pop %v3070
        %v3886 = vmul.f32 %v2046, %v3885
        %v3887 = vrcp.pop %v3071
        %v3888 = vmul.f32 %v2047, %v3887
        %v3889 = vrcp.pop %v3072
        %v3890 = vmul.f32 %v2048, %v3889
        %v3891 = vrcp.pop %v3073
        %v3892 = vmul.f32 %v2049, %v3891
        %v3893 = vrcp.pop %v3074
        %v3894 = vmul.f32 %v2050, %v3893
        %v3895 = vrcp.pop %v3075
        %v3896 = vmul.f32 %v2051, %v3895
        %v3897 = vrcp.pop %v3076
        %v3898 = vmul.f32 %v2052, %v3897
        %v3899 = vrcp.pop %v3077
        %v3900 = vmul.f32 %v2053, %v3899
        %v3901 = vrcp.pop %v3078
        %v3902 = vmul.f32 %v2054, %v3901
        %v3903 = vrcp.pop %v3079
        %v3904 = vmul.f32 %v2055, %v3903
        %v3905 = vrcp.pop %v3080
        %v3906 = vmul.f32 %v2056, %v3905
        %v3907 = vrcp.pop %v3081
        %v3908 = vmul.f32 %v2057, %v3907
        %v3909 = vrcp.pop %v3082
        %v3910 = vmul.f32 %v2058, %v3909
        %v3911 = vrcp.pop %v3083
        %v3912 = vmul.f32 %v2059, %v3911
        %v3913 = vrcp.pop %v3084
        %v3914 = vmul.f32 %v2060, %v3913
        %v3915 = vrcp.pop %v3085
        %v3916 = vmul.f32 %v2061, %v3915
        %v3917 = vrcp.pop %v3086
        %v3918 = vmul.f32 %v2062, %v3917
        %v3919 = vrcp.pop %v3087
        %v3920 = vmul.f32 %v2063, %v3919
        %v3921 = vrcp.pop %v3088
        %v3922 = vmul.f32 %v2064, %v3921
        %v3923 = vrcp.pop %v3089
        %v3924 = vmul.f32 %v2065, %v3923
        %v3925 = vrcp.pop %v3090
        %v3926 = vmul.f32 %v2066, %v3925
        %v3927 = vrcp.pop %v3091
        %v3928 = vmul.f32 %v2067, %v3927
        %v3929 = vrcp.pop %v3092
        %v3930 = vmul.f32 %v2068, %v3929
        %v3931 = vrcp.pop %v3093
        %v3932 = vmul.f32 %v2069, %v3931
        %v3933 = vrcp.pop %v3094
        %v3934 = vmul.f32 %v2070, %v3933
        %v3935 = vrcp.pop %v3095
        %v3936 = vmul.f32 %v2071, %v3935
        %v3937 = vrcp.pop %v3096
        %v3938 = vmul.f32 %v2072, %v3937
        %v3939 = vrcp.pop %v3097
        %v3940 = vmul.f32 %v2073, %v3939
        %v3941 = vrcp.pop %v3098
        %v3942 = vmul.f32 %v2074, %v3941
        %v3943 = vrcp.pop %v3099
        %v3944 = vmul.f32 %v2075, %v3943
        %v3945 = vrcp.pop %v3100
        %v3946 = vmul.f32 %v2076, %v3945
        %v3947 = vrcp.pop %v3101
        %v3948 = vmul.f32 %v2077, %v3947
        %v3949 = vrcp.pop %v3102
        %v3950 = vmul.f32 %v2078, %v3949
        %v3951 = vrcp.pop %v3103
        %v3952 = vmul.f32 %v2079, %v3951
        %v3953 = vrcp.pop %v3104
        %v3954 = vmul.f32 %v2080, %v3953
        %v3955 = vrcp.pop %v3105
        %v3956 = vmul.f32 %v2081, %v3955
        %v3957 = vrcp.pop %v3106
        %v3958 = vmul.f32 %v2082, %v3957
        %v3959 = vrcp.pop %v3107
        %v3960 = vmul.f32 %v2083, %v3959
        %v3961 = vrcp.pop %v3108
        %v3962 = vmul.f32 %v2084, %v3961
        %v3963 = vrcp.pop %v3109
        %v3964 = vmul.f32 %v2085, %v3963
        %v3965 = vrcp.pop %v3110
        %v3966 = vmul.f32 %v2086, %v3965
        %v3967 = vrcp.pop %v3111
        %v3968 = vmul.f32 %v2087, %v3967
        %v3969 = vrcp.pop %v3112
        %v3970 = vmul.f32 %v2088, %v3969
        %v3971 = vrcp.pop %v3113
        %v3972 = vmul.f32 %v2089, %v3971
        %v3973 = vrcp.pop %v3114
        %v3974 = vmul.f32 %v2090, %v3973
        %v3975 = vrcp.pop %v3115
        %v3976 = vmul.f32 %v2091, %v3975
        %v3977 = vrcp.pop %v3116
        %v3978 = vmul.f32 %v2092, %v3977
        %v3979 = vrcp.pop %v3117
        %v3980 = vmul.f32 %v2093, %v3979
        %v3981 = vrcp.pop %v3118
        %v3982 = vmul.f32 %v2094, %v3981
        %v3983 = vrcp.pop %v3119
        %v3984 = vmul.f32 %v2095, %v3983
        %v3985 = vrcp.pop %v3120
        %v3986 = vmul.f32 %v2096, %v3985
        %v3987 = vrcp.pop %v3121
        %v3988 = vmul.f32 %v2097, %v3987
        %v3989 = vrcp.pop %v3122
        %v3990 = vmul.f32 %v2098, %v3989
        %v3991 = vrcp.pop %v3123
        %v3992 = vmul.f32 %v2099, %v3991
        %v3993 = vrcp.pop %v3124
        %v3994 = vmul.f32 %v2100, %v3993
        %v3995 = vrcp.pop %v3125
        %v3996 = vmul.f32 %v2101, %v3995
        %v3997 = vrcp.pop %v3126
        %v3998 = vmul.f32 %v2102, %v3997
        %v3999 = vrcp.pop %v3127
        %v4000 = vmul.f32 %v2103, %v3999
        %v4001 = vrcp.pop %v3128
        %v4002 = vmul.f32 %v2104, %v4001
        %v4003 = vrcp.pop %v3129
        %v4004 = vmul.f32 %v2105, %v4003
        %v4005 = vrcp.pop %v3130
        %v4006 = vmul.f32 %v2106, %v4005
        %v4007 = vrcp.pop %v3131
        %v4008 = vmul.f32 %v2107, %v4007
        %v4009 = vrcp.pop %v3132
        %v4010 = vmul.f32 %v2108, %v4009
        %v4011 = vrcp.pop %v3133
        %v4012 = vmul.f32 %v2109, %v4011
        %v4013 = vrcp.pop %v3134
        %v4014 = vmul.f32 %v2110, %v4013
        %v4015 = vrcp.pop %v3135
        %v4016 = vmul.f32 %v2111, %v4015
        %v4017 = vrcp.pop %v3136
        %v4018 = vmul.f32 %v2112, %v4017
        %v4019 = vrcp.pop %v3137
        %v4020 = vmul.f32 %v2113, %v4019
        %v4021 = vrcp.pop %v3138
        %v4022 = vmul.f32 %v2114, %v4021
        %v4023 = vrcp.pop %v3139
        %v4024 = vmul.f32 %v2115, %v4023
        %v4025 = vrcp.pop %v3140
        %v4026 = vmul.f32 %v2116, %v4025
        %v4027 = vrcp.pop %v3141
        %v4028 = vmul.f32 %v2117, %v4027
        %v4029 = vrcp.pop %v3142
        %v4030 = vmul.f32 %v2118, %v4029
        %v4031 = vrcp.pop %v3143
        %v4032 = vmul.f32 %v2119, %v4031
        %v4033 = vrcp.pop %v3144
        %v4034 = vmul.f32 %v2120, %v4033
        %v4035 = vrcp.pop %v3145
        %v4036 = vmul.f32 %v2121, %v4035
        %v4037 = vrcp.pop %v3146
        %v4038 = vmul.f32 %v2122, %v4037
        %v4039 = vrcp.pop %v3147
        %v4040 = vmul.f32 %v2123, %v4039
        %v4041 = vrcp.pop %v3148
        %v4042 = vmul.f32 %v2124, %v4041
        %v4043 = vrcp.pop %v3149
        %v4044 = vmul.f32 %v2125, %v4043
        %v4045 = vrcp.pop %v3150
        %v4046 = vmul.f32 %v2126, %v4045
        %v4047 = vrcp.pop %v3151
        %v4048 = vmul.f32 %v2127, %v4047
        %v4049 = vrcp.pop %v3152
        %v4050 = vmul.f32 %v2128, %v4049
        %v4051 = vrcp.pop %v3153
        %v4052 = vmul.f32 %v2129, %v4051
        %v4053 = vrcp.pop %v3154
        %v4054 = vmul.f32 %v2130, %v4053
        %v4055 = vrcp.pop %v3155
        %v4056 = vmul.f32 %v2131, %v4055
        %v4057 = vrcp.pop %v3156
        %v4058 = vmul.f32 %v2132, %v4057
        %v4059 = vrcp.pop %v3157
        %v4060 = vmul.f32 %v2133, %v4059
        %v4061 = vrcp.pop %v3158
        %v4062 = vmul.f32 %v2134, %v4061
        %v4063 = vrcp.pop %v3159
        %v4064 = vmul.f32 %v2135, %v4063
        %v4065 = vrcp.pop %v3160
        %v4066 = vmul.f32 %v2136, %v4065
        %v4067 = vrcp.pop %v3161
        %v4068 = vmul.f32 %v2137, %v4067
        %v4069 = vrcp.pop %v3162
        %v4070 = vmul.f32 %v2138, %v4069
        %v4071 = vrcp.pop %v3163
        %v4072 = vmul.f32 %v2139, %v4071
        %v4073 = vrcp.pop %v3164
        %v4074 = vmul.f32 %v2140, %v4073
        %v4075 = vrcp.pop %v3165
        %v4076 = vmul.f32 %v2141, %v4075
        %v4077 = vrcp.pop %v3166
        %v4078 = vmul.f32 %v2142, %v4077
        %v4079 = vrcp.pop %v3167
        %v4080 = vmul.f32 %v2143, %v4079
        %v4081 = vrcp.pop %v3168
        %v4082 = vmul.f32 %v2144, %v4081
        %v4083 = vrcp.pop %v3169
        %v4084 = vmul.f32 %v2145, %v4083
        %v4085 = vrcp.pop %v3170
        %v4086 = vmul.f32 %v2146, %v4085
        %v4087 = vrcp.pop %v3171
        %v4088 = vmul.f32 %v2147, %v4087
        %v4089 = vrcp.pop %v3172
        %v4090 = vmul.f32 %v2148, %v4089
        %v4091 = vrcp.pop %v3173
        %v4092 = vmul.f32 %v2149, %v4091
        %v4093 = vrcp.pop %v3174
        %v4094 = vmul.f32 %v2150, %v4093
        %v4095 = vrcp.pop %v3175
        %v4096 = vmul.f32 %v2151, %v4095
        %v4097 = vrcp.pop %v3176
        %v4098 = vmul.f32 %v2152, %v4097
        %v4099 = vrcp.pop %v3177
        %v4100 = vmul.f32 %v2153, %v4099
        %v4101 = vrcp.pop %v3178
        %v4102 = vmul.f32 %v2154, %v4101
        %v4103 = vrcp.pop %v3179
        %v4104 = vmul.f32 %v2155, %v4103
        %v4105 = vrcp.pop %v3180
        %v4106 = vmul.f32 %v2156, %v4105
        %v4107 = vrcp.pop %v3181
        %v4108 = vmul.f32 %v2157, %v4107
        %v4109 = vrcp.pop %v3182
        %v4110 = vmul.f32 %v2158, %v4109
        %v4111 = vrcp.pop %v3183
        %v4112 = vmul.f32 %v2159, %v4111
        %v4113 = vrcp.pop %v3184
        %v4114 = vmul.f32 %v2160, %v4113
        %v4115 = vrcp.pop %v3185
        %v4116 = vmul.f32 %v2161, %v4115
        %v4117 = vrcp.pop %v3186
        %v4118 = vmul.f32 %v2162, %v4117
        %v4119 = vrcp.pop %v3187
        %v4120 = vmul.f32 %v2163, %v4119
        %v4121 = vrcp.pop %v3188
        %v4122 = vmul.f32 %v2164, %v4121
        %v4123 = vrcp.pop %v3189
        %v4124 = vmul.f32 %v2165, %v4123
        %v4125 = vrcp.pop %v3190
        %v4126 = vmul.f32 %v2166, %v4125
        %v4127 = vrcp.pop %v3191
        %v4128 = vmul.f32 %v2167, %v4127
        %v4129 = vrcp.pop %v3192
        %v4130 = vmul.f32 %v2168, %v4129
        %v4131 = vrcp.pop %v3193
        %v4132 = vmul.f32 %v2169, %v4131
        %v4133 = vrcp.pop %v3194
        %v4134 = vmul.f32 %v2170, %v4133
        %v4135 = vrcp.pop %v3195
        %v4136 = vmul.f32 %v2171, %v4135
        %v4137 = vrcp.pop %v3196
        %v4138 = vmul.f32 %v2172, %v4137
        %v4139 = vrcp.pop %v3197
        %v4140 = vmul.f32 %v2173, %v4139
        %v4141 = vrcp.pop %v3198
        %v4142 = vmul.f32 %v2174, %v4141
        %v4143 = vrcp.pop %v3199
        %v4144 = vmul.f32 %v2175, %v4143
        %v4145 = vrcp.pop %v3200
        %v4146 = vmul.f32 %v2176, %v4145
        %v4147 = vrcp.pop %v3201
        %v4148 = vmul.f32 %v2177, %v4147
        %v4149 = vrcp.pop %v3202
        %v4150 = vmul.f32 %v2178, %v4149
        %v4151 = vrcp.pop %v3203
        %v4152 = vmul.f32 %v2179, %v4151
        %v4153 = vrcp.pop %v3204
        %v4154 = vmul.f32 %v2180, %v4153
        %v4155 = vrcp.pop %v3205
        %v4156 = vmul.f32 %v2181, %v4155
        %v4157 = vrcp.pop %v3206
        %v4158 = vmul.f32 %v2182, %v4157
        %v4159 = vrcp.pop %v3207
        %v4160 = vmul.f32 %v2183, %v4159
        %v4161 = vrcp.pop %v3208
        %v4162 = vmul.f32 %v2184, %v4161
        %v4163 = vrcp.pop %v3209
        %v4164 = vmul.f32 %v2185, %v4163
        %v4165 = vrcp.pop %v3210
        %v4166 = vmul.f32 %v2186, %v4165
        %v4167 = vrcp.pop %v3211
        %v4168 = vmul.f32 %v2187, %v4167
        %v4169 = vrcp.pop %v3212
        %v4170 = vmul.f32 %v2188, %v4169
        %v4171 = vrcp.pop %v3213
        %v4172 = vmul.f32 %v2189, %v4171
        %v4173 = vrcp.pop %v3214
        %v4174 = vmul.f32 %v2190, %v4173
        %v4175 = vrcp.pop %v3215
        %v4176 = vmul.f32 %v2191, %v4175
        %v4177 = vrcp.pop %v3216
        %v4178 = vmul.f32 %v2192, %v4177
        %v4179 = vrcp.pop %v3217
        %v4180 = vmul.f32 %v2193, %v4179
        %v4181 = vrcp.pop %v3218
        %v4182 = vmul.f32 %v2194, %v4181
        %v4183 = vrcp.pop %v3219
        %v4184 = vmul.f32 %v2195, %v4183
        %v4185 = vrcp.pop %v3220
        %v4186 = vmul.f32 %v2196, %v4185
        %v4187 = vrcp.pop %v3221
        %v4188 = vmul.f32 %v2197, %v4187
        %v4189 = vrcp.pop %v3222
        %v4190 = vmul.f32 %v2198, %v4189
        %v4191 = vrcp.pop %v3223
        %v4192 = vmul.f32 %v2199, %v4191
        %v4193 = vrcp.pop %v3224
        %v4194 = vmul.f32 %v2200, %v4193
        %v4195 = vrcp.pop %v3225
        %v4196 = vmul.f32 %v2201, %v4195
        %v4197 = vrcp.pop %v3226
        %v4198 = vmul.f32 %v2202, %v4197
        %v4199 = vrcp.pop %v3227
        %v4200 = vmul.f32 %v2203, %v4199
        %v4201 = vrcp.pop %v3228
        %v4202 = vmul.f32 %v2204, %v4201
        %v4203 = vrcp.pop %v3229
        %v4204 = vmul.f32 %v2205, %v4203
        %v4205 = vrcp.pop %v3230
        %v4206 = vmul.f32 %v2206, %v4205
        %v4207 = vrcp.pop %v3231
        %v4208 = vmul.f32 %v2207, %v4207
        %v4209 = vrcp.pop %v3232
        %v4210 = vmul.f32 %v2208, %v4209
        %v4211 = vrcp.pop %v3233
        %v4212 = vmul.f32 %v2209, %v4211
        %v4213 = vrcp.pop %v3234
        %v4214 = vmul.f32 %v2210, %v4213
        %v4215 = vrcp.pop %v3235
        %v4216 = vmul.f32 %v2211, %v4215
        %v4217 = vrcp.pop %v3236
        %v4218 = vmul.f32 %v2212, %v4217
        %v4219 = vrcp.pop %v3237
        %v4220 = vmul.f32 %v2213, %v4219
        %v4221 = vrcp.pop %v3238
        %v4222 = vmul.f32 %v2214, %v4221
        %v4223 = vrcp.pop %v3239
        %v4224 = vmul.f32 %v2215, %v4223
        %v4225 = vrcp.pop %v3240
        %v4226 = vmul.f32 %v2216, %v4225
        %v4227 = vrcp.pop %v3241
        %v4228 = vmul.f32 %v2217, %v4227
        %v4229 = vrcp.pop %v3242
        %v4230 = vmul.f32 %v2218, %v4229
        %v4231 = vrcp.pop %v3243
        %v4232 = vmul.f32 %v2219, %v4231
        %v4233 = vrcp.pop %v3244
        %v4234 = vmul.f32 %v2220, %v4233
        %v4235 = vrcp.pop %v3245
        %v4236 = vmul.f32 %v2221, %v4235
        %v4237 = vrcp.pop %v3246
        %v4238 = vmul.f32 %v2222, %v4237
        %v4239 = vrcp.pop %v3247
        %v4240 = vmul.f32 %v2223, %v4239
        %v4241 = vrcp.pop %v3248
        %v4242 = vmul.f32 %v2224, %v4241
        %v4243 = vrcp.pop %v3249
        %v4244 = vmul.f32 %v2225, %v4243
        %v4245 = vrcp.pop %v3250
        %v4246 = vmul.f32 %v2226, %v4245
        %v4247 = vrcp.pop %v3251
        %v4248 = vmul.f32 %v2227, %v4247
        %v4249 = vrcp.pop %v3252
        %v4250 = vmul.f32 %v2228, %v4249
        %v4251 = vrcp.pop %v3253
        %v4252 = vmul.f32 %v2229, %v4251
        %v4253 = vrcp.pop %v3254
        %v4254 = vmul.f32 %v2230, %v4253
        %v4255 = vrcp.pop %v3255
        %v4256 = vmul.f32 %v2231, %v4255
        %v4257 = vrcp.pop %v3256
        %v4258 = vmul.f32 %v2232, %v4257
        %v4259 = vrcp.pop %v3257
        %v4260 = vmul.f32 %v2233, %v4259
        %v4261 = vrcp.pop %v3258
        %v4262 = vmul.f32 %v2234, %v4261
        %v4263 = vrcp.pop %v3259
        %v4264 = vmul.f32 %v2235, %v4263
        %v4265 = vrcp.pop %v3260
        %v4266 = vmul.f32 %v2236, %v4265
        %v4267 = vrcp.pop %v3261
        %v4268 = vmul.f32 %v2237, %v4267
        %v4269 = vrcp.pop %v3262
        %v4270 = vmul.f32 %v2238, %v4269
        %v4271 = vrcp.pop %v3263
        %v4272 = vmul.f32 %v2239, %v4271
        %v4273 = vrcp.pop %v3264
        %v4274 = vmul.f32 %v2240, %v4273
        %v4275 = vrcp.pop %v3265
        %v4276 = vmul.f32 %v2241, %v4275
        %v4277 = vrcp.pop %v3266
        %v4278 = vmul.f32 %v2242, %v4277
        %v4279 = vrcp.pop %v3267
        %v4280 = vmul.f32 %v2243, %v4279
        %v4281 = vrcp.pop %v3268
        %v4282 = vmul.f32 %v2244, %v4281
        %v4283 = vrcp.pop %v3269
        %v4284 = vmul.f32 %v2245, %v4283
        %v4285 = vrcp.pop %v3270
        %v4286 = vmul.f32 %v2246, %v4285
        %v4287 = vrcp.pop %v3271
        %v4288 = vmul.f32 %v2247, %v4287
        %v4289 = vrcp.pop %v3272
        %v4290 = vmul.f32 %v2248, %v4289
        %v4291 = vrcp.pop %v3273
        %v4292 = vmul.f32 %v2249, %v4291
        %v4293 = vrcp.pop %v3274
        %v4294 = vmul.f32 %v2250, %v4293
        %v4295 = vrcp.pop %v3275
        %v4296 = vmul.f32 %v2251, %v4295
        %v4297 = vrcp.pop %v3276
        %v4298 = vmul.f32 %v2252, %v4297
        %v4299 = vrcp.pop %v3277
        %v4300 = vmul.f32 %v2253, %v4299
        %v4301 = vrcp.pop %v3278
        %v4302 = vmul.f32 %v2254, %v4301
        %4303 = vst [vmem:[%s203] sm:$0xff] %v3280
        %4304 = vst [vmem:[%s203 + $0x8] sm:$0xff] %v3282
        %4305 = vst [vmem:[%s203 + $0x10] sm:$0xff] %v3284
        %4306 = vst [vmem:[%s203 + $0x18] sm:$0xff] %v3286
        %4307 = vst [vmem:[%s203 + $0x20] sm:$0xff] %v3288
        %4308 = vst [vmem:[%s203 + $0x28] sm:$0xff] %v3290
        %4309 = vst [vmem:[%s203 + $0x30] sm:$0xff] %v3292
        %4310 = vst [vmem:[%s203 + $0x38] sm:$0xff] %v3294
        %4311 = vst [vmem:[%s203 + $0x40] sm:$0xff] %v3296
        %4312 = vst [vmem:[%s203 + $0x48] sm:$0xff] %v3298
        %4313 = vst [vmem:[%s203 + $0x50] sm:$0xff] %v3300
        %4314 = vst [vmem:[%s203 + $0x58] sm:$0xff] %v3302
        %4315 = vst [vmem:[%s203 + $0x60] sm:$0xff] %v3304
        %4316 = vst [vmem:[%s203 + $0x68] sm:$0xff] %v3306
        %4317 = vst [vmem:[%s203 + $0x70] sm:$0xff] %v3308
        %4318 = vst [vmem:[%s203 + $0x78] sm:$0xff] %v3310
        %4319 = vst [vmem:[%s203 + $0x80] sm:$0xff] %v3312
        %4320 = vst [vmem:[%s203 + $0x88] sm:$0xff] %v3314
        %4321 = vst [vmem:[%s203 + $0x90] sm:$0xff] %v3316
        %4322 = vst [vmem:[%s203 + $0x98] sm:$0xff] %v3318
        %4323 = vst [vmem:[%s203 + $0xa0] sm:$0xff] %v3320
        %4324 = vst [vmem:[%s203 + $0xa8] sm:$0xff] %v3322
        %4325 = vst [vmem:[%s203 + $0xb0] sm:$0xff] %v3324
        %4326 = vst [vmem:[%s203 + $0xb8] sm:$0xff] %v3326
        %4327 = vst [vmem:[%s203 + $0xc0] sm:$0xff] %v3328
        %4328 = vst [vmem:[%s203 + $0xc8] sm:$0xff] %v3330
        %4329 = vst [vmem:[%s203 + $0xd0] sm:$0xff] %v3332
        %4330 = vst [vmem:[%s203 + $0xd8] sm:$0xff] %v3334
        %4331 = vst [vmem:[%s203 + $0xe0] sm:$0xff] %v3336
        %4332 = vst [vmem:[%s203 + $0xe8] sm:$0xff] %v3338
        %4333 = vst [vmem:[%s203 + $0xf0] sm:$0xff] %v3340
        %4334 = vst [vmem:[%s203 + $0xf8] sm:$0xff] %v3342
        %4335 = vst [vmem:[%s203 + $0x100] sm:$0xff] %v3344
        %4336 = vst [vmem:[%s203 + $0x108] sm:$0xff] %v3346
        %4337 = vst [vmem:[%s203 + $0x110] sm:$0xff] %v3348
        %4338 = vst [vmem:[%s203 + $0x118] sm:$0xff] %v3350
        %4339 = vst [vmem:[%s203 + $0x120] sm:$0xff] %v3352
        %4340 = vst [vmem:[%s203 + $0x128] sm:$0xff] %v3354
        %4341 = vst [vmem:[%s203 + $0x130] sm:$0xff] %v3356
        %4342 = vst [vmem:[%s203 + $0x138] sm:$0xff] %v3358
        %4343 = vst [vmem:[%s203 + $0x140] sm:$0xff] %v3360
        %4344 = vst [vmem:[%s203 + $0x148] sm:$0xff] %v3362
        %4345 = vst [vmem:[%s203 + $0x150] sm:$0xff] %v3364
        %4346 = vst [vmem:[%s203 + $0x158] sm:$0xff] %v3366
        %4347 = vst [vmem:[%s203 + $0x160] sm:$0xff] %v3368
        %4348 = vst [vmem:[%s203 + $0x168] sm:$0xff] %v3370
        %4349 = vst [vmem:[%s203 + $0x170] sm:$0xff] %v3372
        %4350 = vst [vmem:[%s203 + $0x178] sm:$0xff] %v3374
        %4351 = vst [vmem:[%s203 + $0x180] sm:$0xff] %v3376
        %4352 = vst [vmem:[%s203 + $0x188] sm:$0xff] %v3378
        %4353 = vst [vmem:[%s203 + $0x190] sm:$0xff] %v3380
        %4354 = vst [vmem:[%s203 + $0x198] sm:$0xff] %v3382
        %4355 = vst [vmem:[%s203 + $0x1a0] sm:$0xff] %v3384
        %4356 = vst [vmem:[%s203 + $0x1a8] sm:$0xff] %v3386
        %4357 = vst [vmem:[%s203 + $0x1b0] sm:$0xff] %v3388
        %4358 = vst [vmem:[%s203 + $0x1b8] sm:$0xff] %v3390
        %4359 = vst [vmem:[%s203 + $0x1c0] sm:$0xff] %v3392
        %4360 = vst [vmem:[%s203 + $0x1c8] sm:$0xff] %v3394
        %4361 = vst [vmem:[%s203 + $0x1d0] sm:$0xff] %v3396
        %4362 = vst [vmem:[%s203 + $0x1d8] sm:$0xff] %v3398
        %4363 = vst [vmem:[%s203 + $0x1e0] sm:$0xff] %v3400
        %4364 = vst [vmem:[%s203 + $0x1e8] sm:$0xff] %v3402
        %4365 = vst [vmem:[%s203 + $0x1f0] sm:$0xff] %v3404
        %4366 = vst [vmem:[%s203 + $0x1f8] sm:$0xff] %v3406
        %4367 = vst [vmem:[%s203 + $0x200] sm:$0xff] %v3408
        %4368 = vst [vmem:[%s203 + $0x208] sm:$0xff] %v3410
        %4369 = vst [vmem:[%s203 + $0x210] sm:$0xff] %v3412
        %4370 = vst [vmem:[%s203 + $0x218] sm:$0xff] %v3414
        %4371 = vst [vmem:[%s203 + $0x220] sm:$0xff] %v3416
        %4372 = vst [vmem:[%s203 + $0x228] sm:$0xff] %v3418
        %4373 = vst [vmem:[%s203 + $0x230] sm:$0xff] %v3420
        %4374 = vst [vmem:[%s203 + $0x238] sm:$0xff] %v3422
        %4375 = vst [vmem:[%s203 + $0x240] sm:$0xff] %v3424
        %4376 = vst [vmem:[%s203 + $0x248] sm:$0xff] %v3426
        %4377 = vst [vmem:[%s203 + $0x250] sm:$0xff] %v3428
        %4378 = vst [vmem:[%s203 + $0x258] sm:$0xff] %v3430
        %4379 = vst [vmem:[%s203 + $0x260] sm:$0xff] %v3432
        %4380 = vst [vmem:[%s203 + $0x268] sm:$0xff] %v3434
        %4381 = vst [vmem:[%s203 + $0x270] sm:$0xff] %v3436
        %4382 = vst [vmem:[%s203 + $0x278] sm:$0xff] %v3438
        %4383 = vst [vmem:[%s203 + $0x280] sm:$0xff] %v3440
        %4384 = vst [vmem:[%s203 + $0x288] sm:$0xff] %v3442
        %4385 = vst [vmem:[%s203 + $0x290] sm:$0xff] %v3444
        %4386 = vst [vmem:[%s203 + $0x298] sm:$0xff] %v3446
        %4387 = vst [vmem:[%s203 + $0x2a0] sm:$0xff] %v3448
        %4388 = vst [vmem:[%s203 + $0x2a8] sm:$0xff] %v3450
        %4389 = vst [vmem:[%s203 + $0x2b0] sm:$0xff] %v3452
        %4390 = vst [vmem:[%s203 + $0x2b8] sm:$0xff] %v3454
        %4391 = vst [vmem:[%s203 + $0x2c0] sm:$0xff] %v3456
        %4392 = vst [vmem:[%s203 + $0x2c8] sm:$0xff] %v3458
        %4393 = vst [vmem:[%s203 + $0x2d0] sm:$0xff] %v3460
        %4394 = vst [vmem:[%s203 + $0x2d8] sm:$0xff] %v3462
        %4395 = vst [vmem:[%s203 + $0x2e0] sm:$0xff] %v3464
        %4396 = vst [vmem:[%s203 + $0x2e8] sm:$0xff] %v3466
        %4397 = vst [vmem:[%s203 + $0x2f0] sm:$0xff] %v3468
        %4398 = vst [vmem:[%s203 + $0x2f8] sm:$0xff] %v3470
        %4399 = vst [vmem:[%s203 + $0x300] sm:$0xff] %v3472
        %4400 = vst [vmem:[%s203 + $0x308] sm:$0xff] %v3474
        %4401 = vst [vmem:[%s203 + $0x310] sm:$0xff] %v3476
        %4402 = vst [vmem:[%s203 + $0x318] sm:$0xff] %v3478
        %4403 = vst [vmem:[%s203 + $0x320] sm:$0xff] %v3480
        %4404 = vst [vmem:[%s203 + $0x328] sm:$0xff] %v3482
        %4405 = vst [vmem:[%s203 + $0x330] sm:$0xff] %v3484
        %4406 = vst [vmem:[%s203 + $0x338] sm:$0xff] %v3486
        %4407 = vst [vmem:[%s203 + $0x340] sm:$0xff] %v3488
        %4408 = vst [vmem:[%s203 + $0x348] sm:$0xff] %v3490
        %4409 = vst [vmem:[%s203 + $0x350] sm:$0xff] %v3492
        %4410 = vst [vmem:[%s203 + $0x358] sm:$0xff] %v3494
        %4411 = vst [vmem:[%s203 + $0x360] sm:$0xff] %v3496
        %4412 = vst [vmem:[%s203 + $0x368] sm:$0xff] %v3498
        %4413 = vst [vmem:[%s203 + $0x370] sm:$0xff] %v3500
        %4414 = vst [vmem:[%s203 + $0x378] sm:$0xff] %v3502
        %4415 = vst [vmem:[%s203 + $0x380] sm:$0xff] %v3504
        %4416 = vst [vmem:[%s203 + $0x388] sm:$0xff] %v3506
        %4417 = vst [vmem:[%s203 + $0x390] sm:$0xff] %v3508
        %4418 = vst [vmem:[%s203 + $0x398] sm:$0xff] %v3510
        %4419 = vst [vmem:[%s203 + $0x3a0] sm:$0xff] %v3512
        %4420 = vst [vmem:[%s203 + $0x3a8] sm:$0xff] %v3514
        %4421 = vst [vmem:[%s203 + $0x3b0] sm:$0xff] %v3516
        %4422 = vst [vmem:[%s203 + $0x3b8] sm:$0xff] %v3518
        %4423 = vst [vmem:[%s203 + $0x3c0] sm:$0xff] %v3520
        %4424 = vst [vmem:[%s203 + $0x3c8] sm:$0xff] %v3522
        %4425 = vst [vmem:[%s203 + $0x3d0] sm:$0xff] %v3524
        %4426 = vst [vmem:[%s203 + $0x3d8] sm:$0xff] %v3526
        %4427 = vst [vmem:[%s203 + $0x3e0] sm:$0xff] %v3528
        %4428 = vst [vmem:[%s203 + $0x3e8] sm:$0xff] %v3530
        %4429 = vst [vmem:[%s203 + $0x3f0] sm:$0xff] %v3532
        %4430 = vst [vmem:[%s203 + $0x3f8] sm:$0xff] %v3534
        %4431 = vst [vmem:[%s203 + $0x400] sm:$0xff] %v3536
        %4432 = vst [vmem:[%s203 + $0x408] sm:$0xff] %v3538
        %4433 = vst [vmem:[%s203 + $0x410] sm:$0xff] %v3540
        %4434 = vst [vmem:[%s203 + $0x418] sm:$0xff] %v3542
        %4435 = vst [vmem:[%s203 + $0x420] sm:$0xff] %v3544
        %4436 = vst [vmem:[%s203 + $0x428] sm:$0xff] %v3546
        %4437 = vst [vmem:[%s203 + $0x430] sm:$0xff] %v3548
        %4438 = vst [vmem:[%s203 + $0x438] sm:$0xff] %v3550
        %4439 = vst [vmem:[%s203 + $0x440] sm:$0xff] %v3552
        %4440 = vst [vmem:[%s203 + $0x448] sm:$0xff] %v3554
        %4441 = vst [vmem:[%s203 + $0x450] sm:$0xff] %v3556
        %4442 = vst [vmem:[%s203 + $0x458] sm:$0xff] %v3558
        %4443 = vst [vmem:[%s203 + $0x460] sm:$0xff] %v3560
        %4444 = vst [vmem:[%s203 + $0x468] sm:$0xff] %v3562
        %4445 = vst [vmem:[%s203 + $0x470] sm:$0xff] %v3564
        %4446 = vst [vmem:[%s203 + $0x478] sm:$0xff] %v3566
        %4447 = vst [vmem:[%s203 + $0x480] sm:$0xff] %v3568
        %4448 = vst [vmem:[%s203 + $0x488] sm:$0xff] %v3570
        %4449 = vst [vmem:[%s203 + $0x490] sm:$0xff] %v3572
        %4450 = vst [vmem:[%s203 + $0x498] sm:$0xff] %v3574
        %4451 = vst [vmem:[%s203 + $0x4a0] sm:$0xff] %v3576
        %4452 = vst [vmem:[%s203 + $0x4a8] sm:$0xff] %v3578
        %4453 = vst [vmem:[%s203 + $0x4b0] sm:$0xff] %v3580
        %4454 = vst [vmem:[%s203 + $0x4b8] sm:$0xff] %v3582
        %4455 = vst [vmem:[%s203 + $0x4c0] sm:$0xff] %v3584
        %4456 = vst [vmem:[%s203 + $0x4c8] sm:$0xff] %v3586
        %4457 = vst [vmem:[%s203 + $0x4d0] sm:$0xff] %v3588
        %4458 = vst [vmem:[%s203 + $0x4d8] sm:$0xff] %v3590
        %4459 = vst [vmem:[%s203 + $0x4e0] sm:$0xff] %v3592
        %4460 = vst [vmem:[%s203 + $0x4e8] sm:$0xff] %v3594
        %4461 = vst [vmem:[%s203 + $0x4f0] sm:$0xff] %v3596
        %4462 = vst [vmem:[%s203 + $0x4f8] sm:$0xff] %v3598
        %4463 = vst [vmem:[%s203 + $0x500] sm:$0xff] %v3600
        %4464 = vst [vmem:[%s203 + $0x508] sm:$0xff] %v3602
        %4465 = vst [vmem:[%s203 + $0x510] sm:$0xff] %v3604
        %4466 = vst [vmem:[%s203 + $0x518] sm:$0xff] %v3606
        %4467 = vst [vmem:[%s203 + $0x520] sm:$0xff] %v3608
        %4468 = vst [vmem:[%s203 + $0x528] sm:$0xff] %v3610
        %4469 = vst [vmem:[%s203 + $0x530] sm:$0xff] %v3612
        %4470 = vst [vmem:[%s203 + $0x538] sm:$0xff] %v3614
        %4471 = vst [vmem:[%s203 + $0x540] sm:$0xff] %v3616
        %4472 = vst [vmem:[%s203 + $0x548] sm:$0xff] %v3618
        %4473 = vst [vmem:[%s203 + $0x550] sm:$0xff] %v3620
        %4474 = vst [vmem:[%s203 + $0x558] sm:$0xff] %v3622
        %4475 = vst [vmem:[%s203 + $0x560] sm:$0xff] %v3624
        %4476 = vst [vmem:[%s203 + $0x568] sm:$0xff] %v3626
        %4477 = vst [vmem:[%s203 + $0x570] sm:$0xff] %v3628
        %4478 = vst [vmem:[%s203 + $0x578] sm:$0xff] %v3630
        %4479 = vst [vmem:[%s203 + $0x580] sm:$0xff] %v3632
        %4480 = vst [vmem:[%s203 + $0x588] sm:$0xff] %v3634
        %4481 = vst [vmem:[%s203 + $0x590] sm:$0xff] %v3636
        %4482 = vst [vmem:[%s203 + $0x598] sm:$0xff] %v3638
        %4483 = vst [vmem:[%s203 + $0x5a0] sm:$0xff] %v3640
        %4484 = vst [vmem:[%s203 + $0x5a8] sm:$0xff] %v3642
        %4485 = vst [vmem:[%s203 + $0x5b0] sm:$0xff] %v3644
        %4486 = vst [vmem:[%s203 + $0x5b8] sm:$0xff] %v3646
        %4487 = vst [vmem:[%s203 + $0x5c0] sm:$0xff] %v3648
        %4488 = vst [vmem:[%s203 + $0x5c8] sm:$0xff] %v3650
        %4489 = vst [vmem:[%s203 + $0x5d0] sm:$0xff] %v3652
        %4490 = vst [vmem:[%s203 + $0x5d8] sm:$0xff] %v3654
        %4491 = vst [vmem:[%s203 + $0x5e0] sm:$0xff] %v3656
        %4492 = vst [vmem:[%s203 + $0x5e8] sm:$0xff] %v3658
        %4493 = vst [vmem:[%s203 + $0x5f0] sm:$0xff] %v3660
        %4494 = vst [vmem:[%s203 + $0x5f8] sm:$0xff] %v3662
        %4495 = vst [vmem:[%s203 + $0x600] sm:$0xff] %v3664
        %4496 = vst [vmem:[%s203 + $0x608] sm:$0xff] %v3666
        %4497 = vst [vmem:[%s203 + $0x610] sm:$0xff] %v3668
        %4498 = vst [vmem:[%s203 + $0x618] sm:$0xff] %v3670
        %4499 = vst [vmem:[%s203 + $0x620] sm:$0xff] %v3672
        %4500 = vst [vmem:[%s203 + $0x628] sm:$0xff] %v3674
        %4501 = vst [vmem:[%s203 + $0x630] sm:$0xff] %v3676
        %4502 = vst [vmem:[%s203 + $0x638] sm:$0xff] %v3678
        %4503 = vst [vmem:[%s203 + $0x640] sm:$0xff] %v3680
        %4504 = vst [vmem:[%s203 + $0x648] sm:$0xff] %v3682
        %4505 = vst [vmem:[%s203 + $0x650] sm:$0xff] %v3684
        %4506 = vst [vmem:[%s203 + $0x658] sm:$0xff] %v3686
        %4507 = vst [vmem:[%s203 + $0x660] sm:$0xff] %v3688
        %4508 = vst [vmem:[%s203 + $0x668] sm:$0xff] %v3690
        %4509 = vst [vmem:[%s203 + $0x670] sm:$0xff] %v3692
        %4510 = vst [vmem:[%s203 + $0x678] sm:$0xff] %v3694
        %4511 = vst [vmem:[%s203 + $0x680] sm:$0xff] %v3696
        %4512 = vst [vmem:[%s203 + $0x688] sm:$0xff] %v3698
        %4513 = vst [vmem:[%s203 + $0x690] sm:$0xff] %v3700
        %4514 = vst [vmem:[%s203 + $0x698] sm:$0xff] %v3702
        %4515 = vst [vmem:[%s203 + $0x6a0] sm:$0xff] %v3704
        %4516 = vst [vmem:[%s203 + $0x6a8] sm:$0xff] %v3706
        %4517 = vst [vmem:[%s203 + $0x6b0] sm:$0xff] %v3708
        %4518 = vst [vmem:[%s203 + $0x6b8] sm:$0xff] %v3710
        %4519 = vst [vmem:[%s203 + $0x6c0] sm:$0xff] %v3712
        %4520 = vst [vmem:[%s203 + $0x6c8] sm:$0xff] %v3714
        %4521 = vst [vmem:[%s203 + $0x6d0] sm:$0xff] %v3716
        %4522 = vst [vmem:[%s203 + $0x6d8] sm:$0xff] %v3718
        %4523 = vst [vmem:[%s203 + $0x6e0] sm:$0xff] %v3720
        %4524 = vst [vmem:[%s203 + $0x6e8] sm:$0xff] %v3722
        %4525 = vst [vmem:[%s203 + $0x6f0] sm:$0xff] %v3724
        %4526 = vst [vmem:[%s203 + $0x6f8] sm:$0xff] %v3726
        %4527 = vst [vmem:[%s203 + $0x700] sm:$0xff] %v3728
        %4528 = vst [vmem:[%s203 + $0x708] sm:$0xff] %v3730
        %4529 = vst [vmem:[%s203 + $0x710] sm:$0xff] %v3732
        %4530 = vst [vmem:[%s203 + $0x718] sm:$0xff] %v3734
        %4531 = vst [vmem:[%s203 + $0x720] sm:$0xff] %v3736
        %4532 = vst [vmem:[%s203 + $0x728] sm:$0xff] %v3738
        %4533 = vst [vmem:[%s203 + $0x730] sm:$0xff] %v3740
        %4534 = vst [vmem:[%s203 + $0x738] sm:$0xff] %v3742
        %4535 = vst [vmem:[%s203 + $0x740] sm:$0xff] %v3744
        %4536 = vst [vmem:[%s203 + $0x748] sm:$0xff] %v3746
        %4537 = vst [vmem:[%s203 + $0x750] sm:$0xff] %v3748
        %4538 = vst [vmem:[%s203 + $0x758] sm:$0xff] %v3750
        %4539 = vst [vmem:[%s203 + $0x760] sm:$0xff] %v3752
        %4540 = vst [vmem:[%s203 + $0x768] sm:$0xff] %v3754
        %4541 = vst [vmem:[%s203 + $0x770] sm:$0xff] %v3756
        %4542 = vst [vmem:[%s203 + $0x778] sm:$0xff] %v3758
        %4543 = vst [vmem:[%s203 + $0x780] sm:$0xff] %v3760
        %4544 = vst [vmem:[%s203 + $0x788] sm:$0xff] %v3762
        %4545 = vst [vmem:[%s203 + $0x790] sm:$0xff] %v3764
        %4546 = vst [vmem:[%s203 + $0x798] sm:$0xff] %v3766
        %4547 = vst [vmem:[%s203 + $0x7a0] sm:$0xff] %v3768
        %4548 = vst [vmem:[%s203 + $0x7a8] sm:$0xff] %v3770
        %4549 = vst [vmem:[%s203 + $0x7b0] sm:$0xff] %v3772
        %4550 = vst [vmem:[%s203 + $0x7b8] sm:$0xff] %v3774
        %4551 = vst [vmem:[%s203 + $0x7c0] sm:$0xff] %v3776
        %4552 = vst [vmem:[%s203 + $0x7c8] sm:$0xff] %v3778
        %4553 = vst [vmem:[%s203 + $0x7d0] sm:$0xff] %v3780
        %4554 = vst [vmem:[%s203 + $0x7d8] sm:$0xff] %v3782
        %4555 = vst [vmem:[%s203 + $0x7e0] sm:$0xff] %v3784
        %4556 = vst [vmem:[%s203 + $0x7e8] sm:$0xff] %v3786
        %4557 = vst [vmem:[%s203 + $0x7f0] sm:$0xff] %v3788
        %4558 = vst [vmem:[%s203 + $0x7f8] sm:$0xff] %v3790
        %4559 = vst [vmem:[%s203 + $0x800] sm:$0xff] %v3792
        %4560 = vst [vmem:[%s203 + $0x808] sm:$0xff] %v3794
        %4561 = vst [vmem:[%s203 + $0x810] sm:$0xff] %v3796
        %4562 = vst [vmem:[%s203 + $0x818] sm:$0xff] %v3798
        %4563 = vst [vmem:[%s203 + $0x820] sm:$0xff] %v3800
        %4564 = vst [vmem:[%s203 + $0x828] sm:$0xff] %v3802
        %4565 = vst [vmem:[%s203 + $0x830] sm:$0xff] %v3804
        %4566 = vst [vmem:[%s203 + $0x838] sm:$0xff] %v3806
        %4567 = vst [vmem:[%s203 + $0x840] sm:$0xff] %v3808
        %4568 = vst [vmem:[%s203 + $0x848] sm:$0xff] %v3810
        %4569 = vst [vmem:[%s203 + $0x850] sm:$0xff] %v3812
        %4570 = vst [vmem:[%s203 + $0x858] sm:$0xff] %v3814
        %4571 = vst [vmem:[%s203 + $0x860] sm:$0xff] %v3816
        %4572 = vst [vmem:[%s203 + $0x868] sm:$0xff] %v3818
        %4573 = vst [vmem:[%s203 + $0x870] sm:$0xff] %v3820
        %4574 = vst [vmem:[%s203 + $0x878] sm:$0xff] %v3822
        %4575 = vst [vmem:[%s203 + $0x880] sm:$0xff] %v3824
        %4576 = vst [vmem:[%s203 + $0x888] sm:$0xff] %v3826
        %4577 = vst [vmem:[%s203 + $0x890] sm:$0xff] %v3828
        %4578 = vst [vmem:[%s203 + $0x898] sm:$0xff] %v3830
        %4579 = vst [vmem:[%s203 + $0x8a0] sm:$0xff] %v3832
        %4580 = vst [vmem:[%s203 + $0x8a8] sm:$0xff] %v3834
        %4581 = vst [vmem:[%s203 + $0x8b0] sm:$0xff] %v3836
        %4582 = vst [vmem:[%s203 + $0x8b8] sm:$0xff] %v3838
        %4583 = vst [vmem:[%s203 + $0x8c0] sm:$0xff] %v3840
        %4584 = vst [vmem:[%s203 + $0x8c8] sm:$0xff] %v3842
        %4585 = vst [vmem:[%s203 + $0x8d0] sm:$0xff] %v3844
        %4586 = vst [vmem:[%s203 + $0x8d8] sm:$0xff] %v3846
        %4587 = vst [vmem:[%s203 + $0x8e0] sm:$0xff] %v3848
        %4588 = vst [vmem:[%s203 + $0x8e8] sm:$0xff] %v3850
        %4589 = vst [vmem:[%s203 + $0x8f0] sm:$0xff] %v3852
        %4590 = vst [vmem:[%s203 + $0x8f8] sm:$0xff] %v3854
        %4591 = vst [vmem:[%s203 + $0x900] sm:$0xff] %v3856
        %4592 = vst [vmem:[%s203 + $0x908] sm:$0xff] %v3858
        %4593 = vst [vmem:[%s203 + $0x910] sm:$0xff] %v3860
        %4594 = vst [vmem:[%s203 + $0x918] sm:$0xff] %v3862
        %4595 = vst [vmem:[%s203 + $0x920] sm:$0xff] %v3864
        %4596 = vst [vmem:[%s203 + $0x928] sm:$0xff] %v3866
        %4597 = vst [vmem:[%s203 + $0x930] sm:$0xff] %v3868
        %4598 = vst [vmem:[%s203 + $0x938] sm:$0xff] %v3870
        %4599 = vst [vmem:[%s203 + $0x940] sm:$0xff] %v3872
        %4600 = vst [vmem:[%s203 + $0x948] sm:$0xff] %v3874
        %4601 = vst [vmem:[%s203 + $0x950] sm:$0xff] %v3876
        %4602 = vst [vmem:[%s203 + $0x958] sm:$0xff] %v3878
        %4603 = vst [vmem:[%s203 + $0x960] sm:$0xff] %v3880
        %4604 = vst [vmem:[%s203 + $0x968] sm:$0xff] %v3882
        %4605 = vst [vmem:[%s203 + $0x970] sm:$0xff] %v3884
        %4606 = vst [vmem:[%s203 + $0x978] sm:$0xff] %v3886
        %4607 = vst [vmem:[%s203 + $0x980] sm:$0xff] %v3888
        %4608 = vst [vmem:[%s203 + $0x988] sm:$0xff] %v3890
        %4609 = vst [vmem:[%s203 + $0x990] sm:$0xff] %v3892
        %4610 = vst [vmem:[%s203 + $0x998] sm:$0xff] %v3894
        %4611 = vst [vmem:[%s203 + $0x9a0] sm:$0xff] %v3896
        %4612 = vst [vmem:[%s203 + $0x9a8] sm:$0xff] %v3898
        %4613 = vst [vmem:[%s203 + $0x9b0] sm:$0xff] %v3900
        %4614 = vst [vmem:[%s203 + $0x9b8] sm:$0xff] %v3902
        %4615 = vst [vmem:[%s203 + $0x9c0] sm:$0xff] %v3904
        %4616 = vst [vmem:[%s203 + $0x9c8] sm:$0xff] %v3906
        %4617 = vst [vmem:[%s203 + $0x9d0] sm:$0xff] %v3908
        %4618 = vst [vmem:[%s203 + $0x9d8] sm:$0xff] %v3910
        %4619 = vst [vmem:[%s203 + $0x9e0] sm:$0xff] %v3912
        %4620 = vst [vmem:[%s203 + $0x9e8] sm:$0xff] %v3914
        %4621 = vst [vmem:[%s203 + $0x9f0] sm:$0xff] %v3916
        %4622 = vst [vmem:[%s203 + $0x9f8] sm:$0xff] %v3918
        %4623 = vst [vmem:[%s203 + $0xa00] sm:$0xff] %v3920
        %4624 = vst [vmem:[%s203 + $0xa08] sm:$0xff] %v3922
        %4625 = vst [vmem:[%s203 + $0xa10] sm:$0xff] %v3924
        %4626 = vst [vmem:[%s203 + $0xa18] sm:$0xff] %v3926
        %4627 = vst [vmem:[%s203 + $0xa20] sm:$0xff] %v3928
        %4628 = vst [vmem:[%s203 + $0xa28] sm:$0xff] %v3930
        %4629 = vst [vmem:[%s203 + $0xa30] sm:$0xff] %v3932
        %4630 = vst [vmem:[%s203 + $0xa38] sm:$0xff] %v3934
        %4631 = vst [vmem:[%s203 + $0xa40] sm:$0xff] %v3936
        %4632 = vst [vmem:[%s203 + $0xa48] sm:$0xff] %v3938
        %4633 = vst [vmem:[%s203 + $0xa50] sm:$0xff] %v3940
        %4634 = vst [vmem:[%s203 + $0xa58] sm:$0xff] %v3942
        %4635 = vst [vmem:[%s203 + $0xa60] sm:$0xff] %v3944
        %4636 = vst [vmem:[%s203 + $0xa68] sm:$0xff] %v3946
        %4637 = vst [vmem:[%s203 + $0xa70] sm:$0xff] %v3948
        %4638 = vst [vmem:[%s203 + $0xa78] sm:$0xff] %v3950
        %4639 = vst [vmem:[%s203 + $0xa80] sm:$0xff] %v3952
        %4640 = vst [vmem:[%s203 + $0xa88] sm:$0xff] %v3954
        %4641 = vst [vmem:[%s203 + $0xa90] sm:$0xff] %v3956
        %4642 = vst [vmem:[%s203 + $0xa98] sm:$0xff] %v3958
        %4643 = vst [vmem:[%s203 + $0xaa0] sm:$0xff] %v3960
        %4644 = vst [vmem:[%s203 + $0xaa8] sm:$0xff] %v3962
        %4645 = vst [vmem:[%s203 + $0xab0] sm:$0xff] %v3964
        %4646 = vst [vmem:[%s203 + $0xab8] sm:$0xff] %v3966
        %4647 = vst [vmem:[%s203 + $0xac0] sm:$0xff] %v3968
        %4648 = vst [vmem:[%s203 + $0xac8] sm:$0xff] %v3970
        %4649 = vst [vmem:[%s203 + $0xad0] sm:$0xff] %v3972
        %4650 = vst [vmem:[%s203 + $0xad8] sm:$0xff] %v3974
        %4651 = vst [vmem:[%s203 + $0xae0] sm:$0xff] %v3976
        %4652 = vst [vmem:[%s203 + $0xae8] sm:$0xff] %v3978
        %4653 = vst [vmem:[%s203 + $0xaf0] sm:$0xff] %v3980
        %4654 = vst [vmem:[%s203 + $0xaf8] sm:$0xff] %v3982
        %4655 = vst [vmem:[%s203 + $0xb00] sm:$0xff] %v3984
        %4656 = vst [vmem:[%s203 + $0xb08] sm:$0xff] %v3986
        %4657 = vst [vmem:[%s203 + $0xb10] sm:$0xff] %v3988
        %4658 = vst [vmem:[%s203 + $0xb18] sm:$0xff] %v3990
        %4659 = vst [vmem:[%s203 + $0xb20] sm:$0xff] %v3992
        %4660 = vst [vmem:[%s203 + $0xb28] sm:$0xff] %v3994
        %4661 = vst [vmem:[%s203 + $0xb30] sm:$0xff] %v3996
        %4662 = vst [vmem:[%s203 + $0xb38] sm:$0xff] %v3998
        %4663 = vst [vmem:[%s203 + $0xb40] sm:$0xff] %v4000
        %4664 = vst [vmem:[%s203 + $0xb48] sm:$0xff] %v4002
        %4665 = vst [vmem:[%s203 + $0xb50] sm:$0xff] %v4004
        %4666 = vst [vmem:[%s203 + $0xb58] sm:$0xff] %v4006
        %4667 = vst [vmem:[%s203 + $0xb60] sm:$0xff] %v4008
        %4668 = vst [vmem:[%s203 + $0xb68] sm:$0xff] %v4010
        %4669 = vst [vmem:[%s203 + $0xb70] sm:$0xff] %v4012
        %4670 = vst [vmem:[%s203 + $0xb78] sm:$0xff] %v4014
        %4671 = vst [vmem:[%s203 + $0xb80] sm:$0xff] %v4016
        %4672 = vst [vmem:[%s203 + $0xb88] sm:$0xff] %v4018
        %4673 = vst [vmem:[%s203 + $0xb90] sm:$0xff] %v4020
        %4674 = vst [vmem:[%s203 + $0xb98] sm:$0xff] %v4022
        %4675 = vst [vmem:[%s203 + $0xba0] sm:$0xff] %v4024
        %4676 = vst [vmem:[%s203 + $0xba8] sm:$0xff] %v4026
        %4677 = vst [vmem:[%s203 + $0xbb0] sm:$0xff] %v4028
        %4678 = vst [vmem:[%s203 + $0xbb8] sm:$0xff] %v4030
        %4679 = vst [vmem:[%s203 + $0xbc0] sm:$0xff] %v4032
        %4680 = vst [vmem:[%s203 + $0xbc8] sm:$0xff] %v4034
        %4681 = vst [vmem:[%s203 + $0xbd0] sm:$0xff] %v4036
        %4682 = vst [vmem:[%s203 + $0xbd8] sm:$0xff] %v4038
        %4683 = vst [vmem:[%s203 + $0xbe0] sm:$0xff] %v4040
        %4684 = vst [vmem:[%s203 + $0xbe8] sm:$0xff] %v4042
        %4685 = vst [vmem:[%s203 + $0xbf0] sm:$0xff] %v4044
        %4686 = vst [vmem:[%s203 + $0xbf8] sm:$0xff] %v4046
        %4687 = vst [vmem:[%s203 + $0xc00] sm:$0xff] %v4048
        %4688 = vst [vmem:[%s203 + $0xc08] sm:$0xff] %v4050
        %4689 = vst [vmem:[%s203 + $0xc10] sm:$0xff] %v4052
        %4690 = vst [vmem:[%s203 + $0xc18] sm:$0xff] %v4054
        %4691 = vst [vmem:[%s203 + $0xc20] sm:$0xff] %v4056
        %4692 = vst [vmem:[%s203 + $0xc28] sm:$0xff] %v4058
        %4693 = vst [vmem:[%s203 + $0xc30] sm:$0xff] %v4060
        %4694 = vst [vmem:[%s203 + $0xc38] sm:$0xff] %v4062
        %4695 = vst [vmem:[%s203 + $0xc40] sm:$0xff] %v4064
        %4696 = vst [vmem:[%s203 + $0xc48] sm:$0xff] %v4066
        %4697 = vst [vmem:[%s203 + $0xc50] sm:$0xff] %v4068
        %4698 = vst [vmem:[%s203 + $0xc58] sm:$0xff] %v4070
        %4699 = vst [vmem:[%s203 + $0xc60] sm:$0xff] %v4072
        %4700 = vst [vmem:[%s203 + $0xc68] sm:$0xff] %v4074
        %4701 = vst [vmem:[%s203 + $0xc70] sm:$0xff] %v4076
        %4702 = vst [vmem:[%s203 + $0xc78] sm:$0xff] %v4078
        %4703 = vst [vmem:[%s203 + $0xc80] sm:$0xff] %v4080
        %4704 = vst [vmem:[%s203 + $0xc88] sm:$0xff] %v4082
        %4705 = vst [vmem:[%s203 + $0xc90] sm:$0xff] %v4084
        %4706 = vst [vmem:[%s203 + $0xc98] sm:$0xff] %v4086
        %4707 = vst [vmem:[%s203 + $0xca0] sm:$0xff] %v4088
        %4708 = vst [vmem:[%s203 + $0xca8] sm:$0xff] %v4090
        %4709 = vst [vmem:[%s203 + $0xcb0] sm:$0xff] %v4092
        %4710 = vst [vmem:[%s203 + $0xcb8] sm:$0xff] %v4094
        %4711 = vst [vmem:[%s203 + $0xcc0] sm:$0xff] %v4096
        %4712 = vst [vmem:[%s203 + $0xcc8] sm:$0xff] %v4098
        %4713 = vst [vmem:[%s203 + $0xcd0] sm:$0xff] %v4100
        %4714 = vst [vmem:[%s203 + $0xcd8] sm:$0xff] %v4102
        %4715 = vst [vmem:[%s203 + $0xce0] sm:$0xff] %v4104
        %4716 = vst [vmem:[%s203 + $0xce8] sm:$0xff] %v4106
        %4717 = vst [vmem:[%s203 + $0xcf0] sm:$0xff] %v4108
        %4718 = vst [vmem:[%s203 + $0xcf8] sm:$0xff] %v4110
        %4719 = vst [vmem:[%s203 + $0xd00] sm:$0xff] %v4112
        %4720 = vst [vmem:[%s203 + $0xd08] sm:$0xff] %v4114
        %4721 = vst [vmem:[%s203 + $0xd10] sm:$0xff] %v4116
        %4722 = vst [vmem:[%s203 + $0xd18] sm:$0xff] %v4118
        %4723 = vst [vmem:[%s203 + $0xd20] sm:$0xff] %v4120
        %4724 = vst [vmem:[%s203 + $0xd28] sm:$0xff] %v4122
        %4725 = vst [vmem:[%s203 + $0xd30] sm:$0xff] %v4124
        %4726 = vst [vmem:[%s203 + $0xd38] sm:$0xff] %v4126
        %4727 = vst [vmem:[%s203 + $0xd40] sm:$0xff] %v4128
        %4728 = vst [vmem:[%s203 + $0xd48] sm:$0xff] %v4130
        %4729 = vst [vmem:[%s203 + $0xd50] sm:$0xff] %v4132
        %4730 = vst [vmem:[%s203 + $0xd58] sm:$0xff] %v4134
        %4731 = vst [vmem:[%s203 + $0xd60] sm:$0xff] %v4136
        %4732 = vst [vmem:[%s203 + $0xd68] sm:$0xff] %v4138
        %4733 = vst [vmem:[%s203 + $0xd70] sm:$0xff] %v4140
        %4734 = vst [vmem:[%s203 + $0xd78] sm:$0xff] %v4142
        %4735 = vst [vmem:[%s203 + $0xd80] sm:$0xff] %v4144
        %4736 = vst [vmem:[%s203 + $0xd88] sm:$0xff] %v4146
        %4737 = vst [vmem:[%s203 + $0xd90] sm:$0xff] %v4148
        %4738 = vst [vmem:[%s203 + $0xd98] sm:$0xff] %v4150
        %4739 = vst [vmem:[%s203 + $0xda0] sm:$0xff] %v4152
        %4740 = vst [vmem:[%s203 + $0xda8] sm:$0xff] %v4154
        %4741 = vst [vmem:[%s203 + $0xdb0] sm:$0xff] %v4156
        %4742 = vst [vmem:[%s203 + $0xdb8] sm:$0xff] %v4158
        %4743 = vst [vmem:[%s203 + $0xdc0] sm:$0xff] %v4160
        %4744 = vst [vmem:[%s203 + $0xdc8] sm:$0xff] %v4162
        %4745 = vst [vmem:[%s203 + $0xdd0] sm:$0xff] %v4164
        %4746 = vst [vmem:[%s203 + $0xdd8] sm:$0xff] %v4166
        %4747 = vst [vmem:[%s203 + $0xde0] sm:$0xff] %v4168
        %4748 = vst [vmem:[%s203 + $0xde8] sm:$0xff] %v4170
        %4749 = vst [vmem:[%s203 + $0xdf0] sm:$0xff] %v4172
        %4750 = vst [vmem:[%s203 + $0xdf8] sm:$0xff] %v4174
        %4751 = vst [vmem:[%s203 + $0xe00] sm:$0xff] %v4176
        %4752 = vst [vmem:[%s203 + $0xe08] sm:$0xff] %v4178
        %4753 = vst [vmem:[%s203 + $0xe10] sm:$0xff] %v4180
        %4754 = vst [vmem:[%s203 + $0xe18] sm:$0xff] %v4182
        %4755 = vst [vmem:[%s203 + $0xe20] sm:$0xff] %v4184
        %4756 = vst [vmem:[%s203 + $0xe28] sm:$0xff] %v4186
        %4757 = vst [vmem:[%s203 + $0xe30] sm:$0xff] %v4188
        %4758 = vst [vmem:[%s203 + $0xe38] sm:$0xff] %v4190
        %4759 = vst [vmem:[%s203 + $0xe40] sm:$0xff] %v4192
        %4760 = vst [vmem:[%s203 + $0xe48] sm:$0xff] %v4194
        %4761 = vst [vmem:[%s203 + $0xe50] sm:$0xff] %v4196
        %4762 = vst [vmem:[%s203 + $0xe58] sm:$0xff] %v4198
        %4763 = vst [vmem:[%s203 + $0xe60] sm:$0xff] %v4200
        %4764 = vst [vmem:[%s203 + $0xe68] sm:$0xff] %v4202
        %4765 = vst [vmem:[%s203 + $0xe70] sm:$0xff] %v4204
        %4766 = vst [vmem:[%s203 + $0xe78] sm:$0xff] %v4206
        %4767 = vst [vmem:[%s203 + $0xe80] sm:$0xff] %v4208
        %4768 = vst [vmem:[%s203 + $0xe88] sm:$0xff] %v4210
        %4769 = vst [vmem:[%s203 + $0xe90] sm:$0xff] %v4212
        %4770 = vst [vmem:[%s203 + $0xe98] sm:$0xff] %v4214
        %4771 = vst [vmem:[%s203 + $0xea0] sm:$0xff] %v4216
        %4772 = vst [vmem:[%s203 + $0xea8] sm:$0xff] %v4218
        %4773 = vst [vmem:[%s203 + $0xeb0] sm:$0xff] %v4220
        %4774 = vst [vmem:[%s203 + $0xeb8] sm:$0xff] %v4222
        %4775 = vst [vmem:[%s203 + $0xec0] sm:$0xff] %v4224
        %4776 = vst [vmem:[%s203 + $0xec8] sm:$0xff] %v4226
        %4777 = vst [vmem:[%s203 + $0xed0] sm:$0xff] %v4228
        %4778 = vst [vmem:[%s203 + $0xed8] sm:$0xff] %v4230
        %4779 = vst [vmem:[%s203 + $0xee0] sm:$0xff] %v4232
        %4780 = vst [vmem:[%s203 + $0xee8] sm:$0xff] %v4234
        %4781 = vst [vmem:[%s203 + $0xef0] sm:$0xff] %v4236
        %4782 = vst [vmem:[%s203 + $0xef8] sm:$0xff] %v4238
        %4783 = vst [vmem:[%s203 + $0xf00] sm:$0xff] %v4240
        %4784 = vst [vmem:[%s203 + $0xf08] sm:$0xff] %v4242
        %4785 = vst [vmem:[%s203 + $0xf10] sm:$0xff] %v4244
        %4786 = vst [vmem:[%s203 + $0xf18] sm:$0xff] %v4246
        %4787 = vst [vmem:[%s203 + $0xf20] sm:$0xff] %v4248
        %4788 = vst [vmem:[%s203 + $0xf28] sm:$0xff] %v4250
        %4789 = vst [vmem:[%s203 + $0xf30] sm:$0xff] %v4252
        %4790 = vst [vmem:[%s203 + $0xf38] sm:$0xff] %v4254
        %4791 = vst [vmem:[%s203 + $0xf40] sm:$0xff] %v4256
        %4792 = vst [vmem:[%s203 + $0xf48] sm:$0xff] %v4258
        %4793 = vst [vmem:[%s203 + $0xf50] sm:$0xff] %v4260
        %4794 = vst [vmem:[%s203 + $0xf58] sm:$0xff] %v4262
        %4795 = vst [vmem:[%s203 + $0xf60] sm:$0xff] %v4264
        %4796 = vst [vmem:[%s203 + $0xf68] sm:$0xff] %v4266
        %4797 = vst [vmem:[%s203 + $0xf70] sm:$0xff] %v4268
        %4798 = vst [vmem:[%s203 + $0xf78] sm:$0xff] %v4270
        %4799 = vst [vmem:[%s203 + $0xf80] sm:$0xff] %v4272
        %4800 = vst [vmem:[%s203 + $0xf88] sm:$0xff] %v4274
        %4801 = vst [vmem:[%s203 + $0xf90] sm:$0xff] %v4276
        %4802 = vst [vmem:[%s203 + $0xf98] sm:$0xff] %v4278
        %4803 = vst [vmem:[%s203 + $0xfa0] sm:$0xff] %v4280
        %4804 = vst [vmem:[%s203 + $0xfa8] sm:$0xff] %v4282
        %4805 = vst [vmem:[%s203 + $0xfb0] sm:$0xff] %v4284
        %4806 = vst [vmem:[%s203 + $0xfb8] sm:$0xff] %v4286
        %4807 = vst [vmem:[%s203 + $0xfc0] sm:$0xff] %v4288
        %4808 = vst [vmem:[%s203 + $0xfc8] sm:$0xff] %v4290
        %4809 = vst [vmem:[%s203 + $0xfd0] sm:$0xff] %v4292
        %4810 = vst [vmem:[%s203 + $0xfd8] sm:$0xff] %v4294
        %4811 = vst [vmem:[%s203 + $0xfe0] sm:$0xff] %v4296
        %4812 = vst [vmem:[%s203 + $0xfe8] sm:$0xff] %v4298
        %4813 = vst [vmem:[%s203 + $0xff0] sm:$0xff] %v4300
        %4814 = vst [vmem:[%s203 + $0xff8] sm:$0xff] %v4302
        %s4815 = sand.u32 %s82, 1
        %s4816 = scalar_lea.sflag [#allocation4], %s4815
        %s4817 = sand.u32 %s82, 1
        %s4818 = smul.addr %s4817, 4096
        %s4819 = scalar_lea.vmem [#allocation7], %s4818
        // Predicated region
        $region37: #{tpu_custom_call.1} parent=27 // pred_check
          %p4820 = pneg %p92
        $region38: #{tpu_custom_call.1} parent=27 // pred_check_branch
          %4822 = sbr.rel (%p4820) target = $region40
        $region39: #{tpu_custom_call.1} parent=27 // pred_region
          %s4823 = smul.u32 64, %s22
          %s4825 = ssub.s32 65536, 65536
          %4826 = vsyncadd %s4816, %s4825
          %s4827 = smul.addr %s4823, 8
          %s4828 = smul.addr %s4827, 128
          %s4829 = scalar_lea.hbm %s2, %s4828
          %s4830 = sshll.u32 %s4819, 4
          %s4831 = int_to_ptr.vmem [resolvable:$true] %s4830
          %4836 = dma.vmem_to_hbm [thread:$0]  %s4831, 65536, %s4829, %s4816, 1024, 1024, 64
        $region40: #{tpu_custom_call.1} parent=27 // pred_fallthru
          _
      $region28: #{tpu_custom_call.1} parent=5 // pred_fallthru
        _
      %p4837 = scmp.le.s32.totalorder 2, %s17
      // Predicated region
      $region41: #{tpu_custom_call.1} parent=5 // pred_check
        %p4838 = pneg %p4837
      $region42: #{tpu_custom_call.1} parent=5 // pred_check_branch
        %4840 = sbr.rel (%p4838) target = $region44
      $region43: #{tpu_custom_call.1} parent=5 // pred_region
        %s4841 = ssub.s32 %s17, 2
        // Predicated region
        $region45: #{tpu_custom_call.1} parent=43 // pred_check
          %p4842 = pneg %p98
        $region46: #{tpu_custom_call.1} parent=43 // pred_check_branch
          %4844 = sbr.rel (%p4842) target = $region48
        $region47: #{tpu_custom_call.1} parent=43 // pred_region
          %s4845 = sand.u32 %s83, 1
          %s4846 = scalar_lea.sflag [#allocation4], %s4845
          %s4847 = sand.u32 %s83, 1
          %s4848 = smul.addr %s4847, 4096
          %s4849 = scalar_lea.vmem [#allocation7], %s4848
          %4850 = dma.done %s4846, 65536
        $region48: #{tpu_custom_call.1} parent=43 // pred_fallthru
          _
      $region44: #{tpu_custom_call.1} parent=5 // pred_fallthru
        _
    $region6: #{tpu_custom_call.1} parent=1 // loop_footer
      %s21 = sadd.s32 1, %s17
    $region7: #{tpu_custom_call.1} parent=1 // loop_footer_branch
      %16 = sbr.rel target = $region3
    $region8: #{tpu_custom_call.1} parent=1 // loop_exit
      _
    %4851 = vsyncpa [#allocation3], 1
    %s4852 = scalar_lea.sflag [#allocation3], 1
    %4853 = vsyncpa %s4852, 1
    %4854 = vsyncpa [#allocation6], 1
    %s4855 = scalar_lea.sflag [#allocation6], 1
    %4856 = vsyncpa %s4855, 1
    %4857 = vsyncpa [#allocation4], 1
    %s4858 = scalar_lea.sflag [#allocation4], 1
    %4859 = vsyncpa %s4858, 1

</llo_original>
